<compile_context>
chip_gen: v6e
topology: v6e:2x2x1
jax: 0.10.0
libtpu: 0.0.40
codegen_flags: <defaults>
</compile_context>

<pallas_src>
import functools

import jax
import jax.numpy as jnp
from jax.experimental import pallas as pl
from jax.experimental.pallas import tpu as pltpu


def basic_block_chain_kernel(x_ref, w_ref, b_ref, out_ref, *, num_blocks, height, width):
    # x_ref   : (N*C, H*W)        channels in sublanes, flattened spatial in lanes
    # w_ref   : (K*2*9, N*C, N*C) per-(block, conv, tap) block-diag weight, BN scale folded
    # b_ref   : (K*2, N*C, 1)     per-(block, conv) bias, tiled over the batch
    # out_ref : (N*C, H*W)        lane-dense output block
    nc, hw = x_ref.shape

    # Hoisted position iotas + the 8 boundary masks (shared by every conv of every block).
    pos = jax.lax.broadcasted_iota(jnp.int32, (nc, hw), 1)
    if (width & (width - 1)) == 0:
        col = pos & (width - 1)          # pos % width (power-of-two fast path)
    else:
        col = pos % width
    masks = {}
    for dy in (-1, 0, 1):
        for dx in (-1, 0, 1):
            if dy == 0 and dx == 0:
                continue
            # valid <=> 0 <= h+dy < H and 0 <= w+dx < W (rolled-in lanes masked to 0)
            masks[(dy, dx)] = ((pos >= (-dy) * width) &
                               (pos < (height - dy) * width) &
                               (col >= -dx) & (col < width - dx))

    def conv3x3(inp, base):
        # 3x3 same-padded conv on (N*C, H*W): 9 lane-rolled, boundary-masked taps,
        # each consumed by one small MXU dot against its block-diagonal tap weight.
        acc = None
        t = 0
        for dy in (-1, 0, 1):
            for dx in (-1, 0, 1):
                if dy == 0 and dx == 0:
                    tap = inp
                else:
                    # rot[:, p] == inp[:, (p + dy*W + dx) % hw]
                    shift = (-(dy * width + dx)) % hw
                    tap = jnp.where(masks[(dy, dx)],
                                    pltpu.roll(inp, shift=shift, axis=1),
                                    0.0)
                d = jnp.dot(w_ref[base + t], tap, preferred_element_type=jnp.float32)
                acc = d if acc is None else acc + d
                t += 1
        return acc

    act = x_ref[...]
    for k in range(num_blocks):
        h1 = jnp.maximum(conv3x3(act, 18 * k) + b_ref[2 * k], 0.0)   # conv1 + BN + ReLU
        h2 = conv3x3(h1, 18 * k + 9) + b_ref[2 * k + 1]              # conv2 + BN
        act = h2 + act                                               # identity residual
    out_ref[...] = act                                               # one dense store


def prepare_chain_params(params, n_batch):
    """Host-side prep (runs once): fold eval-mode BN scale into the conv weights,
    build per-tap block-diagonal (N*Cout, N*Cin) weights and batch-tiled biases."""
    w_list, b_list = [], []
    eye = jnp.eye(n_batch, dtype=jnp.float32)
    for (w1, s1, b1, w2, s2, b2) in params:
        for w_hwio, s, b in ((w1, s1, b1), (w2, s2, b2)):
            cin, cout = w_hwio.shape[2], w_hwio.shape[3]
            assert cin == cout, "identity residual needs inplanes == planes"
            wt = jnp.transpose(w_hwio.reshape(9, cin, cout), (0, 2, 1))   # (9, cout, cin)
            wt = wt * s.reshape(1, cout, 1)                               # fold BN scale
            # block-diag over the batch: row a*cout+i, col b*cin+j = eye[a,b]*wt[i,j]
            wbd = jnp.einsum('ab,tij->taibj', eye, wt)
            w_list.append(wbd.reshape(9, n_batch * cout, n_batch * cin))
            b_list.append(jnp.tile(b.reshape(cout, 1), (n_batch, 1)))
    w_all = jnp.concatenate(w_list, axis=0)           # (K*2*9, N*C, N*C)
    b_all = jnp.stack(b_list, axis=0)                 # (K*2,   N*C, 1)
    return w_all, b_all


@jax.jit
def basic_block_chain_pallas(x_nchw, w_all, b_all):
    """x_nchw: (N, C, H, W) f32. Applies the K-block identity-BasicBlock chain."""
    n, c, h, w = x_nchw.shape
    hw = h * w
    nc = n * c
    num_blocks = w_all.shape[0] // 18

    x2d = x_nchw.reshape(nc, hw)                      # free, contiguous reshape

    kernel = functools.partial(basic_block_chain_kernel,
                               num_blocks=num_blocks, height=h, width=w)

    grid_spec = pltpu.PrefetchScalarGridSpec(
        num_scalar_prefetch=0,
        grid=(1,),                                    # whole batch + all blocks, one step
        in_specs=[
            pl.BlockSpec((nc, hw), lambda i: (0, 0)),
            pl.BlockSpec(w_all.shape, lambda i: (0, 0, 0)),
            pl.BlockSpec(b_all.shape, lambda i: (0, 0, 0)),
        ],
        out_specs=pl.BlockSpec((nc, hw), lambda i: (0, 0)),
    )

    out2d = pl.pallas_call(
        kernel,
        out_shape=jax.ShapeDtypeStruct((nc, hw), jnp.float32),
        grid_spec=grid_spec,
        compiler_params=pltpu.CompilerParams(dimension_semantics=("parallel",)),
    )(x2d, w_all, b_all)

    return out2d.reshape(n, c, h, w)


def basic_block_chain_ref(x_nchw, params):
    dn = ('NCHW', 'HWIO', 'NCHW')
    out = x_nchw
    for (w1, s1, b1, w2, s2, b2) in params:
        cout = w1.shape[-1]
        y = jax.lax.conv_general_dilated(out, w1, (1, 1), ((1, 1), (1, 1)),
                                         dimension_numbers=dn,
                                         precision=jax.lax.Precision.HIGHEST)
        y = jnp.maximum(y * s1.reshape(1, cout, 1, 1) + b1.reshape(1, cout, 1, 1), 0.0)
        y = jax.lax.conv_general_dilated(y, w2, (1, 1), ((1, 1), (1, 1)),
                                         dimension_numbers=dn,
                                         precision=jax.lax.Precision.HIGHEST)
        y = y * s2.reshape(1, cout, 1, 1) + b2.reshape(1, cout, 1, 1)
        out = y + out
    return out


if __name__ == "__main__":
    N, C, H, W = 2, 4, 16, 16          # NCHW input (2, 4, 16, 16)
    K = 3                              # layer1-style chain of 3 identity BasicBlocks
    eps = 1e-5

    key = jax.random.PRNGKey(0)
    key, kx = jax.random.split(key)
    x_nchw = jax.random.normal(kx, (N, C, H, W), jnp.float32)

    params = []
    for _ in range(K):
        key, *ks = jax.random.split(key, 11)
        w1 = jax.random.normal(ks[0], (3, 3, C, C), jnp.float32) * 0.1
        w2 = jax.random.normal(ks[1], (3, 3, C, C), jnp.float32) * 0.1
        gamma1 = 1.0 + 0.1 * jax.random.normal(ks[2], (C,), jnp.float32)
        beta1 = 0.1 * jax.random.normal(ks[3], (C,), jnp.float32)
        mean1 = 0.1 * jax.random.normal(ks[4], (C,), jnp.float32)
        var1 = jnp.abs(jax.random.normal(ks[5], (C,), jnp.float32)) + 0.5
        gamma2 = 1.0 + 0.1 * jax.random.normal(ks[6], (C,), jnp.float32)
        beta2 = 0.1 * jax.random.normal(ks[7], (C,), jnp.float32)
        mean2 = 0.1 * jax.random.normal(ks[8], (C,), jnp.float32)
        var2 = jnp.abs(jax.random.normal(ks[9], (C,), jnp.float32)) + 0.5
        s1 = gamma1 / jnp.sqrt(var1 + eps)
        b1 = beta1 - mean1 * s1
        s2 = gamma2 / jnp.sqrt(var2 + eps)
        b2 = beta2 - mean2 * s2
        params.append((w1, s1, b1, w2, s2, b2))

    w_all, b_all = prepare_chain_params(params, N)    # one-time host-side folding

    out = basic_block_chain_pallas(x_nchw, w_all, b_all)
    out = jax.block_until_ready(out)

    ref = basic_block_chain_ref(x_nchw, params)
    assert out.shape == (N, C, H, W)
    assert jnp.allclose(out, ref, rtol=1e-3, atol=1e-3), "mismatch vs JAX reference"

    print("KERNEL_OK")
</pallas_src>

<mosaic_0001>
module attributes {stable_mosaic.version = 11 : i64} {
  func.func @basic_block_chain_kernel(%arg0: i32, %arg1: memref<8x256xf32, #tpu.memory_space<vmem>>, %arg2: memref<54x8x8xf32, #tpu.memory_space<vmem>>, %arg3: memref<6x8x1xf32, #tpu.memory_space<vmem>>, %arg4: memref<8x256xf32, #tpu.memory_space<vmem>>) attributes {dimension_semantics = [#tpu.dimension_semantics<parallel>], iteration_bounds = array<i64: 1>, scalar_prefetch = 0 : i64, scratch_operands = 0 : i64, tpu.core_type = #tpu.core_type<tc>, window_params = [{pipeline_mode = #tpu.pipeline_mode<synchronous>, transform_indices = @transform_0, window_bounds = array<i64: 8, 256>}, {pipeline_mode = #tpu.pipeline_mode<synchronous>, transform_indices = @transform_1, window_bounds = array<i64: 54, 8, 8>}, {pipeline_mode = #tpu.pipeline_mode<synchronous>, transform_indices = @transform_2, window_bounds = array<i64: 6, 8, 1>}, {pipeline_mode = #tpu.pipeline_mode<synchronous>, transform_indices = @transform_3, window_bounds = array<i64: 8, 256>}]} {
    %0 = tpu.iota {dimensions = array<i32: 1>} : vector<8x256xi32>
    %c15_i32 = arith.constant 15 : i32
    %1 = vector.broadcast %c15_i32 : i32 to vector<8x256xi32>
    %2 = arith.andi %0, %1 : vector<8x256xi32>
    %c16_i32 = arith.constant 16 : i32
    %3 = vector.broadcast %c16_i32 : i32 to vector<8x256xi32>
    %4 = arith.cmpi sge, %0, %3 : vector<8x256xi32>
    %c272_i32 = arith.constant 272 : i32
    %5 = vector.broadcast %c272_i32 : i32 to vector<8x256xi32>
    %6 = arith.cmpi slt, %0, %5 : vector<8x256xi32>
    %7 = arith.andi %4, %6 : vector<8x256xi1>
    %c1_i32 = arith.constant 1 : i32
    %8 = vector.broadcast %c1_i32 : i32 to vector<8x256xi32>
    %9 = arith.cmpi sge, %2, %8 : vector<8x256xi32>
    %10 = arith.andi %7, %9 : vector<8x256xi1>
    %c17_i32 = arith.constant 17 : i32
    %11 = vector.broadcast %c17_i32 : i32 to vector<8x256xi32>
    %12 = arith.cmpi slt, %2, %11 : vector<8x256xi32>
    %13 = arith.andi %10, %12 : vector<8x256xi1>
    %c16_i32_0 = arith.constant 16 : i32
    %14 = vector.broadcast %c16_i32_0 : i32 to vector<8x256xi32>
    %15 = arith.cmpi sge, %0, %14 : vector<8x256xi32>
    %c272_i32_1 = arith.constant 272 : i32
    %16 = vector.broadcast %c272_i32_1 : i32 to vector<8x256xi32>
    %17 = arith.cmpi slt, %0, %16 : vector<8x256xi32>
    %18 = arith.andi %15, %17 : vector<8x256xi1>
    %c0_i32 = arith.constant 0 : i32
    %19 = vector.broadcast %c0_i32 : i32 to vector<8x256xi32>
    %20 = arith.cmpi sge, %2, %19 : vector<8x256xi32>
    %21 = arith.andi %18, %20 : vector<8x256xi1>
    %c16_i32_2 = arith.constant 16 : i32
    %22 = vector.broadcast %c16_i32_2 : i32 to vector<8x256xi32>
    %23 = arith.cmpi slt, %2, %22 : vector<8x256xi32>
    %24 = arith.andi %21, %23 : vector<8x256xi1>
    %c16_i32_3 = arith.constant 16 : i32
    %25 = vector.broadcast %c16_i32_3 : i32 to vector<8x256xi32>
    %26 = arith.cmpi sge, %0, %25 : vector<8x256xi32>
    %c272_i32_4 = arith.constant 272 : i32
    %27 = vector.broadcast %c272_i32_4 : i32 to vector<8x256xi32>
    %28 = arith.cmpi slt, %0, %27 : vector<8x256xi32>
    %29 = arith.andi %26, %28 : vector<8x256xi1>
    %c-1_i32 = arith.constant -1 : i32
    %30 = vector.broadcast %c-1_i32 : i32 to vector<8x256xi32>
    %31 = arith.cmpi sge, %2, %30 : vector<8x256xi32>
    %32 = arith.andi %29, %31 : vector<8x256xi1>
    %c15_i32_5 = arith.constant 15 : i32
    %33 = vector.broadcast %c15_i32_5 : i32 to vector<8x256xi32>
    %34 = arith.cmpi slt, %2, %33 : vector<8x256xi32>
    %35 = arith.andi %32, %34 : vector<8x256xi1>
    %c0_i32_6 = arith.constant 0 : i32
    %36 = vector.broadcast %c0_i32_6 : i32 to vector<8x256xi32>
    %37 = arith.cmpi sge, %0, %36 : vector<8x256xi32>
    %c256_i32 = arith.constant 256 : i32
    %38 = vector.broadcast %c256_i32 : i32 to vector<8x256xi32>
    %39 = arith.cmpi slt, %0, %38 : vector<8x256xi32>
    %40 = arith.andi %37, %39 : vector<8x256xi1>
    %c1_i32_7 = arith.constant 1 : i32
    %41 = vector.broadcast %c1_i32_7 : i32 to vector<8x256xi32>
    %42 = arith.cmpi sge, %2, %41 : vector<8x256xi32>
    %43 = arith.andi %40, %42 : vector<8x256xi1>
    %c17_i32_8 = arith.constant 17 : i32
    %44 = vector.broadcast %c17_i32_8 : i32 to vector<8x256xi32>
    %45 = arith.cmpi slt, %2, %44 : vector<8x256xi32>
    %46 = arith.andi %43, %45 : vector<8x256xi1>
    %c0_i32_9 = arith.constant 0 : i32
    %47 = vector.broadcast %c0_i32_9 : i32 to vector<8x256xi32>
    %48 = arith.cmpi sge, %0, %47 : vector<8x256xi32>
    %c256_i32_10 = arith.constant 256 : i32
    %49 = vector.broadcast %c256_i32_10 : i32 to vector<8x256xi32>
    %50 = arith.cmpi slt, %0, %49 : vector<8x256xi32>
    %51 = arith.andi %48, %50 : vector<8x256xi1>
    %c-1_i32_11 = arith.constant -1 : i32
    %52 = vector.broadcast %c-1_i32_11 : i32 to vector<8x256xi32>
    %53 = arith.cmpi sge, %2, %52 : vector<8x256xi32>
    %54 = arith.andi %51, %53 : vector<8x256xi1>
    %c15_i32_12 = arith.constant 15 : i32
    %55 = vector.broadcast %c15_i32_12 : i32 to vector<8x256xi32>
    %56 = arith.cmpi slt, %2, %55 : vector<8x256xi32>
    %57 = arith.andi %54, %56 : vector<8x256xi1>
    %c-16_i32 = arith.constant -16 : i32
    %58 = vector.broadcast %c-16_i32 : i32 to vector<8x256xi32>
    %59 = arith.cmpi sge, %0, %58 : vector<8x256xi32>
    %c240_i32 = arith.constant 240 : i32
    %60 = vector.broadcast %c240_i32 : i32 to vector<8x256xi32>
    %61 = arith.cmpi slt, %0, %60 : vector<8x256xi32>
    %62 = arith.andi %59, %61 : vector<8x256xi1>
    %c1_i32_13 = arith.constant 1 : i32
    %63 = vector.broadcast %c1_i32_13 : i32 to vector<8x256xi32>
    %64 = arith.cmpi sge, %2, %63 : vector<8x256xi32>
    %65 = arith.andi %62, %64 : vector<8x256xi1>
    %c17_i32_14 = arith.constant 17 : i32
    %66 = vector.broadcast %c17_i32_14 : i32 to vector<8x256xi32>
    %67 = arith.cmpi slt, %2, %66 : vector<8x256xi32>
    %68 = arith.andi %65, %67 : vector<8x256xi1>
    %c-16_i32_15 = arith.constant -16 : i32
    %69 = vector.broadcast %c-16_i32_15 : i32 to vector<8x256xi32>
    %70 = arith.cmpi sge, %0, %69 : vector<8x256xi32>
    %c240_i32_16 = arith.constant 240 : i32
    %71 = vector.broadcast %c240_i32_16 : i32 to vector<8x256xi32>
    %72 = arith.cmpi slt, %0, %71 : vector<8x256xi32>
    %73 = arith.andi %70, %72 : vector<8x256xi1>
    %c0_i32_17 = arith.constant 0 : i32
    %74 = vector.broadcast %c0_i32_17 : i32 to vector<8x256xi32>
    %75 = arith.cmpi sge, %2, %74 : vector<8x256xi32>
    %76 = arith.andi %73, %75 : vector<8x256xi1>
    %c16_i32_18 = arith.constant 16 : i32
    %77 = vector.broadcast %c16_i32_18 : i32 to vector<8x256xi32>
    %78 = arith.cmpi slt, %2, %77 : vector<8x256xi32>
    %79 = arith.andi %76, %78 : vector<8x256xi1>
    %c-16_i32_19 = arith.constant -16 : i32
    %80 = vector.broadcast %c-16_i32_19 : i32 to vector<8x256xi32>
    %81 = arith.cmpi sge, %0, %80 : vector<8x256xi32>
    %c240_i32_20 = arith.constant 240 : i32
    %82 = vector.broadcast %c240_i32_20 : i32 to vector<8x256xi32>
    %83 = arith.cmpi slt, %0, %82 : vector<8x256xi32>
    %84 = arith.andi %81, %83 : vector<8x256xi1>
    %c-1_i32_21 = arith.constant -1 : i32
    %85 = vector.broadcast %c-1_i32_21 : i32 to vector<8x256xi32>
    %86 = arith.cmpi sge, %2, %85 : vector<8x256xi32>
    %87 = arith.andi %84, %86 : vector<8x256xi1>
    %c15_i32_22 = arith.constant 15 : i32
    %88 = vector.broadcast %c15_i32_22 : i32 to vector<8x256xi32>
    %89 = arith.cmpi slt, %2, %88 : vector<8x256xi32>
    %90 = arith.andi %87, %89 : vector<8x256xi1>
    %c0 = arith.constant 0 : index
    %c0_23 = arith.constant 0 : index
    %91 = vector.load %arg1[%c0, %c0_23] : memref<8x256xf32, #tpu.memory_space<vmem>>, vector<8x256xf32>
    %c17_i32_24 = arith.constant 17 : i32
    %92 = tpu.dynamic_rotate %91 by %c17_i32_24 dim 1 : vector<8x256xf32>, i32 -> vector<8x256xf32>
    %cst = arith.constant 0.000000e+00 : f32
    %93 = vector.broadcast %cst : f32 to vector<8x256xf32>
    %94 = arith.select %13, %92, %93 : vector<8x256xi1>, vector<8x256xf32>
    %c0_25 = arith.constant 0 : index
    %c0_26 = arith.constant 0 : index
    %c0_27 = arith.constant 0 : index
    %95 = vector.load %arg2[%c0_25, %c0_26, %c0_27] : memref<54x8x8xf32, #tpu.memory_space<vmem>>, vector<1x8x8xf32>
    %96 = vector.shape_cast %95 : vector<1x8x8xf32> to vector<8x8xf32>
    %cst_28 = arith.constant dense<0.000000e+00> : vector<8x256xf32>
    %97 = tpu.matmul %96, %94, %cst_28 {dimension_numbers = #tpu.dot_dimension_numbers<[1], [0], [0], [1], [0, 0, 1, 1], [], []>} : vector<8x8xf32>, vector<8x256xf32>, vector<8x256xf32> -> vector<8x256xf32>
    %c16_i32_29 = arith.constant 16 : i32
    %98 = tpu.dynamic_rotate %91 by %c16_i32_29 dim 1 : vector<8x256xf32>, i32 -> vector<8x256xf32>
    %cst_30 = arith.constant 0.000000e+00 : f32
    %99 = vector.broadcast %cst_30 : f32 to vector<8x256xf32>
    %100 = arith.select %24, %98, %99 : vector<8x256xi1>, vector<8x256xf32>
    %c1 = arith.constant 1 : index
    %c0_31 = arith.constant 0 : index
    %c0_32 = arith.constant 0 : index
    %101 = vector.load %arg2[%c1, %c0_31, %c0_32] : memref<54x8x8xf32, #tpu.memory_space<vmem>>, vector<1x8x8xf32>
    %102 = vector.shape_cast %101 : vector<1x8x8xf32> to vector<8x8xf32>
    %cst_33 = arith.constant dense<0.000000e+00> : vector<8x256xf32>
    %103 = tpu.matmul %102, %100, %cst_33 {dimension_numbers = #tpu.dot_dimension_numbers<[1], [0], [0], [1], [0, 0, 1, 1], [], []>} : vector<8x8xf32>, vector<8x256xf32>, vector<8x256xf32> -> vector<8x256xf32>
    %104 = arith.addf %97, %103 : vector<8x256xf32>
    %c15_i32_34 = arith.constant 15 : i32
    %105 = tpu.dynamic_rotate %91 by %c15_i32_34 dim 1 : vector<8x256xf32>, i32 -> vector<8x256xf32>
    %cst_35 = arith.constant 0.000000e+00 : f32
    %106 = vector.broadcast %cst_35 : f32 to vector<8x256xf32>
    %107 = arith.select %35, %105, %106 : vector<8x256xi1>, vector<8x256xf32>
    %c2 = arith.constant 2 : index
    %c0_36 = arith.constant 0 : index
    %c0_37 = arith.constant 0 : index
    %108 = vector.load %arg2[%c2, %c0_36, %c0_37] : memref<54x8x8xf32, #tpu.memory_space<vmem>>, vector<1x8x8xf32>
    %109 = vector.shape_cast %108 : vector<1x8x8xf32> to vector<8x8xf32>
    %cst_38 = arith.constant dense<0.000000e+00> : vector<8x256xf32>
    %110 = tpu.matmul %109, %107, %cst_38 {dimension_numbers = #tpu.dot_dimension_numbers<[1], [0], [0], [1], [0, 0, 1, 1], [], []>} : vector<8x8xf32>, vector<8x256xf32>, vector<8x256xf32> -> vector<8x256xf32>
    %111 = arith.addf %104, %110 : vector<8x256xf32>
    %c1_i32_39 = arith.constant 1 : i32
    %112 = tpu.dynamic_rotate %91 by %c1_i32_39 dim 1 : vector<8x256xf32>, i32 -> vector<8x256xf32>
    %cst_40 = arith.constant 0.000000e+00 : f32
    %113 = vector.broadcast %cst_40 : f32 to vector<8x256xf32>
    %114 = arith.select %46, %112, %113 : vector<8x256xi1>, vector<8x256xf32>
    %c3 = arith.constant 3 : index
    %c0_41 = arith.constant 0 : index
    %c0_42 = arith.constant 0 : index
    %115 = vector.load %arg2[%c3, %c0_41, %c0_42] : memref<54x8x8xf32, #tpu.memory_space<vmem>>, vector<1x8x8xf32>
    %116 = vector.shape_cast %115 : vector<1x8x8xf32> to vector<8x8xf32>
    %cst_43 = arith.constant dense<0.000000e+00> : vector<8x256xf32>
    %117 = tpu.matmul %116, %114, %cst_43 {dimension_numbers = #tpu.dot_dimension_numbers<[1], [0], [0], [1], [0, 0, 1, 1], [], []>} : vector<8x8xf32>, vector<8x256xf32>, vector<8x256xf32> -> vector<8x256xf32>
    %118 = arith.addf %111, %117 : vector<8x256xf32>
    %c4 = arith.constant 4 : index
    %c0_44 = arith.constant 0 : index
    %c0_45 = arith.constant 0 : index
    %119 = vector.load %arg2[%c4, %c0_44, %c0_45] : memref<54x8x8xf32, #tpu.memory_space<vmem>>, vector<1x8x8xf32>
    %120 = vector.shape_cast %119 : vector<1x8x8xf32> to vector<8x8xf32>
    %cst_46 = arith.constant dense<0.000000e+00> : vector<8x256xf32>
    %121 = tpu.matmul %120, %91, %cst_46 {dimension_numbers = #tpu.dot_dimension_numbers<[1], [0], [0], [1], [0, 0, 1, 1], [], []>} : vector<8x8xf32>, vector<8x256xf32>, vector<8x256xf32> -> vector<8x256xf32>
    %122 = arith.addf %118, %121 : vector<8x256xf32>
    %c255_i32 = arith.constant 255 : i32
    %123 = tpu.dynamic_rotate %91 by %c255_i32 dim 1 : vector<8x256xf32>, i32 -> vector<8x256xf32>
    %cst_47 = arith.constant 0.000000e+00 : f32
    %124 = vector.broadcast %cst_47 : f32 to vector<8x256xf32>
    %125 = arith.select %57, %123, %124 : vector<8x256xi1>, vector<8x256xf32>
    %c5 = arith.constant 5 : index
    %c0_48 = arith.constant 0 : index
    %c0_49 = arith.constant 0 : index
    %126 = vector.load %arg2[%c5, %c0_48, %c0_49] : memref<54x8x8xf32, #tpu.memory_space<vmem>>, vector<1x8x8xf32>
    %127 = vector.shape_cast %126 : vector<1x8x8xf32> to vector<8x8xf32>
    %cst_50 = arith.constant dense<0.000000e+00> : vector<8x256xf32>
    %128 = tpu.matmul %127, %125, %cst_50 {dimension_numbers = #tpu.dot_dimension_numbers<[1], [0], [0], [1], [0, 0, 1, 1], [], []>} : vector<8x8xf32>, vector<8x256xf32>, vector<8x256xf32> -> vector<8x256xf32>
    %129 = arith.addf %122, %128 : vector<8x256xf32>
    %c241_i32 = arith.constant 241 : i32
    %130 = tpu.dynamic_rotate %91 by %c241_i32 dim 1 : vector<8x256xf32>, i32 -> vector<8x256xf32>
    %cst_51 = arith.constant 0.000000e+00 : f32
    %131 = vector.broadcast %cst_51 : f32 to vector<8x256xf32>
    %132 = arith.select %68, %130, %131 : vector<8x256xi1>, vector<8x256xf32>
    %c6 = arith.constant 6 : index
    %c0_52 = arith.constant 0 : index
    %c0_53 = arith.constant 0 : index
    %133 = vector.load %arg2[%c6, %c0_52, %c0_53] : memref<54x8x8xf32, #tpu.memory_space<vmem>>, vector<1x8x8xf32>
    %134 = vector.shape_cast %133 : vector<1x8x8xf32> to vector<8x8xf32>
    %cst_54 = arith.constant dense<0.000000e+00> : vector<8x256xf32>
    %135 = tpu.matmul %134, %132, %cst_54 {dimension_numbers = #tpu.dot_dimension_numbers<[1], [0], [0], [1], [0, 0, 1, 1], [], []>} : vector<8x8xf32>, vector<8x256xf32>, vector<8x256xf32> -> vector<8x256xf32>
    %136 = arith.addf %129, %135 : vector<8x256xf32>
    %c240_i32_55 = arith.constant 240 : i32
    %137 = tpu.dynamic_rotate %91 by %c240_i32_55 dim 1 : vector<8x256xf32>, i32 -> vector<8x256xf32>
    %cst_56 = arith.constant 0.000000e+00 : f32
    %138 = vector.broadcast %cst_56 : f32 to vector<8x256xf32>
    %139 = arith.select %79, %137, %138 : vector<8x256xi1>, vector<8x256xf32>
    %c7 = arith.constant 7 : index
    %c0_57 = arith.constant 0 : index
    %c0_58 = arith.constant 0 : index
    %140 = vector.load %arg2[%c7, %c0_57, %c0_58] : memref<54x8x8xf32, #tpu.memory_space<vmem>>, vector<1x8x8xf32>
    %141 = vector.shape_cast %140 : vector<1x8x8xf32> to vector<8x8xf32>
    %cst_59 = arith.constant dense<0.000000e+00> : vector<8x256xf32>
    %142 = tpu.matmul %141, %139, %cst_59 {dimension_numbers = #tpu.dot_dimension_numbers<[1], [0], [0], [1], [0, 0, 1, 1], [], []>} : vector<8x8xf32>, vector<8x256xf32>, vector<8x256xf32> -> vector<8x256xf32>
    %143 = arith.addf %136, %142 : vector<8x256xf32>
    %c239_i32 = arith.constant 239 : i32
    %144 = tpu.dynamic_rotate %91 by %c239_i32 dim 1 : vector<8x256xf32>, i32 -> vector<8x256xf32>
    %cst_60 = arith.constant 0.000000e+00 : f32
    %145 = vector.broadcast %cst_60 : f32 to vector<8x256xf32>
    %146 = arith.select %90, %144, %145 : vector<8x256xi1>, vector<8x256xf32>
    %c8 = arith.constant 8 : index
    %c0_61 = arith.constant 0 : index
    %c0_62 = arith.constant 0 : index
    %147 = vector.load %arg2[%c8, %c0_61, %c0_62] : memref<54x8x8xf32, #tpu.memory_space<vmem>>, vector<1x8x8xf32>
    %148 = vector.shape_cast %147 : vector<1x8x8xf32> to vector<8x8xf32>
    %cst_63 = arith.constant dense<0.000000e+00> : vector<8x256xf32>
    %149 = tpu.matmul %148, %146, %cst_63 {dimension_numbers = #tpu.dot_dimension_numbers<[1], [0], [0], [1], [0, 0, 1, 1], [], []>} : vector<8x8xf32>, vector<8x256xf32>, vector<8x256xf32> -> vector<8x256xf32>
    %150 = arith.addf %143, %149 : vector<8x256xf32>
    %c0_64 = arith.constant 0 : index
    %c0_65 = arith.constant 0 : index
    %c0_66 = arith.constant 0 : index
    %151 = vector.load %arg3[%c0_64, %c0_65, %c0_66] : memref<6x8x1xf32, #tpu.memory_space<vmem>>, vector<1x8x1xf32>
    %152 = vector.shape_cast %151 : vector<1x8x1xf32> to vector<8x1xf32>
    %153 = vector.broadcast %152 : vector<8x1xf32> to vector<8x256xf32>
    %154 = arith.addf %150, %153 : vector<8x256xf32>
    %cst_67 = arith.constant 0.000000e+00 : f32
    %155 = vector.broadcast %cst_67 : f32 to vector<8x256xf32>
    %156 = arith.maximumf %154, %155 : vector<8x256xf32>
    %c17_i32_68 = arith.constant 17 : i32
    %157 = tpu.dynamic_rotate %156 by %c17_i32_68 dim 1 : vector<8x256xf32>, i32 -> vector<8x256xf32>
    %cst_69 = arith.constant 0.000000e+00 : f32
    %158 = vector.broadcast %cst_69 : f32 to vector<8x256xf32>
    %159 = arith.select %13, %157, %158 : vector<8x256xi1>, vector<8x256xf32>
    %c9 = arith.constant 9 : index
    %c0_70 = arith.constant 0 : index
    %c0_71 = arith.constant 0 : index
    %160 = vector.load %arg2[%c9, %c0_70, %c0_71] : memref<54x8x8xf32, #tpu.memory_space<vmem>>, vector<1x8x8xf32>
    %161 = vector.shape_cast %160 : vector<1x8x8xf32> to vector<8x8xf32>
    %cst_72 = arith.constant dense<0.000000e+00> : vector<8x256xf32>
    %162 = tpu.matmul %161, %159, %cst_72 {dimension_numbers = #tpu.dot_dimension_numbers<[1], [0], [0], [1], [0, 0, 1, 1], [], []>} : vector<8x8xf32>, vector<8x256xf32>, vector<8x256xf32> -> vector<8x256xf32>
    %c16_i32_73 = arith.constant 16 : i32
    %163 = tpu.dynamic_rotate %156 by %c16_i32_73 dim 1 : vector<8x256xf32>, i32 -> vector<8x256xf32>
    %cst_74 = arith.constant 0.000000e+00 : f32
    %164 = vector.broadcast %cst_74 : f32 to vector<8x256xf32>
    %165 = arith.select %24, %163, %164 : vector<8x256xi1>, vector<8x256xf32>
    %c10 = arith.constant 10 : index
    %c0_75 = arith.constant 0 : index
    %c0_76 = arith.constant 0 : index
    %166 = vector.load %arg2[%c10, %c0_75, %c0_76] : memref<54x8x8xf32, #tpu.memory_space<vmem>>, vector<1x8x8xf32>
    %167 = vector.shape_cast %166 : vector<1x8x8xf32> to vector<8x8xf32>
    %cst_77 = arith.constant dense<0.000000e+00> : vector<8x256xf32>
    %168 = tpu.matmul %167, %165, %cst_77 {dimension_numbers = #tpu.dot_dimension_numbers<[1], [0], [0], [1], [0, 0, 1, 1], [], []>} : vector<8x8xf32>, vector<8x256xf32>, vector<8x256xf32> -> vector<8x256xf32>
    %169 = arith.addf %162, %168 : vector<8x256xf32>
    %c15_i32_78 = arith.constant 15 : i32
    %170 = tpu.dynamic_rotate %156 by %c15_i32_78 dim 1 : vector<8x256xf32>, i32 -> vector<8x256xf32>
    %cst_79 = arith.constant 0.000000e+00 : f32
    %171 = vector.broadcast %cst_79 : f32 to vector<8x256xf32>
    %172 = arith.select %35, %170, %171 : vector<8x256xi1>, vector<8x256xf32>
    %c11 = arith.constant 11 : index
    %c0_80 = arith.constant 0 : index
    %c0_81 = arith.constant 0 : index
    %173 = vector.load %arg2[%c11, %c0_80, %c0_81] : memref<54x8x8xf32, #tpu.memory_space<vmem>>, vector<1x8x8xf32>
    %174 = vector.shape_cast %173 : vector<1x8x8xf32> to vector<8x8xf32>
    %cst_82 = arith.constant dense<0.000000e+00> : vector<8x256xf32>
    %175 = tpu.matmul %174, %172, %cst_82 {dimension_numbers = #tpu.dot_dimension_numbers<[1], [0], [0], [1], [0, 0, 1, 1], [], []>} : vector<8x8xf32>, vector<8x256xf32>, vector<8x256xf32> -> vector<8x256xf32>
    %176 = arith.addf %169, %175 : vector<8x256xf32>
    %c1_i32_83 = arith.constant 1 : i32
    %177 = tpu.dynamic_rotate %156 by %c1_i32_83 dim 1 : vector<8x256xf32>, i32 -> vector<8x256xf32>
    %cst_84 = arith.constant 0.000000e+00 : f32
    %178 = vector.broadcast %cst_84 : f32 to vector<8x256xf32>
    %179 = arith.select %46, %177, %178 : vector<8x256xi1>, vector<8x256xf32>
    %c12 = arith.constant 12 : index
    %c0_85 = arith.constant 0 : index
    %c0_86 = arith.constant 0 : index
    %180 = vector.load %arg2[%c12, %c0_85, %c0_86] : memref<54x8x8xf32, #tpu.memory_space<vmem>>, vector<1x8x8xf32>
    %181 = vector.shape_cast %180 : vector<1x8x8xf32> to vector<8x8xf32>
    %cst_87 = arith.constant dense<0.000000e+00> : vector<8x256xf32>
    %182 = tpu.matmul %181, %179, %cst_87 {dimension_numbers = #tpu.dot_dimension_numbers<[1], [0], [0], [1], [0, 0, 1, 1], [], []>} : vector<8x8xf32>, vector<8x256xf32>, vector<8x256xf32> -> vector<8x256xf32>
    %183 = arith.addf %176, %182 : vector<8x256xf32>
    %c13 = arith.constant 13 : index
    %c0_88 = arith.constant 0 : index
    %c0_89 = arith.constant 0 : index
    %184 = vector.load %arg2[%c13, %c0_88, %c0_89] : memref<54x8x8xf32, #tpu.memory_space<vmem>>, vector<1x8x8xf32>
    %185 = vector.shape_cast %184 : vector<1x8x8xf32> to vector<8x8xf32>
    %cst_90 = arith.constant dense<0.000000e+00> : vector<8x256xf32>
    %186 = tpu.matmul %185, %156, %cst_90 {dimension_numbers = #tpu.dot_dimension_numbers<[1], [0], [0], [1], [0, 0, 1, 1], [], []>} : vector<8x8xf32>, vector<8x256xf32>, vector<8x256xf32> -> vector<8x256xf32>
    %187 = arith.addf %183, %186 : vector<8x256xf32>
    %c255_i32_91 = arith.constant 255 : i32
    %188 = tpu.dynamic_rotate %156 by %c255_i32_91 dim 1 : vector<8x256xf32>, i32 -> vector<8x256xf32>
    %cst_92 = arith.constant 0.000000e+00 : f32
    %189 = vector.broadcast %cst_92 : f32 to vector<8x256xf32>
    %190 = arith.select %57, %188, %189 : vector<8x256xi1>, vector<8x256xf32>
    %c14 = arith.constant 14 : index
    %c0_93 = arith.constant 0 : index
    %c0_94 = arith.constant 0 : index
    %191 = vector.load %arg2[%c14, %c0_93, %c0_94] : memref<54x8x8xf32, #tpu.memory_space<vmem>>, vector<1x8x8xf32>
    %192 = vector.shape_cast %191 : vector<1x8x8xf32> to vector<8x8xf32>
    %cst_95 = arith.constant dense<0.000000e+00> : vector<8x256xf32>
    %193 = tpu.matmul %192, %190, %cst_95 {dimension_numbers = #tpu.dot_dimension_numbers<[1], [0], [0], [1], [0, 0, 1, 1], [], []>} : vector<8x8xf32>, vector<8x256xf32>, vector<8x256xf32> -> vector<8x256xf32>
    %194 = arith.addf %187, %193 : vector<8x256xf32>
    %c241_i32_96 = arith.constant 241 : i32
    %195 = tpu.dynamic_rotate %156 by %c241_i32_96 dim 1 : vector<8x256xf32>, i32 -> vector<8x256xf32>
    %cst_97 = arith.constant 0.000000e+00 : f32
    %196 = vector.broadcast %cst_97 : f32 to vector<8x256xf32>
    %197 = arith.select %68, %195, %196 : vector<8x256xi1>, vector<8x256xf32>
    %c15 = arith.constant 15 : index
    %c0_98 = arith.constant 0 : index
    %c0_99 = arith.constant 0 : index
    %198 = vector.load %arg2[%c15, %c0_98, %c0_99] : memref<54x8x8xf32, #tpu.memory_space<vmem>>, vector<1x8x8xf32>
    %199 = vector.shape_cast %198 : vector<1x8x8xf32> to vector<8x8xf32>
    %cst_100 = arith.constant dense<0.000000e+00> : vector<8x256xf32>
    %200 = tpu.matmul %199, %197, %cst_100 {dimension_numbers = #tpu.dot_dimension_numbers<[1], [0], [0], [1], [0, 0, 1, 1], [], []>} : vector<8x8xf32>, vector<8x256xf32>, vector<8x256xf32> -> vector<8x256xf32>
    %201 = arith.addf %194, %200 : vector<8x256xf32>
    %c240_i32_101 = arith.constant 240 : i32
    %202 = tpu.dynamic_rotate %156 by %c240_i32_101 dim 1 : vector<8x256xf32>, i32 -> vector<8x256xf32>
    %cst_102 = arith.constant 0.000000e+00 : f32
    %203 = vector.broadcast %cst_102 : f32 to vector<8x256xf32>
    %204 = arith.select %79, %202, %203 : vector<8x256xi1>, vector<8x256xf32>
    %c16 = arith.constant 16 : index
    %c0_103 = arith.constant 0 : index
    %c0_104 = arith.constant 0 : index
    %205 = vector.load %arg2[%c16, %c0_103, %c0_104] : memref<54x8x8xf32, #tpu.memory_space<vmem>>, vector<1x8x8xf32>
    %206 = vector.shape_cast %205 : vector<1x8x8xf32> to vector<8x8xf32>
    %cst_105 = arith.constant dense<0.000000e+00> : vector<8x256xf32>
    %207 = tpu.matmul %206, %204, %cst_105 {dimension_numbers = #tpu.dot_dimension_numbers<[1], [0], [0], [1], [0, 0, 1, 1], [], []>} : vector<8x8xf32>, vector<8x256xf32>, vector<8x256xf32> -> vector<8x256xf32>
    %208 = arith.addf %201, %207 : vector<8x256xf32>
    %c239_i32_106 = arith.constant 239 : i32
    %209 = tpu.dynamic_rotate %156 by %c239_i32_106 dim 1 : vector<8x256xf32>, i32 -> vector<8x256xf32>
    %cst_107 = arith.constant 0.000000e+00 : f32
    %210 = vector.broadcast %cst_107 : f32 to vector<8x256xf32>
    %211 = arith.select %90, %209, %210 : vector<8x256xi1>, vector<8x256xf32>
    %c17 = arith.constant 17 : index
    %c0_108 = arith.constant 0 : index
    %c0_109 = arith.constant 0 : index
    %212 = vector.load %arg2[%c17, %c0_108, %c0_109] : memref<54x8x8xf32, #tpu.memory_space<vmem>>, vector<1x8x8xf32>
    %213 = vector.shape_cast %212 : vector<1x8x8xf32> to vector<8x8xf32>
    %cst_110 = arith.constant dense<0.000000e+00> : vector<8x256xf32>
    %214 = tpu.matmul %213, %211, %cst_110 {dimension_numbers = #tpu.dot_dimension_numbers<[1], [0], [0], [1], [0, 0, 1, 1], [], []>} : vector<8x8xf32>, vector<8x256xf32>, vector<8x256xf32> -> vector<8x256xf32>
    %215 = arith.addf %208, %214 : vector<8x256xf32>
    %c1_111 = arith.constant 1 : index
    %c0_112 = arith.constant 0 : index
    %c0_113 = arith.constant 0 : index
    %216 = vector.load %arg3[%c1_111, %c0_112, %c0_113] : memref<6x8x1xf32, #tpu.memory_space<vmem>>, vector<1x8x1xf32>
    %217 = vector.shape_cast %216 : vector<1x8x1xf32> to vector<8x1xf32>
    %218 = vector.broadcast %217 : vector<8x1xf32> to vector<8x256xf32>
    %219 = arith.addf %215, %218 : vector<8x256xf32>
    %220 = arith.addf %219, %91 : vector<8x256xf32>
    %c17_i32_114 = arith.constant 17 : i32
    %221 = tpu.dynamic_rotate %220 by %c17_i32_114 dim 1 : vector<8x256xf32>, i32 -> vector<8x256xf32>
    %cst_115 = arith.constant 0.000000e+00 : f32
    %222 = vector.broadcast %cst_115 : f32 to vector<8x256xf32>
    %223 = arith.select %13, %221, %222 : vector<8x256xi1>, vector<8x256xf32>
    %c18 = arith.constant 18 : index
    %c0_116 = arith.constant 0 : index
    %c0_117 = arith.constant 0 : index
    %224 = vector.load %arg2[%c18, %c0_116, %c0_117] : memref<54x8x8xf32, #tpu.memory_space<vmem>>, vector<1x8x8xf32>
    %225 = vector.shape_cast %224 : vector<1x8x8xf32> to vector<8x8xf32>
    %cst_118 = arith.constant dense<0.000000e+00> : vector<8x256xf32>
    %226 = tpu.matmul %225, %223, %cst_118 {dimension_numbers = #tpu.dot_dimension_numbers<[1], [0], [0], [1], [0, 0, 1, 1], [], []>} : vector<8x8xf32>, vector<8x256xf32>, vector<8x256xf32> -> vector<8x256xf32>
    %c16_i32_119 = arith.constant 16 : i32
    %227 = tpu.dynamic_rotate %220 by %c16_i32_119 dim 1 : vector<8x256xf32>, i32 -> vector<8x256xf32>
    %cst_120 = arith.constant 0.000000e+00 : f32
    %228 = vector.broadcast %cst_120 : f32 to vector<8x256xf32>
    %229 = arith.select %24, %227, %228 : vector<8x256xi1>, vector<8x256xf32>
    %c19 = arith.constant 19 : index
    %c0_121 = arith.constant 0 : index
    %c0_122 = arith.constant 0 : index
    %230 = vector.load %arg2[%c19, %c0_121, %c0_122] : memref<54x8x8xf32, #tpu.memory_space<vmem>>, vector<1x8x8xf32>
    %231 = vector.shape_cast %230 : vector<1x8x8xf32> to vector<8x8xf32>
    %cst_123 = arith.constant dense<0.000000e+00> : vector<8x256xf32>
    %232 = tpu.matmul %231, %229, %cst_123 {dimension_numbers = #tpu.dot_dimension_numbers<[1], [0], [0], [1], [0, 0, 1, 1], [], []>} : vector<8x8xf32>, vector<8x256xf32>, vector<8x256xf32> -> vector<8x256xf32>
    %233 = arith.addf %226, %232 : vector<8x256xf32>
    %c15_i32_124 = arith.constant 15 : i32
    %234 = tpu.dynamic_rotate %220 by %c15_i32_124 dim 1 : vector<8x256xf32>, i32 -> vector<8x256xf32>
    %cst_125 = arith.constant 0.000000e+00 : f32
    %235 = vector.broadcast %cst_125 : f32 to vector<8x256xf32>
    %236 = arith.select %35, %234, %235 : vector<8x256xi1>, vector<8x256xf32>
    %c20 = arith.constant 20 : index
    %c0_126 = arith.constant 0 : index
    %c0_127 = arith.constant 0 : index
    %237 = vector.load %arg2[%c20, %c0_126, %c0_127] : memref<54x8x8xf32, #tpu.memory_space<vmem>>, vector<1x8x8xf32>
    %238 = vector.shape_cast %237 : vector<1x8x8xf32> to vector<8x8xf32>
    %cst_128 = arith.constant dense<0.000000e+00> : vector<8x256xf32>
    %239 = tpu.matmul %238, %236, %cst_128 {dimension_numbers = #tpu.dot_dimension_numbers<[1], [0], [0], [1], [0, 0, 1, 1], [], []>} : vector<8x8xf32>, vector<8x256xf32>, vector<8x256xf32> -> vector<8x256xf32>
    %240 = arith.addf %233, %239 : vector<8x256xf32>
    %c1_i32_129 = arith.constant 1 : i32
    %241 = tpu.dynamic_rotate %220 by %c1_i32_129 dim 1 : vector<8x256xf32>, i32 -> vector<8x256xf32>
    %cst_130 = arith.constant 0.000000e+00 : f32
    %242 = vector.broadcast %cst_130 : f32 to vector<8x256xf32>
    %243 = arith.select %46, %241, %242 : vector<8x256xi1>, vector<8x256xf32>
    %c21 = arith.constant 21 : index
    %c0_131 = arith.constant 0 : index
    %c0_132 = arith.constant 0 : index
    %244 = vector.load %arg2[%c21, %c0_131, %c0_132] : memref<54x8x8xf32, #tpu.memory_space<vmem>>, vector<1x8x8xf32>
    %245 = vector.shape_cast %244 : vector<1x8x8xf32> to vector<8x8xf32>
    %cst_133 = arith.constant dense<0.000000e+00> : vector<8x256xf32>
    %246 = tpu.matmul %245, %243, %cst_133 {dimension_numbers = #tpu.dot_dimension_numbers<[1], [0], [0], [1], [0, 0, 1, 1], [], []>} : vector<8x8xf32>, vector<8x256xf32>, vector<8x256xf32> -> vector<8x256xf32>
    %247 = arith.addf %240, %246 : vector<8x256xf32>
    %c22 = arith.constant 22 : index
    %c0_134 = arith.constant 0 : index
    %c0_135 = arith.constant 0 : index
    %248 = vector.load %arg2[%c22, %c0_134, %c0_135] : memref<54x8x8xf32, #tpu.memory_space<vmem>>, vector<1x8x8xf32>
    %249 = vector.shape_cast %248 : vector<1x8x8xf32> to vector<8x8xf32>
    %cst_136 = arith.constant dense<0.000000e+00> : vector<8x256xf32>
    %250 = tpu.matmul %249, %220, %cst_136 {dimension_numbers = #tpu.dot_dimension_numbers<[1], [0], [0], [1], [0, 0, 1, 1], [], []>} : vector<8x8xf32>, vector<8x256xf32>, vector<8x256xf32> -> vector<8x256xf32>
    %251 = arith.addf %247, %250 : vector<8x256xf32>
    %c255_i32_137 = arith.constant 255 : i32
    %252 = tpu.dynamic_rotate %220 by %c255_i32_137 dim 1 : vector<8x256xf32>, i32 -> vector<8x256xf32>
    %cst_138 = arith.constant 0.000000e+00 : f32
    %253 = vector.broadcast %cst_138 : f32 to vector<8x256xf32>
    %254 = arith.select %57, %252, %253 : vector<8x256xi1>, vector<8x256xf32>
    %c23 = arith.constant 23 : index
    %c0_139 = arith.constant 0 : index
    %c0_140 = arith.constant 0 : index
    %255 = vector.load %arg2[%c23, %c0_139, %c0_140] : memref<54x8x8xf32, #tpu.memory_space<vmem>>, vector<1x8x8xf32>
    %256 = vector.shape_cast %255 : vector<1x8x8xf32> to vector<8x8xf32>
    %cst_141 = arith.constant dense<0.000000e+00> : vector<8x256xf32>
    %257 = tpu.matmul %256, %254, %cst_141 {dimension_numbers = #tpu.dot_dimension_numbers<[1], [0], [0], [1], [0, 0, 1, 1], [], []>} : vector<8x8xf32>, vector<8x256xf32>, vector<8x256xf32> -> vector<8x256xf32>
    %258 = arith.addf %251, %257 : vector<8x256xf32>
    %c241_i32_142 = arith.constant 241 : i32
    %259 = tpu.dynamic_rotate %220 by %c241_i32_142 dim 1 : vector<8x256xf32>, i32 -> vector<8x256xf32>
    %cst_143 = arith.constant 0.000000e+00 : f32
    %260 = vector.broadcast %cst_143 : f32 to vector<8x256xf32>
    %261 = arith.select %68, %259, %260 : vector<8x256xi1>, vector<8x256xf32>
    %c24 = arith.constant 24 : index
    %c0_144 = arith.constant 0 : index
    %c0_145 = arith.constant 0 : index
    %262 = vector.load %arg2[%c24, %c0_144, %c0_145] : memref<54x8x8xf32, #tpu.memory_space<vmem>>, vector<1x8x8xf32>
    %263 = vector.shape_cast %262 : vector<1x8x8xf32> to vector<8x8xf32>
    %cst_146 = arith.constant dense<0.000000e+00> : vector<8x256xf32>
    %264 = tpu.matmul %263, %261, %cst_146 {dimension_numbers = #tpu.dot_dimension_numbers<[1], [0], [0], [1], [0, 0, 1, 1], [], []>} : vector<8x8xf32>, vector<8x256xf32>, vector<8x256xf32> -> vector<8x256xf32>
    %265 = arith.addf %258, %264 : vector<8x256xf32>
    %c240_i32_147 = arith.constant 240 : i32
    %266 = tpu.dynamic_rotate %220 by %c240_i32_147 dim 1 : vector<8x256xf32>, i32 -> vector<8x256xf32>
    %cst_148 = arith.constant 0.000000e+00 : f32
    %267 = vector.broadcast %cst_148 : f32 to vector<8x256xf32>
    %268 = arith.select %79, %266, %267 : vector<8x256xi1>, vector<8x256xf32>
    %c25 = arith.constant 25 : index
    %c0_149 = arith.constant 0 : index
    %c0_150 = arith.constant 0 : index
    %269 = vector.load %arg2[%c25, %c0_149, %c0_150] : memref<54x8x8xf32, #tpu.memory_space<vmem>>, vector<1x8x8xf32>
    %270 = vector.shape_cast %269 : vector<1x8x8xf32> to vector<8x8xf32>
    %cst_151 = arith.constant dense<0.000000e+00> : vector<8x256xf32>
    %271 = tpu.matmul %270, %268, %cst_151 {dimension_numbers = #tpu.dot_dimension_numbers<[1], [0], [0], [1], [0, 0, 1, 1], [], []>} : vector<8x8xf32>, vector<8x256xf32>, vector<8x256xf32> -> vector<8x256xf32>
    %272 = arith.addf %265, %271 : vector<8x256xf32>
    %c239_i32_152 = arith.constant 239 : i32
    %273 = tpu.dynamic_rotate %220 by %c239_i32_152 dim 1 : vector<8x256xf32>, i32 -> vector<8x256xf32>
    %cst_153 = arith.constant 0.000000e+00 : f32
    %274 = vector.broadcast %cst_153 : f32 to vector<8x256xf32>
    %275 = arith.select %90, %273, %274 : vector<8x256xi1>, vector<8x256xf32>
    %c26 = arith.constant 26 : index
    %c0_154 = arith.constant 0 : index
    %c0_155 = arith.constant 0 : index
    %276 = vector.load %arg2[%c26, %c0_154, %c0_155] : memref<54x8x8xf32, #tpu.memory_space<vmem>>, vector<1x8x8xf32>
    %277 = vector.shape_cast %276 : vector<1x8x8xf32> to vector<8x8xf32>
    %cst_156 = arith.constant dense<0.000000e+00> : vector<8x256xf32>
    %278 = tpu.matmul %277, %275, %cst_156 {dimension_numbers = #tpu.dot_dimension_numbers<[1], [0], [0], [1], [0, 0, 1, 1], [], []>} : vector<8x8xf32>, vector<8x256xf32>, vector<8x256xf32> -> vector<8x256xf32>
    %279 = arith.addf %272, %278 : vector<8x256xf32>
    %c2_157 = arith.constant 2 : index
    %c0_158 = arith.constant 0 : index
    %c0_159 = arith.constant 0 : index
    %280 = vector.load %arg3[%c2_157, %c0_158, %c0_159] : memref<6x8x1xf32, #tpu.memory_space<vmem>>, vector<1x8x1xf32>
    %281 = vector.shape_cast %280 : vector<1x8x1xf32> to vector<8x1xf32>
    %282 = vector.broadcast %281 : vector<8x1xf32> to vector<8x256xf32>
    %283 = arith.addf %279, %282 : vector<8x256xf32>
    %cst_160 = arith.constant 0.000000e+00 : f32
    %284 = vector.broadcast %cst_160 : f32 to vector<8x256xf32>
    %285 = arith.maximumf %283, %284 : vector<8x256xf32>
    %c17_i32_161 = arith.constant 17 : i32
    %286 = tpu.dynamic_rotate %285 by %c17_i32_161 dim 1 : vector<8x256xf32>, i32 -> vector<8x256xf32>
    %cst_162 = arith.constant 0.000000e+00 : f32
    %287 = vector.broadcast %cst_162 : f32 to vector<8x256xf32>
    %288 = arith.select %13, %286, %287 : vector<8x256xi1>, vector<8x256xf32>
    %c27 = arith.constant 27 : index
    %c0_163 = arith.constant 0 : index
    %c0_164 = arith.constant 0 : index
    %289 = vector.load %arg2[%c27, %c0_163, %c0_164] : memref<54x8x8xf32, #tpu.memory_space<vmem>>, vector<1x8x8xf32>
    %290 = vector.shape_cast %289 : vector<1x8x8xf32> to vector<8x8xf32>
    %cst_165 = arith.constant dense<0.000000e+00> : vector<8x256xf32>
    %291 = tpu.matmul %290, %288, %cst_165 {dimension_numbers = #tpu.dot_dimension_numbers<[1], [0], [0], [1], [0, 0, 1, 1], [], []>} : vector<8x8xf32>, vector<8x256xf32>, vector<8x256xf32> -> vector<8x256xf32>
    %c16_i32_166 = arith.constant 16 : i32
    %292 = tpu.dynamic_rotate %285 by %c16_i32_166 dim 1 : vector<8x256xf32>, i32 -> vector<8x256xf32>
    %cst_167 = arith.constant 0.000000e+00 : f32
    %293 = vector.broadcast %cst_167 : f32 to vector<8x256xf32>
    %294 = arith.select %24, %292, %293 : vector<8x256xi1>, vector<8x256xf32>
    %c28 = arith.constant 28 : index
    %c0_168 = arith.constant 0 : index
    %c0_169 = arith.constant 0 : index
    %295 = vector.load %arg2[%c28, %c0_168, %c0_169] : memref<54x8x8xf32, #tpu.memory_space<vmem>>, vector<1x8x8xf32>
    %296 = vector.shape_cast %295 : vector<1x8x8xf32> to vector<8x8xf32>
    %cst_170 = arith.constant dense<0.000000e+00> : vector<8x256xf32>
    %297 = tpu.matmul %296, %294, %cst_170 {dimension_numbers = #tpu.dot_dimension_numbers<[1], [0], [0], [1], [0, 0, 1, 1], [], []>} : vector<8x8xf32>, vector<8x256xf32>, vector<8x256xf32> -> vector<8x256xf32>
    %298 = arith.addf %291, %297 : vector<8x256xf32>
    %c15_i32_171 = arith.constant 15 : i32
    %299 = tpu.dynamic_rotate %285 by %c15_i32_171 dim 1 : vector<8x256xf32>, i32 -> vector<8x256xf32>
    %cst_172 = arith.constant 0.000000e+00 : f32
    %300 = vector.broadcast %cst_172 : f32 to vector<8x256xf32>
    %301 = arith.select %35, %299, %300 : vector<8x256xi1>, vector<8x256xf32>
    %c29 = arith.constant 29 : index
    %c0_173 = arith.constant 0 : index
    %c0_174 = arith.constant 0 : index
    %302 = vector.load %arg2[%c29, %c0_173, %c0_174] : memref<54x8x8xf32, #tpu.memory_space<vmem>>, vector<1x8x8xf32>
    %303 = vector.shape_cast %302 : vector<1x8x8xf32> to vector<8x8xf32>
    %cst_175 = arith.constant dense<0.000000e+00> : vector<8x256xf32>
    %304 = tpu.matmul %303, %301, %cst_175 {dimension_numbers = #tpu.dot_dimension_numbers<[1], [0], [0], [1], [0, 0, 1, 1], [], []>} : vector<8x8xf32>, vector<8x256xf32>, vector<8x256xf32> -> vector<8x256xf32>
    %305 = arith.addf %298, %304 : vector<8x256xf32>
    %c1_i32_176 = arith.constant 1 : i32
    %306 = tpu.dynamic_rotate %285 by %c1_i32_176 dim 1 : vector<8x256xf32>, i32 -> vector<8x256xf32>
    %cst_177 = arith.constant 0.000000e+00 : f32
    %307 = vector.broadcast %cst_177 : f32 to vector<8x256xf32>
    %308 = arith.select %46, %306, %307 : vector<8x256xi1>, vector<8x256xf32>
    %c30 = arith.constant 30 : index
    %c0_178 = arith.constant 0 : index
    %c0_179 = arith.constant 0 : index
    %309 = vector.load %arg2[%c30, %c0_178, %c0_179] : memref<54x8x8xf32, #tpu.memory_space<vmem>>, vector<1x8x8xf32>
    %310 = vector.shape_cast %309 : vector<1x8x8xf32> to vector<8x8xf32>
    %cst_180 = arith.constant dense<0.000000e+00> : vector<8x256xf32>
    %311 = tpu.matmul %310, %308, %cst_180 {dimension_numbers = #tpu.dot_dimension_numbers<[1], [0], [0], [1], [0, 0, 1, 1], [], []>} : vector<8x8xf32>, vector<8x256xf32>, vector<8x256xf32> -> vector<8x256xf32>
    %312 = arith.addf %305, %311 : vector<8x256xf32>
    %c31 = arith.constant 31 : index
    %c0_181 = arith.constant 0 : index
    %c0_182 = arith.constant 0 : index
    %313 = vector.load %arg2[%c31, %c0_181, %c0_182] : memref<54x8x8xf32, #tpu.memory_space<vmem>>, vector<1x8x8xf32>
    %314 = vector.shape_cast %313 : vector<1x8x8xf32> to vector<8x8xf32>
    %cst_183 = arith.constant dense<0.000000e+00> : vector<8x256xf32>
    %315 = tpu.matmul %314, %285, %cst_183 {dimension_numbers = #tpu.dot_dimension_numbers<[1], [0], [0], [1], [0, 0, 1, 1], [], []>} : vector<8x8xf32>, vector<8x256xf32>, vector<8x256xf32> -> vector<8x256xf32>
    %316 = arith.addf %312, %315 : vector<8x256xf32>
    %c255_i32_184 = arith.constant 255 : i32
    %317 = tpu.dynamic_rotate %285 by %c255_i32_184 dim 1 : vector<8x256xf32>, i32 -> vector<8x256xf32>
    %cst_185 = arith.constant 0.000000e+00 : f32
    %318 = vector.broadcast %cst_185 : f32 to vector<8x256xf32>
    %319 = arith.select %57, %317, %318 : vector<8x256xi1>, vector<8x256xf32>
    %c32 = arith.constant 32 : index
    %c0_186 = arith.constant 0 : index
    %c0_187 = arith.constant 0 : index
    %320 = vector.load %arg2[%c32, %c0_186, %c0_187] : memref<54x8x8xf32, #tpu.memory_space<vmem>>, vector<1x8x8xf32>
    %321 = vector.shape_cast %320 : vector<1x8x8xf32> to vector<8x8xf32>
    %cst_188 = arith.constant dense<0.000000e+00> : vector<8x256xf32>
    %322 = tpu.matmul %321, %319, %cst_188 {dimension_numbers = #tpu.dot_dimension_numbers<[1], [0], [0], [1], [0, 0, 1, 1], [], []>} : vector<8x8xf32>, vector<8x256xf32>, vector<8x256xf32> -> vector<8x256xf32>
    %323 = arith.addf %316, %322 : vector<8x256xf32>
    %c241_i32_189 = arith.constant 241 : i32
    %324 = tpu.dynamic_rotate %285 by %c241_i32_189 dim 1 : vector<8x256xf32>, i32 -> vector<8x256xf32>
    %cst_190 = arith.constant 0.000000e+00 : f32
    %325 = vector.broadcast %cst_190 : f32 to vector<8x256xf32>
    %326 = arith.select %68, %324, %325 : vector<8x256xi1>, vector<8x256xf32>
    %c33 = arith.constant 33 : index
    %c0_191 = arith.constant 0 : index
    %c0_192 = arith.constant 0 : index
    %327 = vector.load %arg2[%c33, %c0_191, %c0_192] : memref<54x8x8xf32, #tpu.memory_space<vmem>>, vector<1x8x8xf32>
    %328 = vector.shape_cast %327 : vector<1x8x8xf32> to vector<8x8xf32>
    %cst_193 = arith.constant dense<0.000000e+00> : vector<8x256xf32>
    %329 = tpu.matmul %328, %326, %cst_193 {dimension_numbers = #tpu.dot_dimension_numbers<[1], [0], [0], [1], [0, 0, 1, 1], [], []>} : vector<8x8xf32>, vector<8x256xf32>, vector<8x256xf32> -> vector<8x256xf32>
    %330 = arith.addf %323, %329 : vector<8x256xf32>
    %c240_i32_194 = arith.constant 240 : i32
    %331 = tpu.dynamic_rotate %285 by %c240_i32_194 dim 1 : vector<8x256xf32>, i32 -> vector<8x256xf32>
    %cst_195 = arith.constant 0.000000e+00 : f32
    %332 = vector.broadcast %cst_195 : f32 to vector<8x256xf32>
    %333 = arith.select %79, %331, %332 : vector<8x256xi1>, vector<8x256xf32>
    %c34 = arith.constant 34 : index
    %c0_196 = arith.constant 0 : index
    %c0_197 = arith.constant 0 : index
    %334 = vector.load %arg2[%c34, %c0_196, %c0_197] : memref<54x8x8xf32, #tpu.memory_space<vmem>>, vector<1x8x8xf32>
    %335 = vector.shape_cast %334 : vector<1x8x8xf32> to vector<8x8xf32>
    %cst_198 = arith.constant dense<0.000000e+00> : vector<8x256xf32>
    %336 = tpu.matmul %335, %333, %cst_198 {dimension_numbers = #tpu.dot_dimension_numbers<[1], [0], [0], [1], [0, 0, 1, 1], [], []>} : vector<8x8xf32>, vector<8x256xf32>, vector<8x256xf32> -> vector<8x256xf32>
    %337 = arith.addf %330, %336 : vector<8x256xf32>
    %c239_i32_199 = arith.constant 239 : i32
    %338 = tpu.dynamic_rotate %285 by %c239_i32_199 dim 1 : vector<8x256xf32>, i32 -> vector<8x256xf32>
    %cst_200 = arith.constant 0.000000e+00 : f32
    %339 = vector.broadcast %cst_200 : f32 to vector<8x256xf32>
    %340 = arith.select %90, %338, %339 : vector<8x256xi1>, vector<8x256xf32>
    %c35 = arith.constant 35 : index
    %c0_201 = arith.constant 0 : index
    %c0_202 = arith.constant 0 : index
    %341 = vector.load %arg2[%c35, %c0_201, %c0_202] : memref<54x8x8xf32, #tpu.memory_space<vmem>>, vector<1x8x8xf32>
    %342 = vector.shape_cast %341 : vector<1x8x8xf32> to vector<8x8xf32>
    %cst_203 = arith.constant dense<0.000000e+00> : vector<8x256xf32>
    %343 = tpu.matmul %342, %340, %cst_203 {dimension_numbers = #tpu.dot_dimension_numbers<[1], [0], [0], [1], [0, 0, 1, 1], [], []>} : vector<8x8xf32>, vector<8x256xf32>, vector<8x256xf32> -> vector<8x256xf32>
    %344 = arith.addf %337, %343 : vector<8x256xf32>
    %c3_204 = arith.constant 3 : index
    %c0_205 = arith.constant 0 : index
    %c0_206 = arith.constant 0 : index
    %345 = vector.load %arg3[%c3_204, %c0_205, %c0_206] : memref<6x8x1xf32, #tpu.memory_space<vmem>>, vector<1x8x1xf32>
    %346 = vector.shape_cast %345 : vector<1x8x1xf32> to vector<8x1xf32>
    %347 = vector.broadcast %346 : vector<8x1xf32> to vector<8x256xf32>
    %348 = arith.addf %344, %347 : vector<8x256xf32>
    %349 = arith.addf %348, %220 : vector<8x256xf32>
    %c17_i32_207 = arith.constant 17 : i32
    %350 = tpu.dynamic_rotate %349 by %c17_i32_207 dim 1 : vector<8x256xf32>, i32 -> vector<8x256xf32>
    %cst_208 = arith.constant 0.000000e+00 : f32
    %351 = vector.broadcast %cst_208 : f32 to vector<8x256xf32>
    %352 = arith.select %13, %350, %351 : vector<8x256xi1>, vector<8x256xf32>
    %c36 = arith.constant 36 : index
    %c0_209 = arith.constant 0 : index
    %c0_210 = arith.constant 0 : index
    %353 = vector.load %arg2[%c36, %c0_209, %c0_210] : memref<54x8x8xf32, #tpu.memory_space<vmem>>, vector<1x8x8xf32>
    %354 = vector.shape_cast %353 : vector<1x8x8xf32> to vector<8x8xf32>
    %cst_211 = arith.constant dense<0.000000e+00> : vector<8x256xf32>
    %355 = tpu.matmul %354, %352, %cst_211 {dimension_numbers = #tpu.dot_dimension_numbers<[1], [0], [0], [1], [0, 0, 1, 1], [], []>} : vector<8x8xf32>, vector<8x256xf32>, vector<8x256xf32> -> vector<8x256xf32>
    %c16_i32_212 = arith.constant 16 : i32
    %356 = tpu.dynamic_rotate %349 by %c16_i32_212 dim 1 : vector<8x256xf32>, i32 -> vector<8x256xf32>
    %cst_213 = arith.constant 0.000000e+00 : f32
    %357 = vector.broadcast %cst_213 : f32 to vector<8x256xf32>
    %358 = arith.select %24, %356, %357 : vector<8x256xi1>, vector<8x256xf32>
    %c37 = arith.constant 37 : index
    %c0_214 = arith.constant 0 : index
    %c0_215 = arith.constant 0 : index
    %359 = vector.load %arg2[%c37, %c0_214, %c0_215] : memref<54x8x8xf32, #tpu.memory_space<vmem>>, vector<1x8x8xf32>
    %360 = vector.shape_cast %359 : vector<1x8x8xf32> to vector<8x8xf32>
    %cst_216 = arith.constant dense<0.000000e+00> : vector<8x256xf32>
    %361 = tpu.matmul %360, %358, %cst_216 {dimension_numbers = #tpu.dot_dimension_numbers<[1], [0], [0], [1], [0, 0, 1, 1], [], []>} : vector<8x8xf32>, vector<8x256xf32>, vector<8x256xf32> -> vector<8x256xf32>
    %362 = arith.addf %355, %361 : vector<8x256xf32>
    %c15_i32_217 = arith.constant 15 : i32
    %363 = tpu.dynamic_rotate %349 by %c15_i32_217 dim 1 : vector<8x256xf32>, i32 -> vector<8x256xf32>
    %cst_218 = arith.constant 0.000000e+00 : f32
    %364 = vector.broadcast %cst_218 : f32 to vector<8x256xf32>
    %365 = arith.select %35, %363, %364 : vector<8x256xi1>, vector<8x256xf32>
    %c38 = arith.constant 38 : index
    %c0_219 = arith.constant 0 : index
    %c0_220 = arith.constant 0 : index
    %366 = vector.load %arg2[%c38, %c0_219, %c0_220] : memref<54x8x8xf32, #tpu.memory_space<vmem>>, vector<1x8x8xf32>
    %367 = vector.shape_cast %366 : vector<1x8x8xf32> to vector<8x8xf32>
    %cst_221 = arith.constant dense<0.000000e+00> : vector<8x256xf32>
    %368 = tpu.matmul %367, %365, %cst_221 {dimension_numbers = #tpu.dot_dimension_numbers<[1], [0], [0], [1], [0, 0, 1, 1], [], []>} : vector<8x8xf32>, vector<8x256xf32>, vector<8x256xf32> -> vector<8x256xf32>
    %369 = arith.addf %362, %368 : vector<8x256xf32>
    %c1_i32_222 = arith.constant 1 : i32
    %370 = tpu.dynamic_rotate %349 by %c1_i32_222 dim 1 : vector<8x256xf32>, i32 -> vector<8x256xf32>
    %cst_223 = arith.constant 0.000000e+00 : f32
    %371 = vector.broadcast %cst_223 : f32 to vector<8x256xf32>
    %372 = arith.select %46, %370, %371 : vector<8x256xi1>, vector<8x256xf32>
    %c39 = arith.constant 39 : index
    %c0_224 = arith.constant 0 : index
    %c0_225 = arith.constant 0 : index
    %373 = vector.load %arg2[%c39, %c0_224, %c0_225] : memref<54x8x8xf32, #tpu.memory_space<vmem>>, vector<1x8x8xf32>
    %374 = vector.shape_cast %373 : vector<1x8x8xf32> to vector<8x8xf32>
    %cst_226 = arith.constant dense<0.000000e+00> : vector<8x256xf32>
    %375 = tpu.matmul %374, %372, %cst_226 {dimension_numbers = #tpu.dot_dimension_numbers<[1], [0], [0], [1], [0, 0, 1, 1], [], []>} : vector<8x8xf32>, vector<8x256xf32>, vector<8x256xf32> -> vector<8x256xf32>
    %376 = arith.addf %369, %375 : vector<8x256xf32>
    %c40 = arith.constant 40 : index
    %c0_227 = arith.constant 0 : index
    %c0_228 = arith.constant 0 : index
    %377 = vector.load %arg2[%c40, %c0_227, %c0_228] : memref<54x8x8xf32, #tpu.memory_space<vmem>>, vector<1x8x8xf32>
    %378 = vector.shape_cast %377 : vector<1x8x8xf32> to vector<8x8xf32>
    %cst_229 = arith.constant dense<0.000000e+00> : vector<8x256xf32>
    %379 = tpu.matmul %378, %349, %cst_229 {dimension_numbers = #tpu.dot_dimension_numbers<[1], [0], [0], [1], [0, 0, 1, 1], [], []>} : vector<8x8xf32>, vector<8x256xf32>, vector<8x256xf32> -> vector<8x256xf32>
    %380 = arith.addf %376, %379 : vector<8x256xf32>
    %c255_i32_230 = arith.constant 255 : i32
    %381 = tpu.dynamic_rotate %349 by %c255_i32_230 dim 1 : vector<8x256xf32>, i32 -> vector<8x256xf32>
    %cst_231 = arith.constant 0.000000e+00 : f32
    %382 = vector.broadcast %cst_231 : f32 to vector<8x256xf32>
    %383 = arith.select %57, %381, %382 : vector<8x256xi1>, vector<8x256xf32>
    %c41 = arith.constant 41 : index
    %c0_232 = arith.constant 0 : index
    %c0_233 = arith.constant 0 : index
    %384 = vector.load %arg2[%c41, %c0_232, %c0_233] : memref<54x8x8xf32, #tpu.memory_space<vmem>>, vector<1x8x8xf32>
    %385 = vector.shape_cast %384 : vector<1x8x8xf32> to vector<8x8xf32>
    %cst_234 = arith.constant dense<0.000000e+00> : vector<8x256xf32>
    %386 = tpu.matmul %385, %383, %cst_234 {dimension_numbers = #tpu.dot_dimension_numbers<[1], [0], [0], [1], [0, 0, 1, 1], [], []>} : vector<8x8xf32>, vector<8x256xf32>, vector<8x256xf32> -> vector<8x256xf32>
    %387 = arith.addf %380, %386 : vector<8x256xf32>
    %c241_i32_235 = arith.constant 241 : i32
    %388 = tpu.dynamic_rotate %349 by %c241_i32_235 dim 1 : vector<8x256xf32>, i32 -> vector<8x256xf32>
    %cst_236 = arith.constant 0.000000e+00 : f32
    %389 = vector.broadcast %cst_236 : f32 to vector<8x256xf32>
    %390 = arith.select %68, %388, %389 : vector<8x256xi1>, vector<8x256xf32>
    %c42 = arith.constant 42 : index
    %c0_237 = arith.constant 0 : index
    %c0_238 = arith.constant 0 : index
    %391 = vector.load %arg2[%c42, %c0_237, %c0_238] : memref<54x8x8xf32, #tpu.memory_space<vmem>>, vector<1x8x8xf32>
    %392 = vector.shape_cast %391 : vector<1x8x8xf32> to vector<8x8xf32>
    %cst_239 = arith.constant dense<0.000000e+00> : vector<8x256xf32>
    %393 = tpu.matmul %392, %390, %cst_239 {dimension_numbers = #tpu.dot_dimension_numbers<[1], [0], [0], [1], [0, 0, 1, 1], [], []>} : vector<8x8xf32>, vector<8x256xf32>, vector<8x256xf32> -> vector<8x256xf32>
    %394 = arith.addf %387, %393 : vector<8x256xf32>
    %c240_i32_240 = arith.constant 240 : i32
    %395 = tpu.dynamic_rotate %349 by %c240_i32_240 dim 1 : vector<8x256xf32>, i32 -> vector<8x256xf32>
    %cst_241 = arith.constant 0.000000e+00 : f32
    %396 = vector.broadcast %cst_241 : f32 to vector<8x256xf32>
    %397 = arith.select %79, %395, %396 : vector<8x256xi1>, vector<8x256xf32>
    %c43 = arith.constant 43 : index
    %c0_242 = arith.constant 0 : index
    %c0_243 = arith.constant 0 : index
    %398 = vector.load %arg2[%c43, %c0_242, %c0_243] : memref<54x8x8xf32, #tpu.memory_space<vmem>>, vector<1x8x8xf32>
    %399 = vector.shape_cast %398 : vector<1x8x8xf32> to vector<8x8xf32>
    %cst_244 = arith.constant dense<0.000000e+00> : vector<8x256xf32>
    %400 = tpu.matmul %399, %397, %cst_244 {dimension_numbers = #tpu.dot_dimension_numbers<[1], [0], [0], [1], [0, 0, 1, 1], [], []>} : vector<8x8xf32>, vector<8x256xf32>, vector<8x256xf32> -> vector<8x256xf32>
    %401 = arith.addf %394, %400 : vector<8x256xf32>
    %c239_i32_245 = arith.constant 239 : i32
    %402 = tpu.dynamic_rotate %349 by %c239_i32_245 dim 1 : vector<8x256xf32>, i32 -> vector<8x256xf32>
    %cst_246 = arith.constant 0.000000e+00 : f32
    %403 = vector.broadcast %cst_246 : f32 to vector<8x256xf32>
    %404 = arith.select %90, %402, %403 : vector<8x256xi1>, vector<8x256xf32>
    %c44 = arith.constant 44 : index
    %c0_247 = arith.constant 0 : index
    %c0_248 = arith.constant 0 : index
    %405 = vector.load %arg2[%c44, %c0_247, %c0_248] : memref<54x8x8xf32, #tpu.memory_space<vmem>>, vector<1x8x8xf32>
    %406 = vector.shape_cast %405 : vector<1x8x8xf32> to vector<8x8xf32>
    %cst_249 = arith.constant dense<0.000000e+00> : vector<8x256xf32>
    %407 = tpu.matmul %406, %404, %cst_249 {dimension_numbers = #tpu.dot_dimension_numbers<[1], [0], [0], [1], [0, 0, 1, 1], [], []>} : vector<8x8xf32>, vector<8x256xf32>, vector<8x256xf32> -> vector<8x256xf32>
    %408 = arith.addf %401, %407 : vector<8x256xf32>
    %c4_250 = arith.constant 4 : index
    %c0_251 = arith.constant 0 : index
    %c0_252 = arith.constant 0 : index
    %409 = vector.load %arg3[%c4_250, %c0_251, %c0_252] : memref<6x8x1xf32, #tpu.memory_space<vmem>>, vector<1x8x1xf32>
    %410 = vector.shape_cast %409 : vector<1x8x1xf32> to vector<8x1xf32>
    %411 = vector.broadcast %410 : vector<8x1xf32> to vector<8x256xf32>
    %412 = arith.addf %408, %411 : vector<8x256xf32>
    %cst_253 = arith.constant 0.000000e+00 : f32
    %413 = vector.broadcast %cst_253 : f32 to vector<8x256xf32>
    %414 = arith.maximumf %412, %413 : vector<8x256xf32>
    %c17_i32_254 = arith.constant 17 : i32
    %415 = tpu.dynamic_rotate %414 by %c17_i32_254 dim 1 : vector<8x256xf32>, i32 -> vector<8x256xf32>
    %cst_255 = arith.constant 0.000000e+00 : f32
    %416 = vector.broadcast %cst_255 : f32 to vector<8x256xf32>
    %417 = arith.select %13, %415, %416 : vector<8x256xi1>, vector<8x256xf32>
    %c45 = arith.constant 45 : index
    %c0_256 = arith.constant 0 : index
    %c0_257 = arith.constant 0 : index
    %418 = vector.load %arg2[%c45, %c0_256, %c0_257] : memref<54x8x8xf32, #tpu.memory_space<vmem>>, vector<1x8x8xf32>
    %419 = vector.shape_cast %418 : vector<1x8x8xf32> to vector<8x8xf32>
    %cst_258 = arith.constant dense<0.000000e+00> : vector<8x256xf32>
    %420 = tpu.matmul %419, %417, %cst_258 {dimension_numbers = #tpu.dot_dimension_numbers<[1], [0], [0], [1], [0, 0, 1, 1], [], []>} : vector<8x8xf32>, vector<8x256xf32>, vector<8x256xf32> -> vector<8x256xf32>
    %c16_i32_259 = arith.constant 16 : i32
    %421 = tpu.dynamic_rotate %414 by %c16_i32_259 dim 1 : vector<8x256xf32>, i32 -> vector<8x256xf32>
    %cst_260 = arith.constant 0.000000e+00 : f32
    %422 = vector.broadcast %cst_260 : f32 to vector<8x256xf32>
    %423 = arith.select %24, %421, %422 : vector<8x256xi1>, vector<8x256xf32>
    %c46 = arith.constant 46 : index
    %c0_261 = arith.constant 0 : index
    %c0_262 = arith.constant 0 : index
    %424 = vector.load %arg2[%c46, %c0_261, %c0_262] : memref<54x8x8xf32, #tpu.memory_space<vmem>>, vector<1x8x8xf32>
    %425 = vector.shape_cast %424 : vector<1x8x8xf32> to vector<8x8xf32>
    %cst_263 = arith.constant dense<0.000000e+00> : vector<8x256xf32>
    %426 = tpu.matmul %425, %423, %cst_263 {dimension_numbers = #tpu.dot_dimension_numbers<[1], [0], [0], [1], [0, 0, 1, 1], [], []>} : vector<8x8xf32>, vector<8x256xf32>, vector<8x256xf32> -> vector<8x256xf32>
    %427 = arith.addf %420, %426 : vector<8x256xf32>
    %c15_i32_264 = arith.constant 15 : i32
    %428 = tpu.dynamic_rotate %414 by %c15_i32_264 dim 1 : vector<8x256xf32>, i32 -> vector<8x256xf32>
    %cst_265 = arith.constant 0.000000e+00 : f32
    %429 = vector.broadcast %cst_265 : f32 to vector<8x256xf32>
    %430 = arith.select %35, %428, %429 : vector<8x256xi1>, vector<8x256xf32>
    %c47 = arith.constant 47 : index
    %c0_266 = arith.constant 0 : index
    %c0_267 = arith.constant 0 : index
    %431 = vector.load %arg2[%c47, %c0_266, %c0_267] : memref<54x8x8xf32, #tpu.memory_space<vmem>>, vector<1x8x8xf32>
    %432 = vector.shape_cast %431 : vector<1x8x8xf32> to vector<8x8xf32>
    %cst_268 = arith.constant dense<0.000000e+00> : vector<8x256xf32>
    %433 = tpu.matmul %432, %430, %cst_268 {dimension_numbers = #tpu.dot_dimension_numbers<[1], [0], [0], [1], [0, 0, 1, 1], [], []>} : vector<8x8xf32>, vector<8x256xf32>, vector<8x256xf32> -> vector<8x256xf32>
    %434 = arith.addf %427, %433 : vector<8x256xf32>
    %c1_i32_269 = arith.constant 1 : i32
    %435 = tpu.dynamic_rotate %414 by %c1_i32_269 dim 1 : vector<8x256xf32>, i32 -> vector<8x256xf32>
    %cst_270 = arith.constant 0.000000e+00 : f32
    %436 = vector.broadcast %cst_270 : f32 to vector<8x256xf32>
    %437 = arith.select %46, %435, %436 : vector<8x256xi1>, vector<8x256xf32>
    %c48 = arith.constant 48 : index
    %c0_271 = arith.constant 0 : index
    %c0_272 = arith.constant 0 : index
    %438 = vector.load %arg2[%c48, %c0_271, %c0_272] : memref<54x8x8xf32, #tpu.memory_space<vmem>>, vector<1x8x8xf32>
    %439 = vector.shape_cast %438 : vector<1x8x8xf32> to vector<8x8xf32>
    %cst_273 = arith.constant dense<0.000000e+00> : vector<8x256xf32>
    %440 = tpu.matmul %439, %437, %cst_273 {dimension_numbers = #tpu.dot_dimension_numbers<[1], [0], [0], [1], [0, 0, 1, 1], [], []>} : vector<8x8xf32>, vector<8x256xf32>, vector<8x256xf32> -> vector<8x256xf32>
    %441 = arith.addf %434, %440 : vector<8x256xf32>
    %c49 = arith.constant 49 : index
    %c0_274 = arith.constant 0 : index
    %c0_275 = arith.constant 0 : index
    %442 = vector.load %arg2[%c49, %c0_274, %c0_275] : memref<54x8x8xf32, #tpu.memory_space<vmem>>, vector<1x8x8xf32>
    %443 = vector.shape_cast %442 : vector<1x8x8xf32> to vector<8x8xf32>
    %cst_276 = arith.constant dense<0.000000e+00> : vector<8x256xf32>
    %444 = tpu.matmul %443, %414, %cst_276 {dimension_numbers = #tpu.dot_dimension_numbers<[1], [0], [0], [1], [0, 0, 1, 1], [], []>} : vector<8x8xf32>, vector<8x256xf32>, vector<8x256xf32> -> vector<8x256xf32>
    %445 = arith.addf %441, %444 : vector<8x256xf32>
    %c255_i32_277 = arith.constant 255 : i32
    %446 = tpu.dynamic_rotate %414 by %c255_i32_277 dim 1 : vector<8x256xf32>, i32 -> vector<8x256xf32>
    %cst_278 = arith.constant 0.000000e+00 : f32
    %447 = vector.broadcast %cst_278 : f32 to vector<8x256xf32>
    %448 = arith.select %57, %446, %447 : vector<8x256xi1>, vector<8x256xf32>
    %c50 = arith.constant 50 : index
    %c0_279 = arith.constant 0 : index
    %c0_280 = arith.constant 0 : index
    %449 = vector.load %arg2[%c50, %c0_279, %c0_280] : memref<54x8x8xf32, #tpu.memory_space<vmem>>, vector<1x8x8xf32>
    %450 = vector.shape_cast %449 : vector<1x8x8xf32> to vector<8x8xf32>
    %cst_281 = arith.constant dense<0.000000e+00> : vector<8x256xf32>
    %451 = tpu.matmul %450, %448, %cst_281 {dimension_numbers = #tpu.dot_dimension_numbers<[1], [0], [0], [1], [0, 0, 1, 1], [], []>} : vector<8x8xf32>, vector<8x256xf32>, vector<8x256xf32> -> vector<8x256xf32>
    %452 = arith.addf %445, %451 : vector<8x256xf32>
    %c241_i32_282 = arith.constant 241 : i32
    %453 = tpu.dynamic_rotate %414 by %c241_i32_282 dim 1 : vector<8x256xf32>, i32 -> vector<8x256xf32>
    %cst_283 = arith.constant 0.000000e+00 : f32
    %454 = vector.broadcast %cst_283 : f32 to vector<8x256xf32>
    %455 = arith.select %68, %453, %454 : vector<8x256xi1>, vector<8x256xf32>
    %c51 = arith.constant 51 : index
    %c0_284 = arith.constant 0 : index
    %c0_285 = arith.constant 0 : index
    %456 = vector.load %arg2[%c51, %c0_284, %c0_285] : memref<54x8x8xf32, #tpu.memory_space<vmem>>, vector<1x8x8xf32>
    %457 = vector.shape_cast %456 : vector<1x8x8xf32> to vector<8x8xf32>
    %cst_286 = arith.constant dense<0.000000e+00> : vector<8x256xf32>
    %458 = tpu.matmul %457, %455, %cst_286 {dimension_numbers = #tpu.dot_dimension_numbers<[1], [0], [0], [1], [0, 0, 1, 1], [], []>} : vector<8x8xf32>, vector<8x256xf32>, vector<8x256xf32> -> vector<8x256xf32>
    %459 = arith.addf %452, %458 : vector<8x256xf32>
    %c240_i32_287 = arith.constant 240 : i32
    %460 = tpu.dynamic_rotate %414 by %c240_i32_287 dim 1 : vector<8x256xf32>, i32 -> vector<8x256xf32>
    %cst_288 = arith.constant 0.000000e+00 : f32
    %461 = vector.broadcast %cst_288 : f32 to vector<8x256xf32>
    %462 = arith.select %79, %460, %461 : vector<8x256xi1>, vector<8x256xf32>
    %c52 = arith.constant 52 : index
    %c0_289 = arith.constant 0 : index
    %c0_290 = arith.constant 0 : index
    %463 = vector.load %arg2[%c52, %c0_289, %c0_290] : memref<54x8x8xf32, #tpu.memory_space<vmem>>, vector<1x8x8xf32>
    %464 = vector.shape_cast %463 : vector<1x8x8xf32> to vector<8x8xf32>
    %cst_291 = arith.constant dense<0.000000e+00> : vector<8x256xf32>
    %465 = tpu.matmul %464, %462, %cst_291 {dimension_numbers = #tpu.dot_dimension_numbers<[1], [0], [0], [1], [0, 0, 1, 1], [], []>} : vector<8x8xf32>, vector<8x256xf32>, vector<8x256xf32> -> vector<8x256xf32>
    %466 = arith.addf %459, %465 : vector<8x256xf32>
    %c239_i32_292 = arith.constant 239 : i32
    %467 = tpu.dynamic_rotate %414 by %c239_i32_292 dim 1 : vector<8x256xf32>, i32 -> vector<8x256xf32>
    %cst_293 = arith.constant 0.000000e+00 : f32
    %468 = vector.broadcast %cst_293 : f32 to vector<8x256xf32>
    %469 = arith.select %90, %467, %468 : vector<8x256xi1>, vector<8x256xf32>
    %c53 = arith.constant 53 : index
    %c0_294 = arith.constant 0 : index
    %c0_295 = arith.constant 0 : index
    %470 = vector.load %arg2[%c53, %c0_294, %c0_295] : memref<54x8x8xf32, #tpu.memory_space<vmem>>, vector<1x8x8xf32>
    %471 = vector.shape_cast %470 : vector<1x8x8xf32> to vector<8x8xf32>
    %cst_296 = arith.constant dense<0.000000e+00> : vector<8x256xf32>
    %472 = tpu.matmul %471, %469, %cst_296 {dimension_numbers = #tpu.dot_dimension_numbers<[1], [0], [0], [1], [0, 0, 1, 1], [], []>} : vector<8x8xf32>, vector<8x256xf32>, vector<8x256xf32> -> vector<8x256xf32>
    %473 = arith.addf %466, %472 : vector<8x256xf32>
    %c5_297 = arith.constant 5 : index
    %c0_298 = arith.constant 0 : index
    %c0_299 = arith.constant 0 : index
    %474 = vector.load %arg3[%c5_297, %c0_298, %c0_299] : memref<6x8x1xf32, #tpu.memory_space<vmem>>, vector<1x8x1xf32>
    %475 = vector.shape_cast %474 : vector<1x8x1xf32> to vector<8x1xf32>
    %476 = vector.broadcast %475 : vector<8x1xf32> to vector<8x256xf32>
    %477 = arith.addf %473, %476 : vector<8x256xf32>
    %478 = arith.addf %477, %349 : vector<8x256xf32>
    %c0_300 = arith.constant 0 : index
    %c0_301 = arith.constant 0 : index
    %479 = vector.load %arg4[%c0_300, %c0_301] : memref<8x256xf32, #tpu.memory_space<vmem>>, vector<8x256xf32>
    tpu.vector_store %arg4[%c0_300, %c0_301], %478 {strides = array<i32>} : memref<8x256xf32, #tpu.memory_space<vmem>>, vector<8x256xf32>,
    return
  }
  func.func @transform_0(%arg0: i32) -> (i32, i32) {
    %c0_i32 = arith.constant 0 : i32
    %c0_i32_0 = arith.constant 0 : i32
    %c0_i32_1 = arith.constant 0 : i32
    return %c0_i32, %c0_i32_0 : i32, i32
  }
  func.func @transform_1(%arg0: i32) -> (i32, i32, i32) {
    %c0_i32 = arith.constant 0 : i32
    %c0_i32_0 = arith.constant 0 : i32
    %c0_i32_1 = arith.constant 0 : i32
    %c0_i32_2 = arith.constant 0 : i32
    return %c0_i32, %c0_i32_0, %c0_i32_1 : i32, i32, i32
  }
  func.func @transform_2(%arg0: i32) -> (i32, i32, i32) {
    %c0_i32 = arith.constant 0 : i32
    %c0_i32_0 = arith.constant 0 : i32
    %c0_i32_1 = arith.constant 0 : i32
    %c0_i32_2 = arith.constant 0 : i32
    return %c0_i32, %c0_i32_0, %c0_i32_1 : i32, i32, i32
  }
  func.func @transform_3(%arg0: i32) -> (i32, i32) {
    %c0_i32 = arith.constant 0 : i32
    %c0_i32_0 = arith.constant 0 : i32
    %c0_i32_1 = arith.constant 0 : i32
    return %c0_i32, %c0_i32_0 : i32, i32
  }
}

</mosaic_0001>

<llo_original>
// kernel: basic_block_chain_pallas.1
$region0: #{basic_block_chain_pallas.1}
  #allocation0 [shape = 'u32[]', space=smem, size = 0x4, offset = 0x4, fixed_abs, tag = 'smem constant byte address 0x4 - core index']
  #allocation1 [shape = 'u32[144,128]{1,0:T(1,128)}', space=vmem, size = 0x12000, scoped, tag = 'internal scratch']
  %s0 = inlined_call_operand.vmem [shape: f32[8,256], index: 0, kind: input, shape index: {}]
  %s1 = inlined_call_operand.vmem [shape: f32[54,8,8], index: 1, kind: input, shape index: {}]
  %s2 = inlined_call_operand.vmem [shape: f32[6,8,1], index: 2, kind: input, shape index: {}]
  %s3 = inlined_call_operand.vmem [shape: f32[8,256], index: 3, kind: output, shape index: {}]
  %s4 = sld [smem:[#allocation0]]
  $region22: #{basic_block_chain_pallas.1} parent=0
    _
  %s6 = ssub.s32 1, %s4
  %s7 = scalar_select 0, %s6, %s4
  // Predicated region
  $region2: #{basic_block_chain_pallas.1} parent=0 // pred_check
    _
  $region3: #{basic_block_chain_pallas.1} parent=0 // pred_check_branch
    %9 = sbr.rel (0) target = $region5
  $region4: #{basic_block_chain_pallas.1} parent=0 // pred_region
    _
  $region5: #{basic_block_chain_pallas.1} parent=0 // pred_fallthru
    _
  // Predicated region
  $region6: #{basic_block_chain_pallas.1} parent=0 // pred_check
    _
  $region7: #{basic_block_chain_pallas.1} parent=0 // pred_check_branch
    %11 = sbr.rel (0) target = $region9
  $region8: #{basic_block_chain_pallas.1} parent=0 // pred_region
    _
  $region9: #{basic_block_chain_pallas.1} parent=0 // pred_fallthru
    _
  // Predicated region
  $region10: #{basic_block_chain_pallas.1} parent=0 // pred_check
    _
  $region11: #{basic_block_chain_pallas.1} parent=0 // pred_check_branch
    %13 = sbr.rel (0) target = $region13
  $region12: #{basic_block_chain_pallas.1} parent=0 // pred_region
    _
  $region13: #{basic_block_chain_pallas.1} parent=0 // pred_fallthru
    _
  %v14 = vlaneseq
  %v15 = vand.u32 %v14, 127
  %v16 = vadd.s32 %v15, 128
  %v17 = vand.u32 %v15, 15
  %v18 = vand.u32 %v16, 15
  %vm19 = vcmp.ge.s32.totalorder %v15, 16
  %vm20 = vcmp.ge.s32.totalorder %v16, 16
  %vm21 = vcmp.lt.s32.totalorder %v15, 272
  %vm22 = vcmp.lt.s32.totalorder %v16, 272
  %vm23 = vmand %vm19, %vm21
  %vm24 = vmand %vm20, %vm22
  %vm25 = vcmp.ge.s32.totalorder %v17, 1
  %vm26 = vcmp.ge.s32.totalorder %v18, 1
  %vm27 = vmand %vm23, %vm25
  %vm28 = vmand %vm24, %vm26
  %vm29 = vcmp.lt.s32.totalorder %v17, 17
  %vm30 = vcmp.lt.s32.totalorder %v18, 17
  %vm31 = vmand %vm27, %vm29
  %vm32 = vmand %vm28, %vm30
  %vm33 = vcmp.ge.s32.totalorder %v17, 0
  %vm34 = vcmp.ge.s32.totalorder %v18, 0
  %vm35 = vmand %vm23, %vm33
  %vm36 = vmand %vm24, %vm34
  %vm37 = vcmp.lt.s32.totalorder %v17, 16
  %vm38 = vcmp.lt.s32.totalorder %v18, 16
  %vm39 = vmand %vm35, %vm37
  %vm40 = vmand %vm36, %vm38
  %vm41 = vcmp.ge.s32.totalorder %v17, 4294967295
  %vm42 = vcmp.ge.s32.totalorder %v18, 4294967295
  %vm43 = vmand %vm23, %vm41
  %vm44 = vmand %vm24, %vm42
  %vm45 = vcmp.lt.s32.totalorder %v17, 15
  %vm46 = vcmp.lt.s32.totalorder %v18, 15
  %vm47 = vmand %vm43, %vm45
  %vm48 = vmand %vm44, %vm46
  %vm49 = vcmp.ge.s32.totalorder %v15, 0
  %vm50 = vcmp.ge.s32.totalorder %v16, 0
  %vm51 = vcmp.lt.s32.totalorder %v15, 256
  %vm52 = vcmp.lt.s32.totalorder %v16, 256
  %vm53 = vmand %vm49, %vm51
  %vm54 = vmand %vm50, %vm52
  %vm55 = vmand %vm53, %vm25
  %vm56 = vmand %vm54, %vm26
  %vm57 = vmand %vm55, %vm29
  %vm58 = vmand %vm56, %vm30
  %vm59 = vmand %vm53, %vm41
  %vm60 = vmand %vm54, %vm42
  %vm61 = vmand %vm59, %vm45
  %vm62 = vmand %vm60, %vm46
  %vm63 = vcmp.ge.s32.totalorder %v15, 4294967280
  %vm64 = vcmp.ge.s32.totalorder %v16, 4294967280
  %vm65 = vcmp.lt.s32.totalorder %v15, 240
  %vm66 = vcmp.lt.s32.totalorder %v16, 240
  %vm67 = vmand %vm63, %vm65
  %vm68 = vmand %vm64, %vm66
  %vm69 = vmand %vm67, %vm25
  %vm70 = vmand %vm68, %vm26
  %vm71 = vmand %vm69, %vm29
  %vm72 = vmand %vm70, %vm30
  %vm73 = vmand %vm67, %vm33
  %vm74 = vmand %vm68, %vm34
  %vm75 = vmand %vm73, %vm37
  %vm76 = vmand %vm74, %vm38
  %vm77 = vmand %vm67, %vm41
  %vm78 = vmand %vm68, %vm42
  %vm79 = vmand %vm77, %vm45
  %vm80 = vmand %vm78, %vm46
  %v81 = vld [vmem:[%s0] sm:$0xff]
  %v82 = vld [vmem:[%s0 + $0x8] sm:$0xff]
  %83 = vrot.lane.b32.xlu0 %v81, 17
  %v84 = vpop.permute.xlu0 %83
  %85 = vrot.lane.b32.xlu0 %v82, 17
  %v86 = vpop.permute.xlu0 %85
  %vm87 = vcmp.lt.s32.totalorder %v15, 17
  %v88 = vsel %vm87, %v84, %v86
  %v89 = vsel %vm87, %v86, %v84
  %v90 = vsel %vm31, %v89, 0.0
  %v91 = vsel %vm32, %v88, 0.0
  %v92 = vld [vmem:[%s1] sm:$0xff]
  %93 = vrot.lane.b32.xlu0 %v81, 16
  %v94 = vpop.permute.xlu0 %93
  %95 = vrot.lane.b32.xlu0 %v82, 16
  %v96 = vpop.permute.xlu0 %95
  %vm97 = vcmp.lt.s32.totalorder %v15, 16
  %v98 = vsel %vm97, %v94, %v96
  %v99 = vsel %vm97, %v96, %v94
  %v100 = vsel %vm39, %v99, 0.0
  %v101 = vsel %vm40, %v98, 0.0
  %s102 = scalar_lea.vmem %s1, 8
  %v103 = vld [vmem:[%s102] sm:$0xff]
  %vm104 = vcmask 64512
  %v106 = vsel %vm104, %v103, 0
  %108 = vmatprep.subr.mxu0 0.0
  %109 = vmatpush1.msra.mxu0 0.0
  %110 = vmatprep.subr.mxu0 0.0
  %111 = vmatpush1.msra.mxu0 0.0
  %112 = vmatprep.subr.mxu0 0.0
  %113 = vmatpush1.msra.mxu0 0.0
  %114 = vmatprep.subr.mxu0 0.0
  %115 = vmatpush1.msra.mxu0 0.0
  %116 = vmatprep.subr.mxu0 0.0
  %117 = vmatpush1.msra.mxu0 0.0
  %118 = vmatprep.subr.mxu0 0.0
  %119 = vmatpush1.msra.mxu0 0.0
  %120 = vmatprep.subr.mxu0 0.0
  %121 = vmatpush1.msra.mxu0 0.0
  %122 = vmatprep.subr.mxu0 0.0
  %123 = vmatpush1.msra.mxu0 0.0
  %124 = vmatprep.subr.mxu0 0.0
  %125 = vmatpush1.msra.mxu0 0.0
  %126 = vmatprep.subr.mxu0 0.0
  %127 = vmatpush1.msra.mxu0 0.0
  %128 = vmatprep.subr.mxu0 0.0
  %129 = vmatpush1.msra.mxu0 0.0
  %130 = vmatprep.subr.mxu0 0.0
  %131 = vmatpush1.msra.mxu0 0.0
  %132 = vmatprep.subr.mxu0 0.0
  %133 = vmatpush1.msra.mxu0 0.0
  %134 = vmatprep.subr.mxu0 0.0
  %135 = vmatpush1.msra.mxu0 0.0
  %136 = vmatprep.subr.mxu0 0.0
  %137 = vmatpush1.msra.mxu0 0.0
  %138 = vmatprep.subr.mxu0 %v101
  %139 = vmatpush1.msra.mxu0 %v100
  %140 = vmatprep.subr.mxu0 0.0
  %141 = vmatpush2.msra.mxu0 0.0
  %142 = vmatprep.subr.mxu0 0.0
  %143 = vmatpush2.msra.mxu0 0.0
  %144 = vmatprep.subr.mxu0 0.0
  %145 = vmatpush2.msra.mxu0 0.0
  %146 = vmatprep.subr.mxu0 0.0
  %147 = vmatpush2.msra.mxu0 0.0
  %148 = vmatprep.subr.mxu0 0.0
  %149 = vmatpush2.msra.mxu0 0.0
  %150 = vmatprep.subr.mxu0 0.0
  %151 = vmatpush2.msra.mxu0 0.0
  %152 = vmatprep.subr.mxu0 0.0
  %153 = vmatpush2.msra.mxu0 0.0
  %154 = vmatprep.subr.mxu0 0.0
  %155 = vmatpush2.msra.mxu0 0.0
  %156 = vmatprep.subr.mxu0 0.0
  %157 = vmatpush2.msra.mxu0 0.0
  %158 = vmatprep.subr.mxu0 0.0
  %159 = vmatpush2.msra.mxu0 0.0
  %160 = vmatprep.subr.mxu0 0.0
  %161 = vmatpush2.msra.mxu0 0.0
  %162 = vmatprep.subr.mxu0 0.0
  %163 = vmatpush2.msra.mxu0 0.0
  %164 = vmatprep.subr.mxu0 0.0
  %165 = vmatpush2.msra.mxu0 0.0
  %166 = vmatprep.subr.mxu0 0.0
  %167 = vmatpush2.msra.mxu0 0.0
  %168 = vmatprep.subr.mxu0 0.0
  %169 = vmatpush2.msra.mxu0 0.0
  %170 = vmatprep.subr.mxu0 0.0
  %171 = vmatpush2.msra.mxu0 0.0
  %172 = vmatprep.mubr.f32.mxu0 0.0
  %173 = vmatmul.mubr.f32.gmra.mxu0 %v106
  %v174 = vpop.f32.mrf.mxu0
  %v175 = vadd.f32 0.0, %v174
  %v176 = vpop.f32.mrf.mxu0
  %v177 = vadd.f32 0.0, %v176
  %178 = vdwg.mxu0
  %v180 = vsel %vm104, %v92, 0
  %182 = vmatprep.subr.mxu0 0.0
  %183 = vmatpush1.msra.mxu0 0.0
  %184 = vmatprep.subr.mxu0 0.0
  %185 = vmatpush1.msra.mxu0 0.0
  %186 = vmatprep.subr.mxu0 0.0
  %187 = vmatpush1.msra.mxu0 0.0
  %188 = vmatprep.subr.mxu0 0.0
  %189 = vmatpush1.msra.mxu0 0.0
  %190 = vmatprep.subr.mxu0 0.0
  %191 = vmatpush1.msra.mxu0 0.0
  %192 = vmatprep.subr.mxu0 0.0
  %193 = vmatpush1.msra.mxu0 0.0
  %194 = vmatprep.subr.mxu0 0.0
  %195 = vmatpush1.msra.mxu0 0.0
  %196 = vmatprep.subr.mxu0 0.0
  %197 = vmatpush1.msra.mxu0 0.0
  %198 = vmatprep.subr.mxu0 0.0
  %199 = vmatpush1.msra.mxu0 0.0
  %200 = vmatprep.subr.mxu0 0.0
  %201 = vmatpush1.msra.mxu0 0.0
  %202 = vmatprep.subr.mxu0 0.0
  %203 = vmatpush1.msra.mxu0 0.0
  %204 = vmatprep.subr.mxu0 0.0
  %205 = vmatpush1.msra.mxu0 0.0
  %206 = vmatprep.subr.mxu0 0.0
  %207 = vmatpush1.msra.mxu0 0.0
  %208 = vmatprep.subr.mxu0 0.0
  %209 = vmatpush1.msra.mxu0 0.0
  %210 = vmatprep.subr.mxu0 0.0
  %211 = vmatpush1.msra.mxu0 0.0
  %212 = vmatprep.subr.mxu0 %v91
  %213 = vmatpush1.msra.mxu0 %v90
  %214 = vmatprep.subr.mxu0 0.0
  %215 = vmatpush2.msra.mxu0 0.0
  %216 = vmatprep.subr.mxu0 0.0
  %217 = vmatpush2.msra.mxu0 0.0
  %218 = vmatprep.subr.mxu0 0.0
  %219 = vmatpush2.msra.mxu0 0.0
  %220 = vmatprep.subr.mxu0 0.0
  %221 = vmatpush2.msra.mxu0 0.0
  %222 = vmatprep.subr.mxu0 0.0
  %223 = vmatpush2.msra.mxu0 0.0
  %224 = vmatprep.subr.mxu0 0.0
  %225 = vmatpush2.msra.mxu0 0.0
  %226 = vmatprep.subr.mxu0 0.0
  %227 = vmatpush2.msra.mxu0 0.0
  %228 = vmatprep.subr.mxu0 0.0
  %229 = vmatpush2.msra.mxu0 0.0
  %230 = vmatprep.subr.mxu0 0.0
  %231 = vmatpush2.msra.mxu0 0.0
  %232 = vmatprep.subr.mxu0 0.0
  %233 = vmatpush2.msra.mxu0 0.0
  %234 = vmatprep.subr.mxu0 0.0
  %235 = vmatpush2.msra.mxu0 0.0
  %236 = vmatprep.subr.mxu0 0.0
  %237 = vmatpush2.msra.mxu0 0.0
  %238 = vmatprep.subr.mxu0 0.0
  %239 = vmatpush2.msra.mxu0 0.0
  %240 = vmatprep.subr.mxu0 0.0
  %241 = vmatpush2.msra.mxu0 0.0
  %242 = vmatprep.subr.mxu0 0.0
  %243 = vmatpush2.msra.mxu0 0.0
  %244 = vmatprep.subr.mxu0 0.0
  %245 = vmatpush2.msra.mxu0 0.0
  %246 = vmatprep.mubr.f32.mxu0 0.0
  %247 = vmatmul.mubr.f32.gmra.mxu0 %v180
  %v248 = vpop.f32.mrf.mxu0
  %v249 = vadd.f32 %v175, %v248
  %v250 = vpop.f32.mrf.mxu0
  %v251 = vadd.f32 %v177, %v250
  %252 = vdwg.mxu0
  %253 = vrot.lane.b32.xlu0 %v81, 15
  %v254 = vpop.permute.xlu0 %253
  %255 = vrot.lane.b32.xlu0 %v82, 15
  %v256 = vpop.permute.xlu0 %255
  %vm257 = vcmp.lt.s32.totalorder %v15, 15
  %v258 = vsel %vm257, %v254, %v256
  %v259 = vsel %vm257, %v256, %v254
  %v260 = vsel %vm47, %v259, 0.0
  %v261 = vsel %vm48, %v258, 0.0
  %s262 = scalar_lea.vmem %s1, 16
  %v263 = vld [vmem:[%s262] sm:$0xff]
  %v265 = vsel %vm104, %v263, 0
  %267 = vmatprep.subr.mxu0 0.0
  %268 = vmatpush1.msra.mxu0 0.0
  %269 = vmatprep.subr.mxu0 0.0
  %270 = vmatpush1.msra.mxu0 0.0
  %271 = vmatprep.subr.mxu0 0.0
  %272 = vmatpush1.msra.mxu0 0.0
  %273 = vmatprep.subr.mxu0 0.0
  %274 = vmatpush1.msra.mxu0 0.0
  %275 = vmatprep.subr.mxu0 0.0
  %276 = vmatpush1.msra.mxu0 0.0
  %277 = vmatprep.subr.mxu0 0.0
  %278 = vmatpush1.msra.mxu0 0.0
  %279 = vmatprep.subr.mxu0 0.0
  %280 = vmatpush1.msra.mxu0 0.0
  %281 = vmatprep.subr.mxu0 0.0
  %282 = vmatpush1.msra.mxu0 0.0
  %283 = vmatprep.subr.mxu0 0.0
  %284 = vmatpush1.msra.mxu0 0.0
  %285 = vmatprep.subr.mxu0 0.0
  %286 = vmatpush1.msra.mxu0 0.0
  %287 = vmatprep.subr.mxu0 0.0
  %288 = vmatpush1.msra.mxu0 0.0
  %289 = vmatprep.subr.mxu0 0.0
  %290 = vmatpush1.msra.mxu0 0.0
  %291 = vmatprep.subr.mxu0 0.0
  %292 = vmatpush1.msra.mxu0 0.0
  %293 = vmatprep.subr.mxu0 0.0
  %294 = vmatpush1.msra.mxu0 0.0
  %295 = vmatprep.subr.mxu0 0.0
  %296 = vmatpush1.msra.mxu0 0.0
  %297 = vmatprep.subr.mxu0 %v261
  %298 = vmatpush1.msra.mxu0 %v260
  %299 = vmatprep.subr.mxu0 0.0
  %300 = vmatpush2.msra.mxu0 0.0
  %301 = vmatprep.subr.mxu0 0.0
  %302 = vmatpush2.msra.mxu0 0.0
  %303 = vmatprep.subr.mxu0 0.0
  %304 = vmatpush2.msra.mxu0 0.0
  %305 = vmatprep.subr.mxu0 0.0
  %306 = vmatpush2.msra.mxu0 0.0
  %307 = vmatprep.subr.mxu0 0.0
  %308 = vmatpush2.msra.mxu0 0.0
  %309 = vmatprep.subr.mxu0 0.0
  %310 = vmatpush2.msra.mxu0 0.0
  %311 = vmatprep.subr.mxu0 0.0
  %312 = vmatpush2.msra.mxu0 0.0
  %313 = vmatprep.subr.mxu0 0.0
  %314 = vmatpush2.msra.mxu0 0.0
  %315 = vmatprep.subr.mxu0 0.0
  %316 = vmatpush2.msra.mxu0 0.0
  %317 = vmatprep.subr.mxu0 0.0
  %318 = vmatpush2.msra.mxu0 0.0
  %319 = vmatprep.subr.mxu0 0.0
  %320 = vmatpush2.msra.mxu0 0.0
  %321 = vmatprep.subr.mxu0 0.0
  %322 = vmatpush2.msra.mxu0 0.0
  %323 = vmatprep.subr.mxu0 0.0
  %324 = vmatpush2.msra.mxu0 0.0
  %325 = vmatprep.subr.mxu0 0.0
  %326 = vmatpush2.msra.mxu0 0.0
  %327 = vmatprep.subr.mxu0 0.0
  %328 = vmatpush2.msra.mxu0 0.0
  %329 = vmatprep.subr.mxu0 0.0
  %330 = vmatpush2.msra.mxu0 0.0
  %331 = vmatprep.mubr.f32.mxu0 0.0
  %332 = vmatmul.mubr.f32.gmra.mxu0 %v265
  %v333 = vpop.f32.mrf.mxu0
  %v334 = vadd.f32 0.0, %v333
  %v335 = vpop.f32.mrf.mxu0
  %v336 = vadd.f32 0.0, %v335
  %337 = vdwg.mxu0
  %v338 = vadd.f32 %v249, %v334
  %v339 = vadd.f32 %v251, %v336
  %340 = vrot.lane.b32.xlu0 %v81, 1
  %v341 = vpop.permute.xlu0 %340
  %342 = vrot.lane.b32.xlu0 %v82, 1
  %v343 = vpop.permute.xlu0 %342
  %vm344 = vcmp.lt.s32.totalorder %v15, 1
  %v345 = vsel %vm344, %v341, %v343
  %v346 = vsel %vm344, %v343, %v341
  %v347 = vsel %vm57, %v346, 0.0
  %v348 = vsel %vm58, %v345, 0.0
  %s349 = scalar_lea.vmem %s1, 24
  %v350 = vld [vmem:[%s349] sm:$0xff]
  %v352 = vsel %vm104, %v350, 0
  %354 = vmatprep.subr.mxu0 0.0
  %355 = vmatpush1.msra.mxu0 0.0
  %356 = vmatprep.subr.mxu0 0.0
  %357 = vmatpush1.msra.mxu0 0.0
  %358 = vmatprep.subr.mxu0 0.0
  %359 = vmatpush1.msra.mxu0 0.0
  %360 = vmatprep.subr.mxu0 0.0
  %361 = vmatpush1.msra.mxu0 0.0
  %362 = vmatprep.subr.mxu0 0.0
  %363 = vmatpush1.msra.mxu0 0.0
  %364 = vmatprep.subr.mxu0 0.0
  %365 = vmatpush1.msra.mxu0 0.0
  %366 = vmatprep.subr.mxu0 0.0
  %367 = vmatpush1.msra.mxu0 0.0
  %368 = vmatprep.subr.mxu0 0.0
  %369 = vmatpush1.msra.mxu0 0.0
  %370 = vmatprep.subr.mxu0 0.0
  %371 = vmatpush1.msra.mxu0 0.0
  %372 = vmatprep.subr.mxu0 0.0
  %373 = vmatpush1.msra.mxu0 0.0
  %374 = vmatprep.subr.mxu0 0.0
  %375 = vmatpush1.msra.mxu0 0.0
  %376 = vmatprep.subr.mxu0 0.0
  %377 = vmatpush1.msra.mxu0 0.0
  %378 = vmatprep.subr.mxu0 0.0
  %379 = vmatpush1.msra.mxu0 0.0
  %380 = vmatprep.subr.mxu0 0.0
  %381 = vmatpush1.msra.mxu0 0.0
  %382 = vmatprep.subr.mxu0 0.0
  %383 = vmatpush1.msra.mxu0 0.0
  %384 = vmatprep.subr.mxu0 %v348
  %385 = vmatpush1.msra.mxu0 %v347
  %386 = vmatprep.subr.mxu0 0.0
  %387 = vmatpush2.msra.mxu0 0.0
  %388 = vmatprep.subr.mxu0 0.0
  %389 = vmatpush2.msra.mxu0 0.0
  %390 = vmatprep.subr.mxu0 0.0
  %391 = vmatpush2.msra.mxu0 0.0
  %392 = vmatprep.subr.mxu0 0.0
  %393 = vmatpush2.msra.mxu0 0.0
  %394 = vmatprep.subr.mxu0 0.0
  %395 = vmatpush2.msra.mxu0 0.0
  %396 = vmatprep.subr.mxu0 0.0
  %397 = vmatpush2.msra.mxu0 0.0
  %398 = vmatprep.subr.mxu0 0.0
  %399 = vmatpush2.msra.mxu0 0.0
  %400 = vmatprep.subr.mxu0 0.0
  %401 = vmatpush2.msra.mxu0 0.0
  %402 = vmatprep.subr.mxu0 0.0
  %403 = vmatpush2.msra.mxu0 0.0
  %404 = vmatprep.subr.mxu0 0.0
  %405 = vmatpush2.msra.mxu0 0.0
  %406 = vmatprep.subr.mxu0 0.0
  %407 = vmatpush2.msra.mxu0 0.0
  %408 = vmatprep.subr.mxu0 0.0
  %409 = vmatpush2.msra.mxu0 0.0
  %410 = vmatprep.subr.mxu0 0.0
  %411 = vmatpush2.msra.mxu0 0.0
  %412 = vmatprep.subr.mxu0 0.0
  %413 = vmatpush2.msra.mxu0 0.0
  %414 = vmatprep.subr.mxu0 0.0
  %415 = vmatpush2.msra.mxu0 0.0
  %416 = vmatprep.subr.mxu0 0.0
  %417 = vmatpush2.msra.mxu0 0.0
  %418 = vmatprep.mubr.f32.mxu0 0.0
  %419 = vmatmul.mubr.f32.gmra.mxu0 %v352
  %v420 = vpop.f32.mrf.mxu0
  %v421 = vadd.f32 0.0, %v420
  %v422 = vpop.f32.mrf.mxu0
  %v423 = vadd.f32 0.0, %v422
  %424 = vdwg.mxu0
  %v425 = vadd.f32 %v338, %v421
  %v426 = vadd.f32 %v339, %v423
  %s427 = scalar_lea.vmem %s1, 32
  %v428 = vld [vmem:[%s427] sm:$0xff]
  %v430 = vsel %vm104, %v428, 0
  %432 = vmatprep.subr.mxu0 0.0
  %433 = vmatpush1.msra.mxu0 0.0
  %434 = vmatprep.subr.mxu0 0.0
  %435 = vmatpush1.msra.mxu0 0.0
  %436 = vmatprep.subr.mxu0 0.0
  %437 = vmatpush1.msra.mxu0 0.0
  %438 = vmatprep.subr.mxu0 0.0
  %439 = vmatpush1.msra.mxu0 0.0
  %440 = vmatprep.subr.mxu0 0.0
  %441 = vmatpush1.msra.mxu0 0.0
  %442 = vmatprep.subr.mxu0 0.0
  %443 = vmatpush1.msra.mxu0 0.0
  %444 = vmatprep.subr.mxu0 0.0
  %445 = vmatpush1.msra.mxu0 0.0
  %446 = vmatprep.subr.mxu0 0.0
  %447 = vmatpush1.msra.mxu0 0.0
  %448 = vmatprep.subr.mxu0 0.0
  %449 = vmatpush1.msra.mxu0 0.0
  %450 = vmatprep.subr.mxu0 0.0
  %451 = vmatpush1.msra.mxu0 0.0
  %452 = vmatprep.subr.mxu0 0.0
  %453 = vmatpush1.msra.mxu0 0.0
  %454 = vmatprep.subr.mxu0 0.0
  %455 = vmatpush1.msra.mxu0 0.0
  %456 = vmatprep.subr.mxu0 0.0
  %457 = vmatpush1.msra.mxu0 0.0
  %458 = vmatprep.subr.mxu0 0.0
  %459 = vmatpush1.msra.mxu0 0.0
  %460 = vmatprep.subr.mxu0 0.0
  %461 = vmatpush1.msra.mxu0 0.0
  %462 = vmatprep.subr.mxu0 %v82
  %463 = vmatpush1.msra.mxu0 %v81
  %464 = vmatprep.subr.mxu0 0.0
  %465 = vmatpush2.msra.mxu0 0.0
  %466 = vmatprep.subr.mxu0 0.0
  %467 = vmatpush2.msra.mxu0 0.0
  %468 = vmatprep.subr.mxu0 0.0
  %469 = vmatpush2.msra.mxu0 0.0
  %470 = vmatprep.subr.mxu0 0.0
  %471 = vmatpush2.msra.mxu0 0.0
  %472 = vmatprep.subr.mxu0 0.0
  %473 = vmatpush2.msra.mxu0 0.0
  %474 = vmatprep.subr.mxu0 0.0
  %475 = vmatpush2.msra.mxu0 0.0
  %476 = vmatprep.subr.mxu0 0.0
  %477 = vmatpush2.msra.mxu0 0.0
  %478 = vmatprep.subr.mxu0 0.0
  %479 = vmatpush2.msra.mxu0 0.0
  %480 = vmatprep.subr.mxu0 0.0
  %481 = vmatpush2.msra.mxu0 0.0
  %482 = vmatprep.subr.mxu0 0.0
  %483 = vmatpush2.msra.mxu0 0.0
  %484 = vmatprep.subr.mxu0 0.0
  %485 = vmatpush2.msra.mxu0 0.0
  %486 = vmatprep.subr.mxu0 0.0
  %487 = vmatpush2.msra.mxu0 0.0
  %488 = vmatprep.subr.mxu0 0.0
  %489 = vmatpush2.msra.mxu0 0.0
  %490 = vmatprep.subr.mxu0 0.0
  %491 = vmatpush2.msra.mxu0 0.0
  %492 = vmatprep.subr.mxu0 0.0
  %493 = vmatpush2.msra.mxu0 0.0
  %494 = vmatprep.subr.mxu0 0.0
  %495 = vmatpush2.msra.mxu0 0.0
  %496 = vmatprep.mubr.f32.mxu0 0.0
  %497 = vmatmul.mubr.f32.gmra.mxu0 %v430
  %v498 = vpop.f32.mrf.mxu0
  %v499 = vadd.f32 0.0, %v498
  %v500 = vpop.f32.mrf.mxu0
  %v501 = vadd.f32 0.0, %v500
  %502 = vdwg.mxu0
  %v503 = vadd.f32 %v425, %v499
  %v504 = vadd.f32 %v426, %v501
  %505 = vrot.lane.b32.xlu0 %v81, 127
  %v506 = vpop.permute.xlu0 %505
  %507 = vrot.lane.b32.xlu0 %v82, 127
  %v508 = vpop.permute.xlu0 %507
  %vm509 = vcmp.lt.s32.totalorder %v15, 127
  %v510 = vsel %vm509, %v506, %v508
  %v511 = vsel %vm509, %v508, %v506
  %v512 = vsel %vm61, %v510, 0.0
  %v513 = vsel %vm62, %v511, 0.0
  %s514 = scalar_lea.vmem %s1, 40
  %v515 = vld [vmem:[%s514] sm:$0xff]
  %v517 = vsel %vm104, %v515, 0
  %519 = vmatprep.subr.mxu0 0.0
  %520 = vmatpush1.msra.mxu0 0.0
  %521 = vmatprep.subr.mxu0 0.0
  %522 = vmatpush1.msra.mxu0 0.0
  %523 = vmatprep.subr.mxu0 0.0
  %524 = vmatpush1.msra.mxu0 0.0
  %525 = vmatprep.subr.mxu0 0.0
  %526 = vmatpush1.msra.mxu0 0.0
  %527 = vmatprep.subr.mxu0 0.0
  %528 = vmatpush1.msra.mxu0 0.0
  %529 = vmatprep.subr.mxu0 0.0
  %530 = vmatpush1.msra.mxu0 0.0
  %531 = vmatprep.subr.mxu0 0.0
  %532 = vmatpush1.msra.mxu0 0.0
  %533 = vmatprep.subr.mxu0 0.0
  %534 = vmatpush1.msra.mxu0 0.0
  %535 = vmatprep.subr.mxu0 0.0
  %536 = vmatpush1.msra.mxu0 0.0
  %537 = vmatprep.subr.mxu0 0.0
  %538 = vmatpush1.msra.mxu0 0.0
  %539 = vmatprep.subr.mxu0 0.0
  %540 = vmatpush1.msra.mxu0 0.0
  %541 = vmatprep.subr.mxu0 0.0
  %542 = vmatpush1.msra.mxu0 0.0
  %543 = vmatprep.subr.mxu0 0.0
  %544 = vmatpush1.msra.mxu0 0.0
  %545 = vmatprep.subr.mxu0 0.0
  %546 = vmatpush1.msra.mxu0 0.0
  %547 = vmatprep.subr.mxu0 0.0
  %548 = vmatpush1.msra.mxu0 0.0
  %549 = vmatprep.subr.mxu0 %v513
  %550 = vmatpush1.msra.mxu0 %v512
  %551 = vmatprep.subr.mxu0 0.0
  %552 = vmatpush2.msra.mxu0 0.0
  %553 = vmatprep.subr.mxu0 0.0
  %554 = vmatpush2.msra.mxu0 0.0
  %555 = vmatprep.subr.mxu0 0.0
  %556 = vmatpush2.msra.mxu0 0.0
  %557 = vmatprep.subr.mxu0 0.0
  %558 = vmatpush2.msra.mxu0 0.0
  %559 = vmatprep.subr.mxu0 0.0
  %560 = vmatpush2.msra.mxu0 0.0
  %561 = vmatprep.subr.mxu0 0.0
  %562 = vmatpush2.msra.mxu0 0.0
  %563 = vmatprep.subr.mxu0 0.0
  %564 = vmatpush2.msra.mxu0 0.0
  %565 = vmatprep.subr.mxu0 0.0
  %566 = vmatpush2.msra.mxu0 0.0
  %567 = vmatprep.subr.mxu0 0.0
  %568 = vmatpush2.msra.mxu0 0.0
  %569 = vmatprep.subr.mxu0 0.0
  %570 = vmatpush2.msra.mxu0 0.0
  %571 = vmatprep.subr.mxu0 0.0
  %572 = vmatpush2.msra.mxu0 0.0
  %573 = vmatprep.subr.mxu0 0.0
  %574 = vmatpush2.msra.mxu0 0.0
  %575 = vmatprep.subr.mxu0 0.0
  %576 = vmatpush2.msra.mxu0 0.0
  %577 = vmatprep.subr.mxu0 0.0
  %578 = vmatpush2.msra.mxu0 0.0
  %579 = vmatprep.subr.mxu0 0.0
  %580 = vmatpush2.msra.mxu0 0.0
  %581 = vmatprep.subr.mxu0 0.0
  %582 = vmatpush2.msra.mxu0 0.0
  %583 = vmatprep.mubr.f32.mxu0 0.0
  %584 = vmatmul.mubr.f32.gmra.mxu0 %v517
  %v585 = vpop.f32.mrf.mxu0
  %v586 = vadd.f32 0.0, %v585
  %v587 = vpop.f32.mrf.mxu0
  %v588 = vadd.f32 0.0, %v587
  %589 = vdwg.mxu0
  %v590 = vadd.f32 %v503, %v586
  %v591 = vadd.f32 %v504, %v588
  %592 = vrot.lane.b32.xlu0 %v81, 113
  %v593 = vpop.permute.xlu0 %592
  %594 = vrot.lane.b32.xlu0 %v82, 113
  %v595 = vpop.permute.xlu0 %594
  %vm596 = vcmp.lt.s32.totalorder %v15, 113
  %v597 = vsel %vm596, %v593, %v595
  %v598 = vsel %vm596, %v595, %v593
  %v599 = vsel %vm71, %v597, 0.0
  %v600 = vsel %vm72, %v598, 0.0
  %s601 = scalar_lea.vmem %s1, 48
  %v602 = vld [vmem:[%s601] sm:$0xff]
  %v604 = vsel %vm104, %v602, 0
  %606 = vmatprep.subr.mxu0 0.0
  %607 = vmatpush1.msra.mxu0 0.0
  %608 = vmatprep.subr.mxu0 0.0
  %609 = vmatpush1.msra.mxu0 0.0
  %610 = vmatprep.subr.mxu0 0.0
  %611 = vmatpush1.msra.mxu0 0.0
  %612 = vmatprep.subr.mxu0 0.0
  %613 = vmatpush1.msra.mxu0 0.0
  %614 = vmatprep.subr.mxu0 0.0
  %615 = vmatpush1.msra.mxu0 0.0
  %616 = vmatprep.subr.mxu0 0.0
  %617 = vmatpush1.msra.mxu0 0.0
  %618 = vmatprep.subr.mxu0 0.0
  %619 = vmatpush1.msra.mxu0 0.0
  %620 = vmatprep.subr.mxu0 0.0
  %621 = vmatpush1.msra.mxu0 0.0
  %622 = vmatprep.subr.mxu0 0.0
  %623 = vmatpush1.msra.mxu0 0.0
  %624 = vmatprep.subr.mxu0 0.0
  %625 = vmatpush1.msra.mxu0 0.0
  %626 = vmatprep.subr.mxu0 0.0
  %627 = vmatpush1.msra.mxu0 0.0
  %628 = vmatprep.subr.mxu0 0.0
  %629 = vmatpush1.msra.mxu0 0.0
  %630 = vmatprep.subr.mxu0 0.0
  %631 = vmatpush1.msra.mxu0 0.0
  %632 = vmatprep.subr.mxu0 0.0
  %633 = vmatpush1.msra.mxu0 0.0
  %634 = vmatprep.subr.mxu0 0.0
  %635 = vmatpush1.msra.mxu0 0.0
  %636 = vmatprep.subr.mxu0 %v600
  %637 = vmatpush1.msra.mxu0 %v599
  %638 = vmatprep.subr.mxu0 0.0
  %639 = vmatpush2.msra.mxu0 0.0
  %640 = vmatprep.subr.mxu0 0.0
  %641 = vmatpush2.msra.mxu0 0.0
  %642 = vmatprep.subr.mxu0 0.0
  %643 = vmatpush2.msra.mxu0 0.0
  %644 = vmatprep.subr.mxu0 0.0
  %645 = vmatpush2.msra.mxu0 0.0
  %646 = vmatprep.subr.mxu0 0.0
  %647 = vmatpush2.msra.mxu0 0.0
  %648 = vmatprep.subr.mxu0 0.0
  %649 = vmatpush2.msra.mxu0 0.0
  %650 = vmatprep.subr.mxu0 0.0
  %651 = vmatpush2.msra.mxu0 0.0
  %652 = vmatprep.subr.mxu0 0.0
  %653 = vmatpush2.msra.mxu0 0.0
  %654 = vmatprep.subr.mxu0 0.0
  %655 = vmatpush2.msra.mxu0 0.0
  %656 = vmatprep.subr.mxu0 0.0
  %657 = vmatpush2.msra.mxu0 0.0
  %658 = vmatprep.subr.mxu0 0.0
  %659 = vmatpush2.msra.mxu0 0.0
  %660 = vmatprep.subr.mxu0 0.0
  %661 = vmatpush2.msra.mxu0 0.0
  %662 = vmatprep.subr.mxu0 0.0
  %663 = vmatpush2.msra.mxu0 0.0
  %664 = vmatprep.subr.mxu0 0.0
  %665 = vmatpush2.msra.mxu0 0.0
  %666 = vmatprep.subr.mxu0 0.0
  %667 = vmatpush2.msra.mxu0 0.0
  %668 = vmatprep.subr.mxu0 0.0
  %669 = vmatpush2.msra.mxu0 0.0
  %670 = vmatprep.mubr.f32.mxu0 0.0
  %671 = vmatmul.mubr.f32.gmra.mxu0 %v604
  %v672 = vpop.f32.mrf.mxu0
  %v673 = vadd.f32 0.0, %v672
  %v674 = vpop.f32.mrf.mxu0
  %v675 = vadd.f32 0.0, %v674
  %676 = vdwg.mxu0
  %v677 = vadd.f32 %v590, %v673
  %v678 = vadd.f32 %v591, %v675
  %679 = vrot.lane.b32.xlu0 %v81, 112
  %v680 = vpop.permute.xlu0 %679
  %681 = vrot.lane.b32.xlu0 %v82, 112
  %v682 = vpop.permute.xlu0 %681
  %vm683 = vcmp.lt.s32.totalorder %v15, 112
  %v684 = vsel %vm683, %v680, %v682
  %v685 = vsel %vm683, %v682, %v680
  %v686 = vsel %vm75, %v684, 0.0
  %v687 = vsel %vm76, %v685, 0.0
  %s688 = scalar_lea.vmem %s1, 56
  %v689 = vld [vmem:[%s688] sm:$0xff]
  %v691 = vsel %vm104, %v689, 0
  %693 = vmatprep.subr.mxu0 0.0
  %694 = vmatpush1.msra.mxu0 0.0
  %695 = vmatprep.subr.mxu0 0.0
  %696 = vmatpush1.msra.mxu0 0.0
  %697 = vmatprep.subr.mxu0 0.0
  %698 = vmatpush1.msra.mxu0 0.0
  %699 = vmatprep.subr.mxu0 0.0
  %700 = vmatpush1.msra.mxu0 0.0
  %701 = vmatprep.subr.mxu0 0.0
  %702 = vmatpush1.msra.mxu0 0.0
  %703 = vmatprep.subr.mxu0 0.0
  %704 = vmatpush1.msra.mxu0 0.0
  %705 = vmatprep.subr.mxu0 0.0
  %706 = vmatpush1.msra.mxu0 0.0
  %707 = vmatprep.subr.mxu0 0.0
  %708 = vmatpush1.msra.mxu0 0.0
  %709 = vmatprep.subr.mxu0 0.0
  %710 = vmatpush1.msra.mxu0 0.0
  %711 = vmatprep.subr.mxu0 0.0
  %712 = vmatpush1.msra.mxu0 0.0
  %713 = vmatprep.subr.mxu0 0.0
  %714 = vmatpush1.msra.mxu0 0.0
  %715 = vmatprep.subr.mxu0 0.0
  %716 = vmatpush1.msra.mxu0 0.0
  %717 = vmatprep.subr.mxu0 0.0
  %718 = vmatpush1.msra.mxu0 0.0
  %719 = vmatprep.subr.mxu0 0.0
  %720 = vmatpush1.msra.mxu0 0.0
  %721 = vmatprep.subr.mxu0 0.0
  %722 = vmatpush1.msra.mxu0 0.0
  %723 = vmatprep.subr.mxu0 %v687
  %724 = vmatpush1.msra.mxu0 %v686
  %725 = vmatprep.subr.mxu0 0.0
  %726 = vmatpush2.msra.mxu0 0.0
  %727 = vmatprep.subr.mxu0 0.0
  %728 = vmatpush2.msra.mxu0 0.0
  %729 = vmatprep.subr.mxu0 0.0
  %730 = vmatpush2.msra.mxu0 0.0
  %731 = vmatprep.subr.mxu0 0.0
  %732 = vmatpush2.msra.mxu0 0.0
  %733 = vmatprep.subr.mxu0 0.0
  %734 = vmatpush2.msra.mxu0 0.0
  %735 = vmatprep.subr.mxu0 0.0
  %736 = vmatpush2.msra.mxu0 0.0
  %737 = vmatprep.subr.mxu0 0.0
  %738 = vmatpush2.msra.mxu0 0.0
  %739 = vmatprep.subr.mxu0 0.0
  %740 = vmatpush2.msra.mxu0 0.0
  %741 = vmatprep.subr.mxu0 0.0
  %742 = vmatpush2.msra.mxu0 0.0
  %743 = vmatprep.subr.mxu0 0.0
  %744 = vmatpush2.msra.mxu0 0.0
  %745 = vmatprep.subr.mxu0 0.0
  %746 = vmatpush2.msra.mxu0 0.0
  %747 = vmatprep.subr.mxu0 0.0
  %748 = vmatpush2.msra.mxu0 0.0
  %749 = vmatprep.subr.mxu0 0.0
  %750 = vmatpush2.msra.mxu0 0.0
  %751 = vmatprep.subr.mxu0 0.0
  %752 = vmatpush2.msra.mxu0 0.0
  %753 = vmatprep.subr.mxu0 0.0
  %754 = vmatpush2.msra.mxu0 0.0
  %755 = vmatprep.subr.mxu0 0.0
  %756 = vmatpush2.msra.mxu0 0.0
  %757 = vmatprep.mubr.f32.mxu0 0.0
  %758 = vmatmul.mubr.f32.gmra.mxu0 %v691
  %v759 = vpop.f32.mrf.mxu0
  %v760 = vadd.f32 0.0, %v759
  %v761 = vpop.f32.mrf.mxu0
  %v762 = vadd.f32 0.0, %v761
  %763 = vdwg.mxu0
  %v764 = vadd.f32 %v677, %v760
  %v765 = vadd.f32 %v678, %v762
  %766 = vrot.lane.b32.xlu0 %v81, 111
  %v767 = vpop.permute.xlu0 %766
  %768 = vrot.lane.b32.xlu0 %v82, 111
  %v769 = vpop.permute.xlu0 %768
  %vm770 = vcmp.lt.s32.totalorder %v15, 111
  %v771 = vsel %vm770, %v767, %v769
  %v772 = vsel %vm770, %v769, %v767
  %v773 = vsel %vm79, %v771, 0.0
  %v774 = vsel %vm80, %v772, 0.0
  %s775 = scalar_lea.vmem %s1, 64
  %v776 = vld [vmem:[%s775] sm:$0xff]
  %v778 = vsel %vm104, %v776, 0
  %780 = vmatprep.subr.mxu0 0.0
  %781 = vmatpush1.msra.mxu0 0.0
  %782 = vmatprep.subr.mxu0 0.0
  %783 = vmatpush1.msra.mxu0 0.0
  %784 = vmatprep.subr.mxu0 0.0
  %785 = vmatpush1.msra.mxu0 0.0
  %786 = vmatprep.subr.mxu0 0.0
  %787 = vmatpush1.msra.mxu0 0.0
  %788 = vmatprep.subr.mxu0 0.0
  %789 = vmatpush1.msra.mxu0 0.0
  %790 = vmatprep.subr.mxu0 0.0
  %791 = vmatpush1.msra.mxu0 0.0
  %792 = vmatprep.subr.mxu0 0.0
  %793 = vmatpush1.msra.mxu0 0.0
  %794 = vmatprep.subr.mxu0 0.0
  %795 = vmatpush1.msra.mxu0 0.0
  %796 = vmatprep.subr.mxu0 0.0
  %797 = vmatpush1.msra.mxu0 0.0
  %798 = vmatprep.subr.mxu0 0.0
  %799 = vmatpush1.msra.mxu0 0.0
  %800 = vmatprep.subr.mxu0 0.0
  %801 = vmatpush1.msra.mxu0 0.0
  %802 = vmatprep.subr.mxu0 0.0
  %803 = vmatpush1.msra.mxu0 0.0
  %804 = vmatprep.subr.mxu0 0.0
  %805 = vmatpush1.msra.mxu0 0.0
  %806 = vmatprep.subr.mxu0 0.0
  %807 = vmatpush1.msra.mxu0 0.0
  %808 = vmatprep.subr.mxu0 0.0
  %809 = vmatpush1.msra.mxu0 0.0
  %810 = vmatprep.subr.mxu0 %v774
  %811 = vmatpush1.msra.mxu0 %v773
  %812 = vmatprep.subr.mxu0 0.0
  %813 = vmatpush2.msra.mxu0 0.0
  %814 = vmatprep.subr.mxu0 0.0
  %815 = vmatpush2.msra.mxu0 0.0
  %816 = vmatprep.subr.mxu0 0.0
  %817 = vmatpush2.msra.mxu0 0.0
  %818 = vmatprep.subr.mxu0 0.0
  %819 = vmatpush2.msra.mxu0 0.0
  %820 = vmatprep.subr.mxu0 0.0
  %821 = vmatpush2.msra.mxu0 0.0
  %822 = vmatprep.subr.mxu0 0.0
  %823 = vmatpush2.msra.mxu0 0.0
  %824 = vmatprep.subr.mxu0 0.0
  %825 = vmatpush2.msra.mxu0 0.0
  %826 = vmatprep.subr.mxu0 0.0
  %827 = vmatpush2.msra.mxu0 0.0
  %828 = vmatprep.subr.mxu0 0.0
  %829 = vmatpush2.msra.mxu0 0.0
  %830 = vmatprep.subr.mxu0 0.0
  %831 = vmatpush2.msra.mxu0 0.0
  %832 = vmatprep.subr.mxu0 0.0
  %833 = vmatpush2.msra.mxu0 0.0
  %834 = vmatprep.subr.mxu0 0.0
  %835 = vmatpush2.msra.mxu0 0.0
  %836 = vmatprep.subr.mxu0 0.0
  %837 = vmatpush2.msra.mxu0 0.0
  %838 = vmatprep.subr.mxu0 0.0
  %839 = vmatpush2.msra.mxu0 0.0
  %840 = vmatprep.subr.mxu0 0.0
  %841 = vmatpush2.msra.mxu0 0.0
  %842 = vmatprep.subr.mxu0 0.0
  %843 = vmatpush2.msra.mxu0 0.0
  %844 = vmatprep.mubr.f32.mxu0 0.0
  %845 = vmatmul.mubr.f32.gmra.mxu0 %v778
  %v846 = vpop.f32.mrf.mxu0
  %v847 = vadd.f32 0.0, %v846
  %v848 = vpop.f32.mrf.mxu0
  %v849 = vadd.f32 0.0, %v848
  %850 = vdwg.mxu0
  %v851 = vadd.f32 %v764, %v847
  %v852 = vadd.f32 %v765, %v849
  %v853 = vld [vmem:[%s2] sm:$0xff]
  %855 = vset.pattern.permute.xlu0 0
  %856 = vperm.xlu0 %855, %v853
  %v857 = vpop.permute.xlu0 %856
  %v859 = vadd.f32 %v851, %v857
  %v860 = vadd.f32 %v852, %v857
  %v861 = vmax.f32 %v859, 0.0
  %v862 = vmax.f32 %v860, 0.0
  %863 = vrot.lane.b32.xlu0 %v861, 17
  %v864 = vpop.permute.xlu0 %863
  %865 = vrot.lane.b32.xlu0 %v862, 17
  %v866 = vpop.permute.xlu0 %865
  %v867 = vsel %vm87, %v864, %v866
  %v868 = vsel %vm87, %v866, %v864
  %v869 = vsel %vm31, %v868, 0.0
  %v870 = vsel %vm32, %v867, 0.0
  %s871 = scalar_lea.vmem %s1, 72
  %v872 = vld [vmem:[%s871] sm:$0xff]
  %873 = vrot.lane.b32.xlu0 %v861, 16
  %v874 = vpop.permute.xlu0 %873
  %875 = vrot.lane.b32.xlu0 %v862, 16
  %v876 = vpop.permute.xlu0 %875
  %v877 = vsel %vm97, %v874, %v876
  %v878 = vsel %vm97, %v876, %v874
  %v879 = vsel %vm39, %v878, 0.0
  %v880 = vsel %vm40, %v877, 0.0
  %s881 = scalar_lea.vmem %s1, 80
  %v882 = vld [vmem:[%s881] sm:$0xff]
  %v884 = vsel %vm104, %v882, 0
  %886 = vmatprep.subr.mxu0 0.0
  %887 = vmatpush1.msra.mxu0 0.0
  %888 = vmatprep.subr.mxu0 0.0
  %889 = vmatpush1.msra.mxu0 0.0
  %890 = vmatprep.subr.mxu0 0.0
  %891 = vmatpush1.msra.mxu0 0.0
  %892 = vmatprep.subr.mxu0 0.0
  %893 = vmatpush1.msra.mxu0 0.0
  %894 = vmatprep.subr.mxu0 0.0
  %895 = vmatpush1.msra.mxu0 0.0
  %896 = vmatprep.subr.mxu0 0.0
  %897 = vmatpush1.msra.mxu0 0.0
  %898 = vmatprep.subr.mxu0 0.0
  %899 = vmatpush1.msra.mxu0 0.0
  %900 = vmatprep.subr.mxu0 0.0
  %901 = vmatpush1.msra.mxu0 0.0
  %902 = vmatprep.subr.mxu0 0.0
  %903 = vmatpush1.msra.mxu0 0.0
  %904 = vmatprep.subr.mxu0 0.0
  %905 = vmatpush1.msra.mxu0 0.0
  %906 = vmatprep.subr.mxu0 0.0
  %907 = vmatpush1.msra.mxu0 0.0
  %908 = vmatprep.subr.mxu0 0.0
  %909 = vmatpush1.msra.mxu0 0.0
  %910 = vmatprep.subr.mxu0 0.0
  %911 = vmatpush1.msra.mxu0 0.0
  %912 = vmatprep.subr.mxu0 0.0
  %913 = vmatpush1.msra.mxu0 0.0
  %914 = vmatprep.subr.mxu0 0.0
  %915 = vmatpush1.msra.mxu0 0.0
  %916 = vmatprep.subr.mxu0 %v880
  %917 = vmatpush1.msra.mxu0 %v879
  %918 = vmatprep.subr.mxu0 0.0
  %919 = vmatpush2.msra.mxu0 0.0
  %920 = vmatprep.subr.mxu0 0.0
  %921 = vmatpush2.msra.mxu0 0.0
  %922 = vmatprep.subr.mxu0 0.0
  %923 = vmatpush2.msra.mxu0 0.0
  %924 = vmatprep.subr.mxu0 0.0
  %925 = vmatpush2.msra.mxu0 0.0
  %926 = vmatprep.subr.mxu0 0.0
  %927 = vmatpush2.msra.mxu0 0.0
  %928 = vmatprep.subr.mxu0 0.0
  %929 = vmatpush2.msra.mxu0 0.0
  %930 = vmatprep.subr.mxu0 0.0
  %931 = vmatpush2.msra.mxu0 0.0
  %932 = vmatprep.subr.mxu0 0.0
  %933 = vmatpush2.msra.mxu0 0.0
  %934 = vmatprep.subr.mxu0 0.0
  %935 = vmatpush2.msra.mxu0 0.0
  %936 = vmatprep.subr.mxu0 0.0
  %937 = vmatpush2.msra.mxu0 0.0
  %938 = vmatprep.subr.mxu0 0.0
  %939 = vmatpush2.msra.mxu0 0.0
  %940 = vmatprep.subr.mxu0 0.0
  %941 = vmatpush2.msra.mxu0 0.0
  %942 = vmatprep.subr.mxu0 0.0
  %943 = vmatpush2.msra.mxu0 0.0
  %944 = vmatprep.subr.mxu0 0.0
  %945 = vmatpush2.msra.mxu0 0.0
  %946 = vmatprep.subr.mxu0 0.0
  %947 = vmatpush2.msra.mxu0 0.0
  %948 = vmatprep.subr.mxu0 0.0
  %949 = vmatpush2.msra.mxu0 0.0
  %950 = vmatprep.mubr.f32.mxu0 0.0
  %951 = vmatmul.mubr.f32.gmra.mxu0 %v884
  %v952 = vpop.f32.mrf.mxu0
  %v953 = vadd.f32 0.0, %v952
  %v954 = vpop.f32.mrf.mxu0
  %v955 = vadd.f32 0.0, %v954
  %956 = vdwg.mxu0
  %v958 = vsel %vm104, %v872, 0
  %960 = vmatprep.subr.mxu0 0.0
  %961 = vmatpush1.msra.mxu0 0.0
  %962 = vmatprep.subr.mxu0 0.0
  %963 = vmatpush1.msra.mxu0 0.0
  %964 = vmatprep.subr.mxu0 0.0
  %965 = vmatpush1.msra.mxu0 0.0
  %966 = vmatprep.subr.mxu0 0.0
  %967 = vmatpush1.msra.mxu0 0.0
  %968 = vmatprep.subr.mxu0 0.0
  %969 = vmatpush1.msra.mxu0 0.0
  %970 = vmatprep.subr.mxu0 0.0
  %971 = vmatpush1.msra.mxu0 0.0
  %972 = vmatprep.subr.mxu0 0.0
  %973 = vmatpush1.msra.mxu0 0.0
  %974 = vmatprep.subr.mxu0 0.0
  %975 = vmatpush1.msra.mxu0 0.0
  %976 = vmatprep.subr.mxu0 0.0
  %977 = vmatpush1.msra.mxu0 0.0
  %978 = vmatprep.subr.mxu0 0.0
  %979 = vmatpush1.msra.mxu0 0.0
  %980 = vmatprep.subr.mxu0 0.0
  %981 = vmatpush1.msra.mxu0 0.0
  %982 = vmatprep.subr.mxu0 0.0
  %983 = vmatpush1.msra.mxu0 0.0
  %984 = vmatprep.subr.mxu0 0.0
  %985 = vmatpush1.msra.mxu0 0.0
  %986 = vmatprep.subr.mxu0 0.0
  %987 = vmatpush1.msra.mxu0 0.0
  %988 = vmatprep.subr.mxu0 0.0
  %989 = vmatpush1.msra.mxu0 0.0
  %990 = vmatprep.subr.mxu0 %v870
  %991 = vmatpush1.msra.mxu0 %v869
  %992 = vmatprep.subr.mxu0 0.0
  %993 = vmatpush2.msra.mxu0 0.0
  %994 = vmatprep.subr.mxu0 0.0
  %995 = vmatpush2.msra.mxu0 0.0
  %996 = vmatprep.subr.mxu0 0.0
  %997 = vmatpush2.msra.mxu0 0.0
  %998 = vmatprep.subr.mxu0 0.0
  %999 = vmatpush2.msra.mxu0 0.0
  %1000 = vmatprep.subr.mxu0 0.0
  %1001 = vmatpush2.msra.mxu0 0.0
  %1002 = vmatprep.subr.mxu0 0.0
  %1003 = vmatpush2.msra.mxu0 0.0
  %1004 = vmatprep.subr.mxu0 0.0
  %1005 = vmatpush2.msra.mxu0 0.0
  %1006 = vmatprep.subr.mxu0 0.0
  %1007 = vmatpush2.msra.mxu0 0.0
  %1008 = vmatprep.subr.mxu0 0.0
  %1009 = vmatpush2.msra.mxu0 0.0
  %1010 = vmatprep.subr.mxu0 0.0
  %1011 = vmatpush2.msra.mxu0 0.0
  %1012 = vmatprep.subr.mxu0 0.0
  %1013 = vmatpush2.msra.mxu0 0.0
  %1014 = vmatprep.subr.mxu0 0.0
  %1015 = vmatpush2.msra.mxu0 0.0
  %1016 = vmatprep.subr.mxu0 0.0
  %1017 = vmatpush2.msra.mxu0 0.0
  %1018 = vmatprep.subr.mxu0 0.0
  %1019 = vmatpush2.msra.mxu0 0.0
  %1020 = vmatprep.subr.mxu0 0.0
  %1021 = vmatpush2.msra.mxu0 0.0
  %1022 = vmatprep.subr.mxu0 0.0
  %1023 = vmatpush2.msra.mxu0 0.0
  %1024 = vmatprep.mubr.f32.mxu0 0.0
  %1025 = vmatmul.mubr.f32.gmra.mxu0 %v958
  %v1026 = vpop.f32.mrf.mxu0
  %v1027 = vadd.f32 %v953, %v1026
  %v1028 = vpop.f32.mrf.mxu0
  %v1029 = vadd.f32 %v955, %v1028
  %1030 = vdwg.mxu0
  %1031 = vrot.lane.b32.xlu0 %v861, 15
  %v1032 = vpop.permute.xlu0 %1031
  %1033 = vrot.lane.b32.xlu0 %v862, 15
  %v1034 = vpop.permute.xlu0 %1033
  %v1035 = vsel %vm257, %v1032, %v1034
  %v1036 = vsel %vm257, %v1034, %v1032
  %v1037 = vsel %vm47, %v1036, 0.0
  %v1038 = vsel %vm48, %v1035, 0.0
  %s1039 = scalar_lea.vmem %s1, 88
  %v1040 = vld [vmem:[%s1039] sm:$0xff]
  %v1042 = vsel %vm104, %v1040, 0
  %1044 = vmatprep.subr.mxu0 0.0
  %1045 = vmatpush1.msra.mxu0 0.0
  %1046 = vmatprep.subr.mxu0 0.0
  %1047 = vmatpush1.msra.mxu0 0.0
  %1048 = vmatprep.subr.mxu0 0.0
  %1049 = vmatpush1.msra.mxu0 0.0
  %1050 = vmatprep.subr.mxu0 0.0
  %1051 = vmatpush1.msra.mxu0 0.0
  %1052 = vmatprep.subr.mxu0 0.0
  %1053 = vmatpush1.msra.mxu0 0.0
  %1054 = vmatprep.subr.mxu0 0.0
  %1055 = vmatpush1.msra.mxu0 0.0
  %1056 = vmatprep.subr.mxu0 0.0
  %1057 = vmatpush1.msra.mxu0 0.0
  %1058 = vmatprep.subr.mxu0 0.0
  %1059 = vmatpush1.msra.mxu0 0.0
  %1060 = vmatprep.subr.mxu0 0.0
  %1061 = vmatpush1.msra.mxu0 0.0
  %1062 = vmatprep.subr.mxu0 0.0
  %1063 = vmatpush1.msra.mxu0 0.0
  %1064 = vmatprep.subr.mxu0 0.0
  %1065 = vmatpush1.msra.mxu0 0.0
  %1066 = vmatprep.subr.mxu0 0.0
  %1067 = vmatpush1.msra.mxu0 0.0
  %1068 = vmatprep.subr.mxu0 0.0
  %1069 = vmatpush1.msra.mxu0 0.0
  %1070 = vmatprep.subr.mxu0 0.0
  %1071 = vmatpush1.msra.mxu0 0.0
  %1072 = vmatprep.subr.mxu0 0.0
  %1073 = vmatpush1.msra.mxu0 0.0
  %1074 = vmatprep.subr.mxu0 %v1038
  %1075 = vmatpush1.msra.mxu0 %v1037
  %1076 = vmatprep.subr.mxu0 0.0
  %1077 = vmatpush2.msra.mxu0 0.0
  %1078 = vmatprep.subr.mxu0 0.0
  %1079 = vmatpush2.msra.mxu0 0.0
  %1080 = vmatprep.subr.mxu0 0.0
  %1081 = vmatpush2.msra.mxu0 0.0
  %1082 = vmatprep.subr.mxu0 0.0
  %1083 = vmatpush2.msra.mxu0 0.0
  %1084 = vmatprep.subr.mxu0 0.0
  %1085 = vmatpush2.msra.mxu0 0.0
  %1086 = vmatprep.subr.mxu0 0.0
  %1087 = vmatpush2.msra.mxu0 0.0
  %1088 = vmatprep.subr.mxu0 0.0
  %1089 = vmatpush2.msra.mxu0 0.0
  %1090 = vmatprep.subr.mxu0 0.0
  %1091 = vmatpush2.msra.mxu0 0.0
  %1092 = vmatprep.subr.mxu0 0.0
  %1093 = vmatpush2.msra.mxu0 0.0
  %1094 = vmatprep.subr.mxu0 0.0
  %1095 = vmatpush2.msra.mxu0 0.0
  %1096 = vmatprep.subr.mxu0 0.0
  %1097 = vmatpush2.msra.mxu0 0.0
  %1098 = vmatprep.subr.mxu0 0.0
  %1099 = vmatpush2.msra.mxu0 0.0
  %1100 = vmatprep.subr.mxu0 0.0
  %1101 = vmatpush2.msra.mxu0 0.0
  %1102 = vmatprep.subr.mxu0 0.0
  %1103 = vmatpush2.msra.mxu0 0.0
  %1104 = vmatprep.subr.mxu0 0.0
  %1105 = vmatpush2.msra.mxu0 0.0
  %1106 = vmatprep.subr.mxu0 0.0
  %1107 = vmatpush2.msra.mxu0 0.0
  %1108 = vmatprep.mubr.f32.mxu0 0.0
  %1109 = vmatmul.mubr.f32.gmra.mxu0 %v1042
  %v1110 = vpop.f32.mrf.mxu0
  %v1111 = vadd.f32 0.0, %v1110
  %v1112 = vpop.f32.mrf.mxu0
  %v1113 = vadd.f32 0.0, %v1112
  %1114 = vdwg.mxu0
  %v1115 = vadd.f32 %v1027, %v1111
  %v1116 = vadd.f32 %v1029, %v1113
  %1117 = vrot.lane.b32.xlu0 %v861, 1
  %v1118 = vpop.permute.xlu0 %1117
  %1119 = vrot.lane.b32.xlu0 %v862, 1
  %v1120 = vpop.permute.xlu0 %1119
  %v1121 = vsel %vm344, %v1118, %v1120
  %v1122 = vsel %vm344, %v1120, %v1118
  %v1123 = vsel %vm57, %v1122, 0.0
  %v1124 = vsel %vm58, %v1121, 0.0
  %s1125 = scalar_lea.vmem %s1, 96
  %v1126 = vld [vmem:[%s1125] sm:$0xff]
  %v1128 = vsel %vm104, %v1126, 0
  %1130 = vmatprep.subr.mxu0 0.0
  %1131 = vmatpush1.msra.mxu0 0.0
  %1132 = vmatprep.subr.mxu0 0.0
  %1133 = vmatpush1.msra.mxu0 0.0
  %1134 = vmatprep.subr.mxu0 0.0
  %1135 = vmatpush1.msra.mxu0 0.0
  %1136 = vmatprep.subr.mxu0 0.0
  %1137 = vmatpush1.msra.mxu0 0.0
  %1138 = vmatprep.subr.mxu0 0.0
  %1139 = vmatpush1.msra.mxu0 0.0
  %1140 = vmatprep.subr.mxu0 0.0
  %1141 = vmatpush1.msra.mxu0 0.0
  %1142 = vmatprep.subr.mxu0 0.0
  %1143 = vmatpush1.msra.mxu0 0.0
  %1144 = vmatprep.subr.mxu0 0.0
  %1145 = vmatpush1.msra.mxu0 0.0
  %1146 = vmatprep.subr.mxu0 0.0
  %1147 = vmatpush1.msra.mxu0 0.0
  %1148 = vmatprep.subr.mxu0 0.0
  %1149 = vmatpush1.msra.mxu0 0.0
  %1150 = vmatprep.subr.mxu0 0.0
  %1151 = vmatpush1.msra.mxu0 0.0
  %1152 = vmatprep.subr.mxu0 0.0
  %1153 = vmatpush1.msra.mxu0 0.0
  %1154 = vmatprep.subr.mxu0 0.0
  %1155 = vmatpush1.msra.mxu0 0.0
  %1156 = vmatprep.subr.mxu0 0.0
  %1157 = vmatpush1.msra.mxu0 0.0
  %1158 = vmatprep.subr.mxu0 0.0
  %1159 = vmatpush1.msra.mxu0 0.0
  %1160 = vmatprep.subr.mxu0 %v1124
  %1161 = vmatpush1.msra.mxu0 %v1123
  %1162 = vmatprep.subr.mxu0 0.0
  %1163 = vmatpush2.msra.mxu0 0.0
  %1164 = vmatprep.subr.mxu0 0.0
  %1165 = vmatpush2.msra.mxu0 0.0
  %1166 = vmatprep.subr.mxu0 0.0
  %1167 = vmatpush2.msra.mxu0 0.0
  %1168 = vmatprep.subr.mxu0 0.0
  %1169 = vmatpush2.msra.mxu0 0.0
  %1170 = vmatprep.subr.mxu0 0.0
  %1171 = vmatpush2.msra.mxu0 0.0
  %1172 = vmatprep.subr.mxu0 0.0
  %1173 = vmatpush2.msra.mxu0 0.0
  %1174 = vmatprep.subr.mxu0 0.0
  %1175 = vmatpush2.msra.mxu0 0.0
  %1176 = vmatprep.subr.mxu0 0.0
  %1177 = vmatpush2.msra.mxu0 0.0
  %1178 = vmatprep.subr.mxu0 0.0
  %1179 = vmatpush2.msra.mxu0 0.0
  %1180 = vmatprep.subr.mxu0 0.0
  %1181 = vmatpush2.msra.mxu0 0.0
  %1182 = vmatprep.subr.mxu0 0.0
  %1183 = vmatpush2.msra.mxu0 0.0
  %1184 = vmatprep.subr.mxu0 0.0
  %1185 = vmatpush2.msra.mxu0 0.0
  %1186 = vmatprep.subr.mxu0 0.0
  %1187 = vmatpush2.msra.mxu0 0.0
  %1188 = vmatprep.subr.mxu0 0.0
  %1189 = vmatpush2.msra.mxu0 0.0
  %1190 = vmatprep.subr.mxu0 0.0
  %1191 = vmatpush2.msra.mxu0 0.0
  %1192 = vmatprep.subr.mxu0 0.0
  %1193 = vmatpush2.msra.mxu0 0.0
  %1194 = vmatprep.mubr.f32.mxu0 0.0
  %1195 = vmatmul.mubr.f32.gmra.mxu0 %v1128
  %v1196 = vpop.f32.mrf.mxu0
  %v1197 = vadd.f32 0.0, %v1196
  %v1198 = vpop.f32.mrf.mxu0
  %v1199 = vadd.f32 0.0, %v1198
  %1200 = vdwg.mxu0
  %v1201 = vadd.f32 %v1115, %v1197
  %v1202 = vadd.f32 %v1116, %v1199
  %s1203 = scalar_lea.vmem %s1, 104
  %v1204 = vld [vmem:[%s1203] sm:$0xff]
  %v1206 = vsel %vm104, %v1204, 0
  %1208 = vmatprep.subr.mxu0 0.0
  %1209 = vmatpush1.msra.mxu0 0.0
  %1210 = vmatprep.subr.mxu0 0.0
  %1211 = vmatpush1.msra.mxu0 0.0
  %1212 = vmatprep.subr.mxu0 0.0
  %1213 = vmatpush1.msra.mxu0 0.0
  %1214 = vmatprep.subr.mxu0 0.0
  %1215 = vmatpush1.msra.mxu0 0.0
  %1216 = vmatprep.subr.mxu0 0.0
  %1217 = vmatpush1.msra.mxu0 0.0
  %1218 = vmatprep.subr.mxu0 0.0
  %1219 = vmatpush1.msra.mxu0 0.0
  %1220 = vmatprep.subr.mxu0 0.0
  %1221 = vmatpush1.msra.mxu0 0.0
  %1222 = vmatprep.subr.mxu0 0.0
  %1223 = vmatpush1.msra.mxu0 0.0
  %1224 = vmatprep.subr.mxu0 0.0
  %1225 = vmatpush1.msra.mxu0 0.0
  %1226 = vmatprep.subr.mxu0 0.0
  %1227 = vmatpush1.msra.mxu0 0.0
  %1228 = vmatprep.subr.mxu0 0.0
  %1229 = vmatpush1.msra.mxu0 0.0
  %1230 = vmatprep.subr.mxu0 0.0
  %1231 = vmatpush1.msra.mxu0 0.0
  %1232 = vmatprep.subr.mxu0 0.0
  %1233 = vmatpush1.msra.mxu0 0.0
  %1234 = vmatprep.subr.mxu0 0.0
  %1235 = vmatpush1.msra.mxu0 0.0
  %1236 = vmatprep.subr.mxu0 0.0
  %1237 = vmatpush1.msra.mxu0 0.0
  %1238 = vmatprep.subr.mxu0 %v862
  %1239 = vmatpush1.msra.mxu0 %v861
  %1240 = vmatprep.subr.mxu0 0.0
  %1241 = vmatpush2.msra.mxu0 0.0
  %1242 = vmatprep.subr.mxu0 0.0
  %1243 = vmatpush2.msra.mxu0 0.0
  %1244 = vmatprep.subr.mxu0 0.0
  %1245 = vmatpush2.msra.mxu0 0.0
  %1246 = vmatprep.subr.mxu0 0.0
  %1247 = vmatpush2.msra.mxu0 0.0
  %1248 = vmatprep.subr.mxu0 0.0
  %1249 = vmatpush2.msra.mxu0 0.0
  %1250 = vmatprep.subr.mxu0 0.0
  %1251 = vmatpush2.msra.mxu0 0.0
  %1252 = vmatprep.subr.mxu0 0.0
  %1253 = vmatpush2.msra.mxu0 0.0
  %1254 = vmatprep.subr.mxu0 0.0
  %1255 = vmatpush2.msra.mxu0 0.0
  %1256 = vmatprep.subr.mxu0 0.0
  %1257 = vmatpush2.msra.mxu0 0.0
  %1258 = vmatprep.subr.mxu0 0.0
  %1259 = vmatpush2.msra.mxu0 0.0
  %1260 = vmatprep.subr.mxu0 0.0
  %1261 = vmatpush2.msra.mxu0 0.0
  %1262 = vmatprep.subr.mxu0 0.0
  %1263 = vmatpush2.msra.mxu0 0.0
  %1264 = vmatprep.subr.mxu0 0.0
  %1265 = vmatpush2.msra.mxu0 0.0
  %1266 = vmatprep.subr.mxu0 0.0
  %1267 = vmatpush2.msra.mxu0 0.0
  %1268 = vmatprep.subr.mxu0 0.0
  %1269 = vmatpush2.msra.mxu0 0.0
  %1270 = vmatprep.subr.mxu0 0.0
  %1271 = vmatpush2.msra.mxu0 0.0
  %1272 = vmatprep.mubr.f32.mxu0 0.0
  %1273 = vmatmul.mubr.f32.gmra.mxu0 %v1206
  %v1274 = vpop.f32.mrf.mxu0
  %v1275 = vadd.f32 0.0, %v1274
  %v1276 = vpop.f32.mrf.mxu0
  %v1277 = vadd.f32 0.0, %v1276
  %1278 = vdwg.mxu0
  %v1279 = vadd.f32 %v1201, %v1275
  %v1280 = vadd.f32 %v1202, %v1277
  %1281 = vrot.lane.b32.xlu0 %v861, 127
  %v1282 = vpop.permute.xlu0 %1281
  %1283 = vrot.lane.b32.xlu0 %v862, 127
  %v1284 = vpop.permute.xlu0 %1283
  %v1285 = vsel %vm509, %v1282, %v1284
  %v1286 = vsel %vm509, %v1284, %v1282
  %v1287 = vsel %vm61, %v1285, 0.0
  %v1288 = vsel %vm62, %v1286, 0.0
  %s1289 = scalar_lea.vmem %s1, 112
  %v1290 = vld [vmem:[%s1289] sm:$0xff]
  %v1292 = vsel %vm104, %v1290, 0
  %1294 = vmatprep.subr.mxu0 0.0
  %1295 = vmatpush1.msra.mxu0 0.0
  %1296 = vmatprep.subr.mxu0 0.0
  %1297 = vmatpush1.msra.mxu0 0.0
  %1298 = vmatprep.subr.mxu0 0.0
  %1299 = vmatpush1.msra.mxu0 0.0
  %1300 = vmatprep.subr.mxu0 0.0
  %1301 = vmatpush1.msra.mxu0 0.0
  %1302 = vmatprep.subr.mxu0 0.0
  %1303 = vmatpush1.msra.mxu0 0.0
  %1304 = vmatprep.subr.mxu0 0.0
  %1305 = vmatpush1.msra.mxu0 0.0
  %1306 = vmatprep.subr.mxu0 0.0
  %1307 = vmatpush1.msra.mxu0 0.0
  %1308 = vmatprep.subr.mxu0 0.0
  %1309 = vmatpush1.msra.mxu0 0.0
  %1310 = vmatprep.subr.mxu0 0.0
  %1311 = vmatpush1.msra.mxu0 0.0
  %1312 = vmatprep.subr.mxu0 0.0
  %1313 = vmatpush1.msra.mxu0 0.0
  %1314 = vmatprep.subr.mxu0 0.0
  %1315 = vmatpush1.msra.mxu0 0.0
  %1316 = vmatprep.subr.mxu0 0.0
  %1317 = vmatpush1.msra.mxu0 0.0
  %1318 = vmatprep.subr.mxu0 0.0
  %1319 = vmatpush1.msra.mxu0 0.0
  %1320 = vmatprep.subr.mxu0 0.0
  %1321 = vmatpush1.msra.mxu0 0.0
  %1322 = vmatprep.subr.mxu0 0.0
  %1323 = vmatpush1.msra.mxu0 0.0
  %1324 = vmatprep.subr.mxu0 %v1288
  %1325 = vmatpush1.msra.mxu0 %v1287
  %1326 = vmatprep.subr.mxu0 0.0
  %1327 = vmatpush2.msra.mxu0 0.0
  %1328 = vmatprep.subr.mxu0 0.0
  %1329 = vmatpush2.msra.mxu0 0.0
  %1330 = vmatprep.subr.mxu0 0.0
  %1331 = vmatpush2.msra.mxu0 0.0
  %1332 = vmatprep.subr.mxu0 0.0
  %1333 = vmatpush2.msra.mxu0 0.0
  %1334 = vmatprep.subr.mxu0 0.0
  %1335 = vmatpush2.msra.mxu0 0.0
  %1336 = vmatprep.subr.mxu0 0.0
  %1337 = vmatpush2.msra.mxu0 0.0
  %1338 = vmatprep.subr.mxu0 0.0
  %1339 = vmatpush2.msra.mxu0 0.0
  %1340 = vmatprep.subr.mxu0 0.0
  %1341 = vmatpush2.msra.mxu0 0.0
  %1342 = vmatprep.subr.mxu0 0.0
  %1343 = vmatpush2.msra.mxu0 0.0
  %1344 = vmatprep.subr.mxu0 0.0
  %1345 = vmatpush2.msra.mxu0 0.0
  %1346 = vmatprep.subr.mxu0 0.0
  %1347 = vmatpush2.msra.mxu0 0.0
  %1348 = vmatprep.subr.mxu0 0.0
  %1349 = vmatpush2.msra.mxu0 0.0
  %1350 = vmatprep.subr.mxu0 0.0
  %1351 = vmatpush2.msra.mxu0 0.0
  %1352 = vmatprep.subr.mxu0 0.0
  %1353 = vmatpush2.msra.mxu0 0.0
  %1354 = vmatprep.subr.mxu0 0.0
  %1355 = vmatpush2.msra.mxu0 0.0
  %1356 = vmatprep.subr.mxu0 0.0
  %1357 = vmatpush2.msra.mxu0 0.0
  %1358 = vmatprep.mubr.f32.mxu0 0.0
  %1359 = vmatmul.mubr.f32.gmra.mxu0 %v1292
  %v1360 = vpop.f32.mrf.mxu0
  %v1361 = vadd.f32 0.0, %v1360
  %v1362 = vpop.f32.mrf.mxu0
  %v1363 = vadd.f32 0.0, %v1362
  %1364 = vdwg.mxu0
  %v1365 = vadd.f32 %v1279, %v1361
  %v1366 = vadd.f32 %v1280, %v1363
  %1367 = vrot.lane.b32.xlu0 %v861, 113
  %v1368 = vpop.permute.xlu0 %1367
  %1369 = vrot.lane.b32.xlu0 %v862, 113
  %v1370 = vpop.permute.xlu0 %1369
  %v1371 = vsel %vm596, %v1368, %v1370
  %v1372 = vsel %vm596, %v1370, %v1368
  %v1373 = vsel %vm71, %v1371, 0.0
  %v1374 = vsel %vm72, %v1372, 0.0
  %s1375 = scalar_lea.vmem %s1, 120
  %v1376 = vld [vmem:[%s1375] sm:$0xff]
  %v1378 = vsel %vm104, %v1376, 0
  %1380 = vmatprep.subr.mxu0 0.0
  %1381 = vmatpush1.msra.mxu0 0.0
  %1382 = vmatprep.subr.mxu0 0.0
  %1383 = vmatpush1.msra.mxu0 0.0
  %1384 = vmatprep.subr.mxu0 0.0
  %1385 = vmatpush1.msra.mxu0 0.0
  %1386 = vmatprep.subr.mxu0 0.0
  %1387 = vmatpush1.msra.mxu0 0.0
  %1388 = vmatprep.subr.mxu0 0.0
  %1389 = vmatpush1.msra.mxu0 0.0
  %1390 = vmatprep.subr.mxu0 0.0
  %1391 = vmatpush1.msra.mxu0 0.0
  %1392 = vmatprep.subr.mxu0 0.0
  %1393 = vmatpush1.msra.mxu0 0.0
  %1394 = vmatprep.subr.mxu0 0.0
  %1395 = vmatpush1.msra.mxu0 0.0
  %1396 = vmatprep.subr.mxu0 0.0
  %1397 = vmatpush1.msra.mxu0 0.0
  %1398 = vmatprep.subr.mxu0 0.0
  %1399 = vmatpush1.msra.mxu0 0.0
  %1400 = vmatprep.subr.mxu0 0.0
  %1401 = vmatpush1.msra.mxu0 0.0
  %1402 = vmatprep.subr.mxu0 0.0
  %1403 = vmatpush1.msra.mxu0 0.0
  %1404 = vmatprep.subr.mxu0 0.0
  %1405 = vmatpush1.msra.mxu0 0.0
  %1406 = vmatprep.subr.mxu0 0.0
  %1407 = vmatpush1.msra.mxu0 0.0
  %1408 = vmatprep.subr.mxu0 0.0
  %1409 = vmatpush1.msra.mxu0 0.0
  %1410 = vmatprep.subr.mxu0 %v1374
  %1411 = vmatpush1.msra.mxu0 %v1373
  %1412 = vmatprep.subr.mxu0 0.0
  %1413 = vmatpush2.msra.mxu0 0.0
  %1414 = vmatprep.subr.mxu0 0.0
  %1415 = vmatpush2.msra.mxu0 0.0
  %1416 = vmatprep.subr.mxu0 0.0
  %1417 = vmatpush2.msra.mxu0 0.0
  %1418 = vmatprep.subr.mxu0 0.0
  %1419 = vmatpush2.msra.mxu0 0.0
  %1420 = vmatprep.subr.mxu0 0.0
  %1421 = vmatpush2.msra.mxu0 0.0
  %1422 = vmatprep.subr.mxu0 0.0
  %1423 = vmatpush2.msra.mxu0 0.0
  %1424 = vmatprep.subr.mxu0 0.0
  %1425 = vmatpush2.msra.mxu0 0.0
  %1426 = vmatprep.subr.mxu0 0.0
  %1427 = vmatpush2.msra.mxu0 0.0
  %1428 = vmatprep.subr.mxu0 0.0
  %1429 = vmatpush2.msra.mxu0 0.0
  %1430 = vmatprep.subr.mxu0 0.0
  %1431 = vmatpush2.msra.mxu0 0.0
  %1432 = vmatprep.subr.mxu0 0.0
  %1433 = vmatpush2.msra.mxu0 0.0
  %1434 = vmatprep.subr.mxu0 0.0
  %1435 = vmatpush2.msra.mxu0 0.0
  %1436 = vmatprep.subr.mxu0 0.0
  %1437 = vmatpush2.msra.mxu0 0.0
  %1438 = vmatprep.subr.mxu0 0.0
  %1439 = vmatpush2.msra.mxu0 0.0
  %1440 = vmatprep.subr.mxu0 0.0
  %1441 = vmatpush2.msra.mxu0 0.0
  %1442 = vmatprep.subr.mxu0 0.0
  %1443 = vmatpush2.msra.mxu0 0.0
  %1444 = vmatprep.mubr.f32.mxu0 0.0
  %1445 = vmatmul.mubr.f32.gmra.mxu0 %v1378
  %v1446 = vpop.f32.mrf.mxu0
  %v1447 = vadd.f32 0.0, %v1446
  %v1448 = vpop.f32.mrf.mxu0
  %v1449 = vadd.f32 0.0, %v1448
  %1450 = vdwg.mxu0
  %v1451 = vadd.f32 %v1365, %v1447
  %v1452 = vadd.f32 %v1366, %v1449
  %1453 = vrot.lane.b32.xlu0 %v861, 112
  %v1454 = vpop.permute.xlu0 %1453
  %1455 = vrot.lane.b32.xlu0 %v862, 112
  %v1456 = vpop.permute.xlu0 %1455
  %v1457 = vsel %vm683, %v1454, %v1456
  %v1458 = vsel %vm683, %v1456, %v1454
  %v1459 = vsel %vm75, %v1457, 0.0
  %v1460 = vsel %vm76, %v1458, 0.0
  %s1461 = scalar_lea.vmem %s1, 128
  %v1462 = vld [vmem:[%s1461] sm:$0xff]
  %v1464 = vsel %vm104, %v1462, 0
  %1466 = vmatprep.subr.mxu0 0.0
  %1467 = vmatpush1.msra.mxu0 0.0
  %1468 = vmatprep.subr.mxu0 0.0
  %1469 = vmatpush1.msra.mxu0 0.0
  %1470 = vmatprep.subr.mxu0 0.0
  %1471 = vmatpush1.msra.mxu0 0.0
  %1472 = vmatprep.subr.mxu0 0.0
  %1473 = vmatpush1.msra.mxu0 0.0
  %1474 = vmatprep.subr.mxu0 0.0
  %1475 = vmatpush1.msra.mxu0 0.0
  %1476 = vmatprep.subr.mxu0 0.0
  %1477 = vmatpush1.msra.mxu0 0.0
  %1478 = vmatprep.subr.mxu0 0.0
  %1479 = vmatpush1.msra.mxu0 0.0
  %1480 = vmatprep.subr.mxu0 0.0
  %1481 = vmatpush1.msra.mxu0 0.0
  %1482 = vmatprep.subr.mxu0 0.0
  %1483 = vmatpush1.msra.mxu0 0.0
  %1484 = vmatprep.subr.mxu0 0.0
  %1485 = vmatpush1.msra.mxu0 0.0
  %1486 = vmatprep.subr.mxu0 0.0
  %1487 = vmatpush1.msra.mxu0 0.0
  %1488 = vmatprep.subr.mxu0 0.0
  %1489 = vmatpush1.msra.mxu0 0.0
  %1490 = vmatprep.subr.mxu0 0.0
  %1491 = vmatpush1.msra.mxu0 0.0
  %1492 = vmatprep.subr.mxu0 0.0
  %1493 = vmatpush1.msra.mxu0 0.0
  %1494 = vmatprep.subr.mxu0 0.0
  %1495 = vmatpush1.msra.mxu0 0.0
  %1496 = vmatprep.subr.mxu0 %v1460
  %1497 = vmatpush1.msra.mxu0 %v1459
  %1498 = vmatprep.subr.mxu0 0.0
  %1499 = vmatpush2.msra.mxu0 0.0
  %1500 = vmatprep.subr.mxu0 0.0
  %1501 = vmatpush2.msra.mxu0 0.0
  %1502 = vmatprep.subr.mxu0 0.0
  %1503 = vmatpush2.msra.mxu0 0.0
  %1504 = vmatprep.subr.mxu0 0.0
  %1505 = vmatpush2.msra.mxu0 0.0
  %1506 = vmatprep.subr.mxu0 0.0
  %1507 = vmatpush2.msra.mxu0 0.0
  %1508 = vmatprep.subr.mxu0 0.0
  %1509 = vmatpush2.msra.mxu0 0.0
  %1510 = vmatprep.subr.mxu0 0.0
  %1511 = vmatpush2.msra.mxu0 0.0
  %1512 = vmatprep.subr.mxu0 0.0
  %1513 = vmatpush2.msra.mxu0 0.0
  %1514 = vmatprep.subr.mxu0 0.0
  %1515 = vmatpush2.msra.mxu0 0.0
  %1516 = vmatprep.subr.mxu0 0.0
  %1517 = vmatpush2.msra.mxu0 0.0
  %1518 = vmatprep.subr.mxu0 0.0
  %1519 = vmatpush2.msra.mxu0 0.0
  %1520 = vmatprep.subr.mxu0 0.0
  %1521 = vmatpush2.msra.mxu0 0.0
  %1522 = vmatprep.subr.mxu0 0.0
  %1523 = vmatpush2.msra.mxu0 0.0
  %1524 = vmatprep.subr.mxu0 0.0
  %1525 = vmatpush2.msra.mxu0 0.0
  %1526 = vmatprep.subr.mxu0 0.0
  %1527 = vmatpush2.msra.mxu0 0.0
  %1528 = vmatprep.subr.mxu0 0.0
  %1529 = vmatpush2.msra.mxu0 0.0
  %1530 = vmatprep.mubr.f32.mxu0 0.0
  %1531 = vmatmul.mubr.f32.gmra.mxu0 %v1464
  %v1532 = vpop.f32.mrf.mxu0
  %v1533 = vadd.f32 0.0, %v1532
  %v1534 = vpop.f32.mrf.mxu0
  %v1535 = vadd.f32 0.0, %v1534
  %1536 = vdwg.mxu0
  %v1537 = vadd.f32 %v1451, %v1533
  %v1538 = vadd.f32 %v1452, %v1535
  %1539 = vrot.lane.b32.xlu0 %v861, 111
  %v1540 = vpop.permute.xlu0 %1539
  %1541 = vrot.lane.b32.xlu0 %v862, 111
  %v1542 = vpop.permute.xlu0 %1541
  %v1543 = vsel %vm770, %v1540, %v1542
  %v1544 = vsel %vm770, %v1542, %v1540
  %v1545 = vsel %vm79, %v1543, 0.0
  %v1546 = vsel %vm80, %v1544, 0.0
  %s1547 = scalar_lea.vmem %s1, 136
  %v1548 = vld [vmem:[%s1547] sm:$0xff]
  %v1550 = vsel %vm104, %v1548, 0
  %1552 = vmatprep.subr.mxu0 0.0
  %1553 = vmatpush1.msra.mxu0 0.0
  %1554 = vmatprep.subr.mxu0 0.0
  %1555 = vmatpush1.msra.mxu0 0.0
  %1556 = vmatprep.subr.mxu0 0.0
  %1557 = vmatpush1.msra.mxu0 0.0
  %1558 = vmatprep.subr.mxu0 0.0
  %1559 = vmatpush1.msra.mxu0 0.0
  %1560 = vmatprep.subr.mxu0 0.0
  %1561 = vmatpush1.msra.mxu0 0.0
  %1562 = vmatprep.subr.mxu0 0.0
  %1563 = vmatpush1.msra.mxu0 0.0
  %1564 = vmatprep.subr.mxu0 0.0
  %1565 = vmatpush1.msra.mxu0 0.0
  %1566 = vmatprep.subr.mxu0 0.0
  %1567 = vmatpush1.msra.mxu0 0.0
  %1568 = vmatprep.subr.mxu0 0.0
  %1569 = vmatpush1.msra.mxu0 0.0
  %1570 = vmatprep.subr.mxu0 0.0
  %1571 = vmatpush1.msra.mxu0 0.0
  %1572 = vmatprep.subr.mxu0 0.0
  %1573 = vmatpush1.msra.mxu0 0.0
  %1574 = vmatprep.subr.mxu0 0.0
  %1575 = vmatpush1.msra.mxu0 0.0
  %1576 = vmatprep.subr.mxu0 0.0
  %1577 = vmatpush1.msra.mxu0 0.0
  %1578 = vmatprep.subr.mxu0 0.0
  %1579 = vmatpush1.msra.mxu0 0.0
  %1580 = vmatprep.subr.mxu0 0.0
  %1581 = vmatpush1.msra.mxu0 0.0
  %1582 = vmatprep.subr.mxu0 %v1546
  %1583 = vmatpush1.msra.mxu0 %v1545
  %1584 = vmatprep.subr.mxu0 0.0
  %1585 = vmatpush2.msra.mxu0 0.0
  %1586 = vmatprep.subr.mxu0 0.0
  %1587 = vmatpush2.msra.mxu0 0.0
  %1588 = vmatprep.subr.mxu0 0.0
  %1589 = vmatpush2.msra.mxu0 0.0
  %1590 = vmatprep.subr.mxu0 0.0
  %1591 = vmatpush2.msra.mxu0 0.0
  %1592 = vmatprep.subr.mxu0 0.0
  %1593 = vmatpush2.msra.mxu0 0.0
  %1594 = vmatprep.subr.mxu0 0.0
  %1595 = vmatpush2.msra.mxu0 0.0
  %1596 = vmatprep.subr.mxu0 0.0
  %1597 = vmatpush2.msra.mxu0 0.0
  %1598 = vmatprep.subr.mxu0 0.0
  %1599 = vmatpush2.msra.mxu0 0.0
  %1600 = vmatprep.subr.mxu0 0.0
  %1601 = vmatpush2.msra.mxu0 0.0
  %1602 = vmatprep.subr.mxu0 0.0
  %1603 = vmatpush2.msra.mxu0 0.0
  %1604 = vmatprep.subr.mxu0 0.0
  %1605 = vmatpush2.msra.mxu0 0.0
  %1606 = vmatprep.subr.mxu0 0.0
  %1607 = vmatpush2.msra.mxu0 0.0
  %1608 = vmatprep.subr.mxu0 0.0
  %1609 = vmatpush2.msra.mxu0 0.0
  %1610 = vmatprep.subr.mxu0 0.0
  %1611 = vmatpush2.msra.mxu0 0.0
  %1612 = vmatprep.subr.mxu0 0.0
  %1613 = vmatpush2.msra.mxu0 0.0
  %1614 = vmatprep.subr.mxu0 0.0
  %1615 = vmatpush2.msra.mxu0 0.0
  %1616 = vmatprep.mubr.f32.mxu0 0.0
  %1617 = vmatmul.mubr.f32.gmra.mxu0 %v1550
  %v1618 = vpop.f32.mrf.mxu0
  %v1619 = vadd.f32 0.0, %v1618
  %v1620 = vpop.f32.mrf.mxu0
  %v1621 = vadd.f32 0.0, %v1620
  %1622 = vdwg.mxu0
  %v1623 = vadd.f32 %v1537, %v1619
  %v1624 = vadd.f32 %v1538, %v1621
  %s1625 = scalar_lea.vmem %s2, 8
  %v1626 = vld [vmem:[%s1625] sm:$0xff]
  %1628 = vset.pattern.permute.xlu0 0
  %1629 = vperm.xlu0 %1628, %v1626
  %v1630 = vpop.permute.xlu0 %1629
  %v1632 = vadd.f32 %v1623, %v1630
  %v1633 = vadd.f32 %v1624, %v1630
  %v1634 = vadd.f32 %v1632, %v81
  %v1635 = vadd.f32 %v1633, %v82
  %1636 = vrot.lane.b32.xlu0 %v1634, 17
  %v1637 = vpop.permute.xlu0 %1636
  %1638 = vrot.lane.b32.xlu0 %v1635, 17
  %v1639 = vpop.permute.xlu0 %1638
  %v1640 = vsel %vm87, %v1637, %v1639
  %v1641 = vsel %vm87, %v1639, %v1637
  %v1642 = vsel %vm31, %v1641, 0.0
  %v1643 = vsel %vm32, %v1640, 0.0
  %s1644 = scalar_lea.vmem %s1, 144
  %v1645 = vld [vmem:[%s1644] sm:$0xff]
  %1646 = vrot.lane.b32.xlu0 %v1634, 16
  %v1647 = vpop.permute.xlu0 %1646
  %1648 = vrot.lane.b32.xlu0 %v1635, 16
  %v1649 = vpop.permute.xlu0 %1648
  %v1650 = vsel %vm97, %v1647, %v1649
  %v1651 = vsel %vm97, %v1649, %v1647
  %v1652 = vsel %vm39, %v1651, 0.0
  %v1653 = vsel %vm40, %v1650, 0.0
  %s1654 = scalar_lea.vmem %s1, 152
  %v1655 = vld [vmem:[%s1654] sm:$0xff]
  %v1657 = vsel %vm104, %v1655, 0
  %1659 = vmatprep.subr.mxu0 0.0
  %1660 = vmatpush1.msra.mxu0 0.0
  %1661 = vmatprep.subr.mxu0 0.0
  %1662 = vmatpush1.msra.mxu0 0.0
  %1663 = vmatprep.subr.mxu0 0.0
  %1664 = vmatpush1.msra.mxu0 0.0
  %1665 = vmatprep.subr.mxu0 0.0
  %1666 = vmatpush1.msra.mxu0 0.0
  %1667 = vmatprep.subr.mxu0 0.0
  %1668 = vmatpush1.msra.mxu0 0.0
  %1669 = vmatprep.subr.mxu0 0.0
  %1670 = vmatpush1.msra.mxu0 0.0
  %1671 = vmatprep.subr.mxu0 0.0
  %1672 = vmatpush1.msra.mxu0 0.0
  %1673 = vmatprep.subr.mxu0 0.0
  %1674 = vmatpush1.msra.mxu0 0.0
  %1675 = vmatprep.subr.mxu0 0.0
  %1676 = vmatpush1.msra.mxu0 0.0
  %1677 = vmatprep.subr.mxu0 0.0
  %1678 = vmatpush1.msra.mxu0 0.0
  %1679 = vmatprep.subr.mxu0 0.0
  %1680 = vmatpush1.msra.mxu0 0.0
  %1681 = vmatprep.subr.mxu0 0.0
  %1682 = vmatpush1.msra.mxu0 0.0
  %1683 = vmatprep.subr.mxu0 0.0
  %1684 = vmatpush1.msra.mxu0 0.0
  %1685 = vmatprep.subr.mxu0 0.0
  %1686 = vmatpush1.msra.mxu0 0.0
  %1687 = vmatprep.subr.mxu0 0.0
  %1688 = vmatpush1.msra.mxu0 0.0
  %1689 = vmatprep.subr.mxu0 %v1653
  %1690 = vmatpush1.msra.mxu0 %v1652
  %1691 = vmatprep.subr.mxu0 0.0
  %1692 = vmatpush2.msra.mxu0 0.0
  %1693 = vmatprep.subr.mxu0 0.0
  %1694 = vmatpush2.msra.mxu0 0.0
  %1695 = vmatprep.subr.mxu0 0.0
  %1696 = vmatpush2.msra.mxu0 0.0
  %1697 = vmatprep.subr.mxu0 0.0
  %1698 = vmatpush2.msra.mxu0 0.0
  %1699 = vmatprep.subr.mxu0 0.0
  %1700 = vmatpush2.msra.mxu0 0.0
  %1701 = vmatprep.subr.mxu0 0.0
  %1702 = vmatpush2.msra.mxu0 0.0
  %1703 = vmatprep.subr.mxu0 0.0
  %1704 = vmatpush2.msra.mxu0 0.0
  %1705 = vmatprep.subr.mxu0 0.0
  %1706 = vmatpush2.msra.mxu0 0.0
  %1707 = vmatprep.subr.mxu0 0.0
  %1708 = vmatpush2.msra.mxu0 0.0
  %1709 = vmatprep.subr.mxu0 0.0
  %1710 = vmatpush2.msra.mxu0 0.0
  %1711 = vmatprep.subr.mxu0 0.0
  %1712 = vmatpush2.msra.mxu0 0.0
  %1713 = vmatprep.subr.mxu0 0.0
  %1714 = vmatpush2.msra.mxu0 0.0
  %1715 = vmatprep.subr.mxu0 0.0
  %1716 = vmatpush2.msra.mxu0 0.0
  %1717 = vmatprep.subr.mxu0 0.0
  %1718 = vmatpush2.msra.mxu0 0.0
  %1719 = vmatprep.subr.mxu0 0.0
  %1720 = vmatpush2.msra.mxu0 0.0
  %1721 = vmatprep.subr.mxu0 0.0
  %1722 = vmatpush2.msra.mxu0 0.0
  %1723 = vmatprep.mubr.f32.mxu0 0.0
  %1724 = vmatmul.mubr.f32.gmra.mxu0 %v1657
  %v1725 = vpop.f32.mrf.mxu0
  %v1726 = vadd.f32 0.0, %v1725
  %v1727 = vpop.f32.mrf.mxu0
  %v1728 = vadd.f32 0.0, %v1727
  %1729 = vdwg.mxu0
  %v1731 = vsel %vm104, %v1645, 0
  %1733 = vmatprep.subr.mxu0 0.0
  %1734 = vmatpush1.msra.mxu0 0.0
  %1735 = vmatprep.subr.mxu0 0.0
  %1736 = vmatpush1.msra.mxu0 0.0
  %1737 = vmatprep.subr.mxu0 0.0
  %1738 = vmatpush1.msra.mxu0 0.0
  %1739 = vmatprep.subr.mxu0 0.0
  %1740 = vmatpush1.msra.mxu0 0.0
  %1741 = vmatprep.subr.mxu0 0.0
  %1742 = vmatpush1.msra.mxu0 0.0
  %1743 = vmatprep.subr.mxu0 0.0
  %1744 = vmatpush1.msra.mxu0 0.0
  %1745 = vmatprep.subr.mxu0 0.0
  %1746 = vmatpush1.msra.mxu0 0.0
  %1747 = vmatprep.subr.mxu0 0.0
  %1748 = vmatpush1.msra.mxu0 0.0
  %1749 = vmatprep.subr.mxu0 0.0
  %1750 = vmatpush1.msra.mxu0 0.0
  %1751 = vmatprep.subr.mxu0 0.0
  %1752 = vmatpush1.msra.mxu0 0.0
  %1753 = vmatprep.subr.mxu0 0.0
  %1754 = vmatpush1.msra.mxu0 0.0
  %1755 = vmatprep.subr.mxu0 0.0
  %1756 = vmatpush1.msra.mxu0 0.0
  %1757 = vmatprep.subr.mxu0 0.0
  %1758 = vmatpush1.msra.mxu0 0.0
  %1759 = vmatprep.subr.mxu0 0.0
  %1760 = vmatpush1.msra.mxu0 0.0
  %1761 = vmatprep.subr.mxu0 0.0
  %1762 = vmatpush1.msra.mxu0 0.0
  %1763 = vmatprep.subr.mxu0 %v1643
  %1764 = vmatpush1.msra.mxu0 %v1642
  %1765 = vmatprep.subr.mxu0 0.0
  %1766 = vmatpush2.msra.mxu0 0.0
  %1767 = vmatprep.subr.mxu0 0.0
  %1768 = vmatpush2.msra.mxu0 0.0
  %1769 = vmatprep.subr.mxu0 0.0
  %1770 = vmatpush2.msra.mxu0 0.0
  %1771 = vmatprep.subr.mxu0 0.0
  %1772 = vmatpush2.msra.mxu0 0.0
  %1773 = vmatprep.subr.mxu0 0.0
  %1774 = vmatpush2.msra.mxu0 0.0
  %1775 = vmatprep.subr.mxu0 0.0
  %1776 = vmatpush2.msra.mxu0 0.0
  %1777 = vmatprep.subr.mxu0 0.0
  %1778 = vmatpush2.msra.mxu0 0.0
  %1779 = vmatprep.subr.mxu0 0.0
  %1780 = vmatpush2.msra.mxu0 0.0
  %1781 = vmatprep.subr.mxu0 0.0
  %1782 = vmatpush2.msra.mxu0 0.0
  %1783 = vmatprep.subr.mxu0 0.0
  %1784 = vmatpush2.msra.mxu0 0.0
  %1785 = vmatprep.subr.mxu0 0.0
  %1786 = vmatpush2.msra.mxu0 0.0
  %1787 = vmatprep.subr.mxu0 0.0
  %1788 = vmatpush2.msra.mxu0 0.0
  %1789 = vmatprep.subr.mxu0 0.0
  %1790 = vmatpush2.msra.mxu0 0.0
  %1791 = vmatprep.subr.mxu0 0.0
  %1792 = vmatpush2.msra.mxu0 0.0
  %1793 = vmatprep.subr.mxu0 0.0
  %1794 = vmatpush2.msra.mxu0 0.0
  %1795 = vmatprep.subr.mxu0 0.0
  %1796 = vmatpush2.msra.mxu0 0.0
  %1797 = vmatprep.mubr.f32.mxu0 0.0
  %1798 = vmatmul.mubr.f32.gmra.mxu0 %v1731
  %v1799 = vpop.f32.mrf.mxu0
  %v1800 = vadd.f32 %v1726, %v1799
  %v1801 = vpop.f32.mrf.mxu0
  %v1802 = vadd.f32 %v1728, %v1801
  %1803 = vdwg.mxu0
  %1804 = vrot.lane.b32.xlu0 %v1634, 15
  %v1805 = vpop.permute.xlu0 %1804
  %1806 = vrot.lane.b32.xlu0 %v1635, 15
  %v1807 = vpop.permute.xlu0 %1806
  %v1808 = vsel %vm257, %v1805, %v1807
  %v1809 = vsel %vm257, %v1807, %v1805
  %v1810 = vsel %vm47, %v1809, 0.0
  %v1811 = vsel %vm48, %v1808, 0.0
  %s1812 = scalar_lea.vmem %s1, 160
  %v1813 = vld [vmem:[%s1812] sm:$0xff]
  %v1815 = vsel %vm104, %v1813, 0
  %1817 = vmatprep.subr.mxu0 0.0
  %1818 = vmatpush1.msra.mxu0 0.0
  %1819 = vmatprep.subr.mxu0 0.0
  %1820 = vmatpush1.msra.mxu0 0.0
  %1821 = vmatprep.subr.mxu0 0.0
  %1822 = vmatpush1.msra.mxu0 0.0
  %1823 = vmatprep.subr.mxu0 0.0
  %1824 = vmatpush1.msra.mxu0 0.0
  %1825 = vmatprep.subr.mxu0 0.0
  %1826 = vmatpush1.msra.mxu0 0.0
  %1827 = vmatprep.subr.mxu0 0.0
  %1828 = vmatpush1.msra.mxu0 0.0
  %1829 = vmatprep.subr.mxu0 0.0
  %1830 = vmatpush1.msra.mxu0 0.0
  %1831 = vmatprep.subr.mxu0 0.0
  %1832 = vmatpush1.msra.mxu0 0.0
  %1833 = vmatprep.subr.mxu0 0.0
  %1834 = vmatpush1.msra.mxu0 0.0
  %1835 = vmatprep.subr.mxu0 0.0
  %1836 = vmatpush1.msra.mxu0 0.0
  %1837 = vmatprep.subr.mxu0 0.0
  %1838 = vmatpush1.msra.mxu0 0.0
  %1839 = vmatprep.subr.mxu0 0.0
  %1840 = vmatpush1.msra.mxu0 0.0
  %1841 = vmatprep.subr.mxu0 0.0
  %1842 = vmatpush1.msra.mxu0 0.0
  %1843 = vmatprep.subr.mxu0 0.0
  %1844 = vmatpush1.msra.mxu0 0.0
  %1845 = vmatprep.subr.mxu0 0.0
  %1846 = vmatpush1.msra.mxu0 0.0
  %1847 = vmatprep.subr.mxu0 %v1811
  %1848 = vmatpush1.msra.mxu0 %v1810
  %1849 = vmatprep.subr.mxu0 0.0
  %1850 = vmatpush2.msra.mxu0 0.0
  %1851 = vmatprep.subr.mxu0 0.0
  %1852 = vmatpush2.msra.mxu0 0.0
  %1853 = vmatprep.subr.mxu0 0.0
  %1854 = vmatpush2.msra.mxu0 0.0
  %1855 = vmatprep.subr.mxu0 0.0
  %1856 = vmatpush2.msra.mxu0 0.0
  %1857 = vmatprep.subr.mxu0 0.0
  %1858 = vmatpush2.msra.mxu0 0.0
  %1859 = vmatprep.subr.mxu0 0.0
  %1860 = vmatpush2.msra.mxu0 0.0
  %1861 = vmatprep.subr.mxu0 0.0
  %1862 = vmatpush2.msra.mxu0 0.0
  %1863 = vmatprep.subr.mxu0 0.0
  %1864 = vmatpush2.msra.mxu0 0.0
  %1865 = vmatprep.subr.mxu0 0.0
  %1866 = vmatpush2.msra.mxu0 0.0
  %1867 = vmatprep.subr.mxu0 0.0
  %1868 = vmatpush2.msra.mxu0 0.0
  %1869 = vmatprep.subr.mxu0 0.0
  %1870 = vmatpush2.msra.mxu0 0.0
  %1871 = vmatprep.subr.mxu0 0.0
  %1872 = vmatpush2.msra.mxu0 0.0
  %1873 = vmatprep.subr.mxu0 0.0
  %1874 = vmatpush2.msra.mxu0 0.0
  %1875 = vmatprep.subr.mxu0 0.0
  %1876 = vmatpush2.msra.mxu0 0.0
  %1877 = vmatprep.subr.mxu0 0.0
  %1878 = vmatpush2.msra.mxu0 0.0
  %1879 = vmatprep.subr.mxu0 0.0
  %1880 = vmatpush2.msra.mxu0 0.0
  %1881 = vmatprep.mubr.f32.mxu0 0.0
  %1882 = vmatmul.mubr.f32.gmra.mxu0 %v1815
  %v1883 = vpop.f32.mrf.mxu0
  %v1884 = vadd.f32 0.0, %v1883
  %v1885 = vpop.f32.mrf.mxu0
  %v1886 = vadd.f32 0.0, %v1885
  %1887 = vdwg.mxu0
  %v1888 = vadd.f32 %v1800, %v1884
  %v1889 = vadd.f32 %v1802, %v1886
  %1890 = vrot.lane.b32.xlu0 %v1634, 1
  %v1891 = vpop.permute.xlu0 %1890
  %1892 = vrot.lane.b32.xlu0 %v1635, 1
  %v1893 = vpop.permute.xlu0 %1892
  %v1894 = vsel %vm344, %v1891, %v1893
  %v1895 = vsel %vm344, %v1893, %v1891
  %v1896 = vsel %vm57, %v1895, 0.0
  %v1897 = vsel %vm58, %v1894, 0.0
  %s1898 = scalar_lea.vmem %s1, 168
  %v1899 = vld [vmem:[%s1898] sm:$0xff]
  %v1901 = vsel %vm104, %v1899, 0
  %1903 = vmatprep.subr.mxu0 0.0
  %1904 = vmatpush1.msra.mxu0 0.0
  %1905 = vmatprep.subr.mxu0 0.0
  %1906 = vmatpush1.msra.mxu0 0.0
  %1907 = vmatprep.subr.mxu0 0.0
  %1908 = vmatpush1.msra.mxu0 0.0
  %1909 = vmatprep.subr.mxu0 0.0
  %1910 = vmatpush1.msra.mxu0 0.0
  %1911 = vmatprep.subr.mxu0 0.0
  %1912 = vmatpush1.msra.mxu0 0.0
  %1913 = vmatprep.subr.mxu0 0.0
  %1914 = vmatpush1.msra.mxu0 0.0
  %1915 = vmatprep.subr.mxu0 0.0
  %1916 = vmatpush1.msra.mxu0 0.0
  %1917 = vmatprep.subr.mxu0 0.0
  %1918 = vmatpush1.msra.mxu0 0.0
  %1919 = vmatprep.subr.mxu0 0.0
  %1920 = vmatpush1.msra.mxu0 0.0
  %1921 = vmatprep.subr.mxu0 0.0
  %1922 = vmatpush1.msra.mxu0 0.0
  %1923 = vmatprep.subr.mxu0 0.0
  %1924 = vmatpush1.msra.mxu0 0.0
  %1925 = vmatprep.subr.mxu0 0.0
  %1926 = vmatpush1.msra.mxu0 0.0
  %1927 = vmatprep.subr.mxu0 0.0
  %1928 = vmatpush1.msra.mxu0 0.0
  %1929 = vmatprep.subr.mxu0 0.0
  %1930 = vmatpush1.msra.mxu0 0.0
  %1931 = vmatprep.subr.mxu0 0.0
  %1932 = vmatpush1.msra.mxu0 0.0
  %1933 = vmatprep.subr.mxu0 %v1897
  %1934 = vmatpush1.msra.mxu0 %v1896
  %1935 = vmatprep.subr.mxu0 0.0
  %1936 = vmatpush2.msra.mxu0 0.0
  %1937 = vmatprep.subr.mxu0 0.0
  %1938 = vmatpush2.msra.mxu0 0.0
  %1939 = vmatprep.subr.mxu0 0.0
  %1940 = vmatpush2.msra.mxu0 0.0
  %1941 = vmatprep.subr.mxu0 0.0
  %1942 = vmatpush2.msra.mxu0 0.0
  %1943 = vmatprep.subr.mxu0 0.0
  %1944 = vmatpush2.msra.mxu0 0.0
  %1945 = vmatprep.subr.mxu0 0.0
  %1946 = vmatpush2.msra.mxu0 0.0
  %1947 = vmatprep.subr.mxu0 0.0
  %1948 = vmatpush2.msra.mxu0 0.0
  %1949 = vmatprep.subr.mxu0 0.0
  %1950 = vmatpush2.msra.mxu0 0.0
  %1951 = vmatprep.subr.mxu0 0.0
  %1952 = vmatpush2.msra.mxu0 0.0
  %1953 = vmatprep.subr.mxu0 0.0
  %1954 = vmatpush2.msra.mxu0 0.0
  %1955 = vmatprep.subr.mxu0 0.0
  %1956 = vmatpush2.msra.mxu0 0.0
  %1957 = vmatprep.subr.mxu0 0.0
  %1958 = vmatpush2.msra.mxu0 0.0
  %1959 = vmatprep.subr.mxu0 0.0
  %1960 = vmatpush2.msra.mxu0 0.0
  %1961 = vmatprep.subr.mxu0 0.0
  %1962 = vmatpush2.msra.mxu0 0.0
  %1963 = vmatprep.subr.mxu0 0.0
  %1964 = vmatpush2.msra.mxu0 0.0
  %1965 = vmatprep.subr.mxu0 0.0
  %1966 = vmatpush2.msra.mxu0 0.0
  %1967 = vmatprep.mubr.f32.mxu0 0.0
  %1968 = vmatmul.mubr.f32.gmra.mxu0 %v1901
  %v1969 = vpop.f32.mrf.mxu0
  %v1970 = vadd.f32 0.0, %v1969
  %v1971 = vpop.f32.mrf.mxu0
  %v1972 = vadd.f32 0.0, %v1971
  %1973 = vdwg.mxu0
  %v1974 = vadd.f32 %v1888, %v1970
  %v1975 = vadd.f32 %v1889, %v1972
  %s1976 = scalar_lea.vmem %s1, 176
  %v1977 = vld [vmem:[%s1976] sm:$0xff]
  %v1979 = vsel %vm104, %v1977, 0
  %1981 = vmatprep.subr.mxu0 0.0
  %1982 = vmatpush1.msra.mxu0 0.0
  %1983 = vmatprep.subr.mxu0 0.0
  %1984 = vmatpush1.msra.mxu0 0.0
  %1985 = vmatprep.subr.mxu0 0.0
  %1986 = vmatpush1.msra.mxu0 0.0
  %1987 = vmatprep.subr.mxu0 0.0
  %1988 = vmatpush1.msra.mxu0 0.0
  %1989 = vmatprep.subr.mxu0 0.0
  %1990 = vmatpush1.msra.mxu0 0.0
  %1991 = vmatprep.subr.mxu0 0.0
  %1992 = vmatpush1.msra.mxu0 0.0
  %1993 = vmatprep.subr.mxu0 0.0
  %1994 = vmatpush1.msra.mxu0 0.0
  %1995 = vmatprep.subr.mxu0 0.0
  %1996 = vmatpush1.msra.mxu0 0.0
  %1997 = vmatprep.subr.mxu0 0.0
  %1998 = vmatpush1.msra.mxu0 0.0
  %1999 = vmatprep.subr.mxu0 0.0
  %2000 = vmatpush1.msra.mxu0 0.0
  %2001 = vmatprep.subr.mxu0 0.0
  %2002 = vmatpush1.msra.mxu0 0.0
  %2003 = vmatprep.subr.mxu0 0.0
  %2004 = vmatpush1.msra.mxu0 0.0
  %2005 = vmatprep.subr.mxu0 0.0
  %2006 = vmatpush1.msra.mxu0 0.0
  %2007 = vmatprep.subr.mxu0 0.0
  %2008 = vmatpush1.msra.mxu0 0.0
  %2009 = vmatprep.subr.mxu0 0.0
  %2010 = vmatpush1.msra.mxu0 0.0
  %2011 = vmatprep.subr.mxu0 %v1635
  %2012 = vmatpush1.msra.mxu0 %v1634
  %2013 = vmatprep.subr.mxu0 0.0
  %2014 = vmatpush2.msra.mxu0 0.0
  %2015 = vmatprep.subr.mxu0 0.0
  %2016 = vmatpush2.msra.mxu0 0.0
  %2017 = vmatprep.subr.mxu0 0.0
  %2018 = vmatpush2.msra.mxu0 0.0
  %2019 = vmatprep.subr.mxu0 0.0
  %2020 = vmatpush2.msra.mxu0 0.0
  %2021 = vmatprep.subr.mxu0 0.0
  %2022 = vmatpush2.msra.mxu0 0.0
  %2023 = vmatprep.subr.mxu0 0.0
  %2024 = vmatpush2.msra.mxu0 0.0
  %2025 = vmatprep.subr.mxu0 0.0
  %2026 = vmatpush2.msra.mxu0 0.0
  %2027 = vmatprep.subr.mxu0 0.0
  %2028 = vmatpush2.msra.mxu0 0.0
  %2029 = vmatprep.subr.mxu0 0.0
  %2030 = vmatpush2.msra.mxu0 0.0
  %2031 = vmatprep.subr.mxu0 0.0
  %2032 = vmatpush2.msra.mxu0 0.0
  %2033 = vmatprep.subr.mxu0 0.0
  %2034 = vmatpush2.msra.mxu0 0.0
  %2035 = vmatprep.subr.mxu0 0.0
  %2036 = vmatpush2.msra.mxu0 0.0
  %2037 = vmatprep.subr.mxu0 0.0
  %2038 = vmatpush2.msra.mxu0 0.0
  %2039 = vmatprep.subr.mxu0 0.0
  %2040 = vmatpush2.msra.mxu0 0.0
  %2041 = vmatprep.subr.mxu0 0.0
  %2042 = vmatpush2.msra.mxu0 0.0
  %2043 = vmatprep.subr.mxu0 0.0
  %2044 = vmatpush2.msra.mxu0 0.0
  %2045 = vmatprep.mubr.f32.mxu0 0.0
  %2046 = vmatmul.mubr.f32.gmra.mxu0 %v1979
  %v2047 = vpop.f32.mrf.mxu0
  %v2048 = vadd.f32 0.0, %v2047
  %v2049 = vpop.f32.mrf.mxu0
  %v2050 = vadd.f32 0.0, %v2049
  %2051 = vdwg.mxu0
  %v2052 = vadd.f32 %v1974, %v2048
  %v2053 = vadd.f32 %v1975, %v2050
  %2054 = vrot.lane.b32.xlu0 %v1634, 127
  %v2055 = vpop.permute.xlu0 %2054
  %2056 = vrot.lane.b32.xlu0 %v1635, 127
  %v2057 = vpop.permute.xlu0 %2056
  %v2058 = vsel %vm509, %v2055, %v2057
  %v2059 = vsel %vm509, %v2057, %v2055
  %v2060 = vsel %vm61, %v2058, 0.0
  %v2061 = vsel %vm62, %v2059, 0.0
  %s2062 = scalar_lea.vmem %s1, 184
  %v2063 = vld [vmem:[%s2062] sm:$0xff]
  %v2065 = vsel %vm104, %v2063, 0
  %2067 = vmatprep.subr.mxu0 0.0
  %2068 = vmatpush1.msra.mxu0 0.0
  %2069 = vmatprep.subr.mxu0 0.0
  %2070 = vmatpush1.msra.mxu0 0.0
  %2071 = vmatprep.subr.mxu0 0.0
  %2072 = vmatpush1.msra.mxu0 0.0
  %2073 = vmatprep.subr.mxu0 0.0
  %2074 = vmatpush1.msra.mxu0 0.0
  %2075 = vmatprep.subr.mxu0 0.0
  %2076 = vmatpush1.msra.mxu0 0.0
  %2077 = vmatprep.subr.mxu0 0.0
  %2078 = vmatpush1.msra.mxu0 0.0
  %2079 = vmatprep.subr.mxu0 0.0
  %2080 = vmatpush1.msra.mxu0 0.0
  %2081 = vmatprep.subr.mxu0 0.0
  %2082 = vmatpush1.msra.mxu0 0.0
  %2083 = vmatprep.subr.mxu0 0.0
  %2084 = vmatpush1.msra.mxu0 0.0
  %2085 = vmatprep.subr.mxu0 0.0
  %2086 = vmatpush1.msra.mxu0 0.0
  %2087 = vmatprep.subr.mxu0 0.0
  %2088 = vmatpush1.msra.mxu0 0.0
  %2089 = vmatprep.subr.mxu0 0.0
  %2090 = vmatpush1.msra.mxu0 0.0
  %2091 = vmatprep.subr.mxu0 0.0
  %2092 = vmatpush1.msra.mxu0 0.0
  %2093 = vmatprep.subr.mxu0 0.0
  %2094 = vmatpush1.msra.mxu0 0.0
  %2095 = vmatprep.subr.mxu0 0.0
  %2096 = vmatpush1.msra.mxu0 0.0
  %2097 = vmatprep.subr.mxu0 %v2061
  %2098 = vmatpush1.msra.mxu0 %v2060
  %2099 = vmatprep.subr.mxu0 0.0
  %2100 = vmatpush2.msra.mxu0 0.0
  %2101 = vmatprep.subr.mxu0 0.0
  %2102 = vmatpush2.msra.mxu0 0.0
  %2103 = vmatprep.subr.mxu0 0.0
  %2104 = vmatpush2.msra.mxu0 0.0
  %2105 = vmatprep.subr.mxu0 0.0
  %2106 = vmatpush2.msra.mxu0 0.0
  %2107 = vmatprep.subr.mxu0 0.0
  %2108 = vmatpush2.msra.mxu0 0.0
  %2109 = vmatprep.subr.mxu0 0.0
  %2110 = vmatpush2.msra.mxu0 0.0
  %2111 = vmatprep.subr.mxu0 0.0
  %2112 = vmatpush2.msra.mxu0 0.0
  %2113 = vmatprep.subr.mxu0 0.0
  %2114 = vmatpush2.msra.mxu0 0.0
  %2115 = vmatprep.subr.mxu0 0.0
  %2116 = vmatpush2.msra.mxu0 0.0
  %2117 = vmatprep.subr.mxu0 0.0
  %2118 = vmatpush2.msra.mxu0 0.0
  %2119 = vmatprep.subr.mxu0 0.0
  %2120 = vmatpush2.msra.mxu0 0.0
  %2121 = vmatprep.subr.mxu0 0.0
  %2122 = vmatpush2.msra.mxu0 0.0
  %2123 = vmatprep.subr.mxu0 0.0
  %2124 = vmatpush2.msra.mxu0 0.0
  %2125 = vmatprep.subr.mxu0 0.0
  %2126 = vmatpush2.msra.mxu0 0.0
  %2127 = vmatprep.subr.mxu0 0.0
  %2128 = vmatpush2.msra.mxu0 0.0
  %2129 = vmatprep.subr.mxu0 0.0
  %2130 = vmatpush2.msra.mxu0 0.0
  %2131 = vmatprep.mubr.f32.mxu0 0.0
  %2132 = vmatmul.mubr.f32.gmra.mxu0 %v2065
  %v2133 = vpop.f32.mrf.mxu0
  %v2134 = vadd.f32 0.0, %v2133
  %v2135 = vpop.f32.mrf.mxu0
  %v2136 = vadd.f32 0.0, %v2135
  %2137 = vdwg.mxu0
  %v2138 = vadd.f32 %v2052, %v2134
  %v2139 = vadd.f32 %v2053, %v2136
  %2140 = vrot.lane.b32.xlu0 %v1634, 113
  %v2141 = vpop.permute.xlu0 %2140
  %2142 = vrot.lane.b32.xlu0 %v1635, 113
  %v2143 = vpop.permute.xlu0 %2142
  %v2144 = vsel %vm596, %v2141, %v2143
  %v2145 = vsel %vm596, %v2143, %v2141
  %v2146 = vsel %vm71, %v2144, 0.0
  %v2147 = vsel %vm72, %v2145, 0.0
  %s2148 = scalar_lea.vmem %s1, 192
  %v2149 = vld [vmem:[%s2148] sm:$0xff]
  %v2151 = vsel %vm104, %v2149, 0
  %2153 = vmatprep.subr.mxu0 0.0
  %2154 = vmatpush1.msra.mxu0 0.0
  %2155 = vmatprep.subr.mxu0 0.0
  %2156 = vmatpush1.msra.mxu0 0.0
  %2157 = vmatprep.subr.mxu0 0.0
  %2158 = vmatpush1.msra.mxu0 0.0
  %2159 = vmatprep.subr.mxu0 0.0
  %2160 = vmatpush1.msra.mxu0 0.0
  %2161 = vmatprep.subr.mxu0 0.0
  %2162 = vmatpush1.msra.mxu0 0.0
  %2163 = vmatprep.subr.mxu0 0.0
  %2164 = vmatpush1.msra.mxu0 0.0
  %2165 = vmatprep.subr.mxu0 0.0
  %2166 = vmatpush1.msra.mxu0 0.0
  %2167 = vmatprep.subr.mxu0 0.0
  %2168 = vmatpush1.msra.mxu0 0.0
  %2169 = vmatprep.subr.mxu0 0.0
  %2170 = vmatpush1.msra.mxu0 0.0
  %2171 = vmatprep.subr.mxu0 0.0
  %2172 = vmatpush1.msra.mxu0 0.0
  %2173 = vmatprep.subr.mxu0 0.0
  %2174 = vmatpush1.msra.mxu0 0.0
  %2175 = vmatprep.subr.mxu0 0.0
  %2176 = vmatpush1.msra.mxu0 0.0
  %2177 = vmatprep.subr.mxu0 0.0
  %2178 = vmatpush1.msra.mxu0 0.0
  %2179 = vmatprep.subr.mxu0 0.0
  %2180 = vmatpush1.msra.mxu0 0.0
  %2181 = vmatprep.subr.mxu0 0.0
  %2182 = vmatpush1.msra.mxu0 0.0
  %2183 = vmatprep.subr.mxu0 %v2147
  %2184 = vmatpush1.msra.mxu0 %v2146
  %2185 = vmatprep.subr.mxu0 0.0
  %2186 = vmatpush2.msra.mxu0 0.0
  %2187 = vmatprep.subr.mxu0 0.0
  %2188 = vmatpush2.msra.mxu0 0.0
  %2189 = vmatprep.subr.mxu0 0.0
  %2190 = vmatpush2.msra.mxu0 0.0
  %2191 = vmatprep.subr.mxu0 0.0
  %2192 = vmatpush2.msra.mxu0 0.0
  %2193 = vmatprep.subr.mxu0 0.0
  %2194 = vmatpush2.msra.mxu0 0.0
  %2195 = vmatprep.subr.mxu0 0.0
  %2196 = vmatpush2.msra.mxu0 0.0
  %2197 = vmatprep.subr.mxu0 0.0
  %2198 = vmatpush2.msra.mxu0 0.0
  %2199 = vmatprep.subr.mxu0 0.0
  %2200 = vmatpush2.msra.mxu0 0.0
  %2201 = vmatprep.subr.mxu0 0.0
  %2202 = vmatpush2.msra.mxu0 0.0
  %2203 = vmatprep.subr.mxu0 0.0
  %2204 = vmatpush2.msra.mxu0 0.0
  %2205 = vmatprep.subr.mxu0 0.0
  %2206 = vmatpush2.msra.mxu0 0.0
  %2207 = vmatprep.subr.mxu0 0.0
  %2208 = vmatpush2.msra.mxu0 0.0
  %2209 = vmatprep.subr.mxu0 0.0
  %2210 = vmatpush2.msra.mxu0 0.0
  %2211 = vmatprep.subr.mxu0 0.0
  %2212 = vmatpush2.msra.mxu0 0.0
  %2213 = vmatprep.subr.mxu0 0.0
  %2214 = vmatpush2.msra.mxu0 0.0
  %2215 = vmatprep.subr.mxu0 0.0
  %2216 = vmatpush2.msra.mxu0 0.0
  %2217 = vmatprep.mubr.f32.mxu0 0.0
  %2218 = vmatmul.mubr.f32.gmra.mxu0 %v2151
  %v2219 = vpop.f32.mrf.mxu0
  %v2220 = vadd.f32 0.0, %v2219
  %v2221 = vpop.f32.mrf.mxu0
  %v2222 = vadd.f32 0.0, %v2221
  %2223 = vdwg.mxu0
  %v2224 = vadd.f32 %v2138, %v2220
  %v2225 = vadd.f32 %v2139, %v2222
  %2226 = vrot.lane.b32.xlu0 %v1634, 112
  %v2227 = vpop.permute.xlu0 %2226
  %2228 = vrot.lane.b32.xlu0 %v1635, 112
  %v2229 = vpop.permute.xlu0 %2228
  %v2230 = vsel %vm683, %v2227, %v2229
  %v2231 = vsel %vm683, %v2229, %v2227
  %v2232 = vsel %vm75, %v2230, 0.0
  %v2233 = vsel %vm76, %v2231, 0.0
  %s2234 = scalar_lea.vmem %s1, 200
  %v2235 = vld [vmem:[%s2234] sm:$0xff]
  %v2237 = vsel %vm104, %v2235, 0
  %2239 = vmatprep.subr.mxu0 0.0
  %2240 = vmatpush1.msra.mxu0 0.0
  %2241 = vmatprep.subr.mxu0 0.0
  %2242 = vmatpush1.msra.mxu0 0.0
  %2243 = vmatprep.subr.mxu0 0.0
  %2244 = vmatpush1.msra.mxu0 0.0
  %2245 = vmatprep.subr.mxu0 0.0
  %2246 = vmatpush1.msra.mxu0 0.0
  %2247 = vmatprep.subr.mxu0 0.0
  %2248 = vmatpush1.msra.mxu0 0.0
  %2249 = vmatprep.subr.mxu0 0.0
  %2250 = vmatpush1.msra.mxu0 0.0
  %2251 = vmatprep.subr.mxu0 0.0
  %2252 = vmatpush1.msra.mxu0 0.0
  %2253 = vmatprep.subr.mxu0 0.0
  %2254 = vmatpush1.msra.mxu0 0.0
  %2255 = vmatprep.subr.mxu0 0.0
  %2256 = vmatpush1.msra.mxu0 0.0
  %2257 = vmatprep.subr.mxu0 0.0
  %2258 = vmatpush1.msra.mxu0 0.0
  %2259 = vmatprep.subr.mxu0 0.0
  %2260 = vmatpush1.msra.mxu0 0.0
  %2261 = vmatprep.subr.mxu0 0.0
  %2262 = vmatpush1.msra.mxu0 0.0
  %2263 = vmatprep.subr.mxu0 0.0
  %2264 = vmatpush1.msra.mxu0 0.0
  %2265 = vmatprep.subr.mxu0 0.0
  %2266 = vmatpush1.msra.mxu0 0.0
  %2267 = vmatprep.subr.mxu0 0.0
  %2268 = vmatpush1.msra.mxu0 0.0
  %2269 = vmatprep.subr.mxu0 %v2233
  %2270 = vmatpush1.msra.mxu0 %v2232
  %2271 = vmatprep.subr.mxu0 0.0
  %2272 = vmatpush2.msra.mxu0 0.0
  %2273 = vmatprep.subr.mxu0 0.0
  %2274 = vmatpush2.msra.mxu0 0.0
  %2275 = vmatprep.subr.mxu0 0.0
  %2276 = vmatpush2.msra.mxu0 0.0
  %2277 = vmatprep.subr.mxu0 0.0
  %2278 = vmatpush2.msra.mxu0 0.0
  %2279 = vmatprep.subr.mxu0 0.0
  %2280 = vmatpush2.msra.mxu0 0.0
  %2281 = vmatprep.subr.mxu0 0.0
  %2282 = vmatpush2.msra.mxu0 0.0
  %2283 = vmatprep.subr.mxu0 0.0
  %2284 = vmatpush2.msra.mxu0 0.0
  %2285 = vmatprep.subr.mxu0 0.0
  %2286 = vmatpush2.msra.mxu0 0.0
  %2287 = vmatprep.subr.mxu0 0.0
  %2288 = vmatpush2.msra.mxu0 0.0
  %2289 = vmatprep.subr.mxu0 0.0
  %2290 = vmatpush2.msra.mxu0 0.0
  %2291 = vmatprep.subr.mxu0 0.0
  %2292 = vmatpush2.msra.mxu0 0.0
  %2293 = vmatprep.subr.mxu0 0.0
  %2294 = vmatpush2.msra.mxu0 0.0
  %2295 = vmatprep.subr.mxu0 0.0
  %2296 = vmatpush2.msra.mxu0 0.0
  %2297 = vmatprep.subr.mxu0 0.0
  %2298 = vmatpush2.msra.mxu0 0.0
  %2299 = vmatprep.subr.mxu0 0.0
  %2300 = vmatpush2.msra.mxu0 0.0
  %2301 = vmatprep.subr.mxu0 0.0
  %2302 = vmatpush2.msra.mxu0 0.0
  %2303 = vmatprep.mubr.f32.mxu0 0.0
  %2304 = vmatmul.mubr.f32.gmra.mxu0 %v2237
  %v2305 = vpop.f32.mrf.mxu0
  %v2306 = vadd.f32 0.0, %v2305
  %v2307 = vpop.f32.mrf.mxu0
  %v2308 = vadd.f32 0.0, %v2307
  %2309 = vdwg.mxu0
  %v2310 = vadd.f32 %v2224, %v2306
  %v2311 = vadd.f32 %v2225, %v2308
  %2312 = vrot.lane.b32.xlu0 %v1634, 111
  %v2313 = vpop.permute.xlu0 %2312
  %2314 = vrot.lane.b32.xlu0 %v1635, 111
  %v2315 = vpop.permute.xlu0 %2314
  %v2316 = vsel %vm770, %v2313, %v2315
  %v2317 = vsel %vm770, %v2315, %v2313
  %v2318 = vsel %vm79, %v2316, 0.0
  %v2319 = vsel %vm80, %v2317, 0.0
  %s2320 = scalar_lea.vmem %s1, 208
  %v2321 = vld [vmem:[%s2320] sm:$0xff]
  %v2323 = vsel %vm104, %v2321, 0
  %2325 = vmatprep.subr.mxu0 0.0
  %2326 = vmatpush1.msra.mxu0 0.0
  %2327 = vmatprep.subr.mxu0 0.0
  %2328 = vmatpush1.msra.mxu0 0.0
  %2329 = vmatprep.subr.mxu0 0.0
  %2330 = vmatpush1.msra.mxu0 0.0
  %2331 = vmatprep.subr.mxu0 0.0
  %2332 = vmatpush1.msra.mxu0 0.0
  %2333 = vmatprep.subr.mxu0 0.0
  %2334 = vmatpush1.msra.mxu0 0.0
  %2335 = vmatprep.subr.mxu0 0.0
  %2336 = vmatpush1.msra.mxu0 0.0
  %2337 = vmatprep.subr.mxu0 0.0
  %2338 = vmatpush1.msra.mxu0 0.0
  %2339 = vmatprep.subr.mxu0 0.0
  %2340 = vmatpush1.msra.mxu0 0.0
  %2341 = vmatprep.subr.mxu0 0.0
  %2342 = vmatpush1.msra.mxu0 0.0
  %2343 = vmatprep.subr.mxu0 0.0
  %2344 = vmatpush1.msra.mxu0 0.0
  %2345 = vmatprep.subr.mxu0 0.0
  %2346 = vmatpush1.msra.mxu0 0.0
  %2347 = vmatprep.subr.mxu0 0.0
  %2348 = vmatpush1.msra.mxu0 0.0
  %2349 = vmatprep.subr.mxu0 0.0
  %2350 = vmatpush1.msra.mxu0 0.0
  %2351 = vmatprep.subr.mxu0 0.0
  %2352 = vmatpush1.msra.mxu0 0.0
  %2353 = vmatprep.subr.mxu0 0.0
  %2354 = vmatpush1.msra.mxu0 0.0
  %2355 = vmatprep.subr.mxu0 %v2319
  %2356 = vmatpush1.msra.mxu0 %v2318
  %2357 = vmatprep.subr.mxu0 0.0
  %2358 = vmatpush2.msra.mxu0 0.0
  %2359 = vmatprep.subr.mxu0 0.0
  %2360 = vmatpush2.msra.mxu0 0.0
  %2361 = vmatprep.subr.mxu0 0.0
  %2362 = vmatpush2.msra.mxu0 0.0
  %2363 = vmatprep.subr.mxu0 0.0
  %2364 = vmatpush2.msra.mxu0 0.0
  %2365 = vmatprep.subr.mxu0 0.0
  %2366 = vmatpush2.msra.mxu0 0.0
  %2367 = vmatprep.subr.mxu0 0.0
  %2368 = vmatpush2.msra.mxu0 0.0
  %2369 = vmatprep.subr.mxu0 0.0
  %2370 = vmatpush2.msra.mxu0 0.0
  %2371 = vmatprep.subr.mxu0 0.0
  %2372 = vmatpush2.msra.mxu0 0.0
  %2373 = vmatprep.subr.mxu0 0.0
  %2374 = vmatpush2.msra.mxu0 0.0
  %2375 = vmatprep.subr.mxu0 0.0
  %2376 = vmatpush2.msra.mxu0 0.0
  %2377 = vmatprep.subr.mxu0 0.0
  %2378 = vmatpush2.msra.mxu0 0.0
  %2379 = vmatprep.subr.mxu0 0.0
  %2380 = vmatpush2.msra.mxu0 0.0
  %2381 = vmatprep.subr.mxu0 0.0
  %2382 = vmatpush2.msra.mxu0 0.0
  %2383 = vmatprep.subr.mxu0 0.0
  %2384 = vmatpush2.msra.mxu0 0.0
  %2385 = vmatprep.subr.mxu0 0.0
  %2386 = vmatpush2.msra.mxu0 0.0
  %2387 = vmatprep.subr.mxu0 0.0
  %2388 = vmatpush2.msra.mxu0 0.0
  %2389 = vmatprep.mubr.f32.mxu0 0.0
  %2390 = vmatmul.mubr.f32.gmra.mxu0 %v2323
  %v2391 = vpop.f32.mrf.mxu0
  %v2392 = vadd.f32 0.0, %v2391
  %v2393 = vpop.f32.mrf.mxu0
  %v2394 = vadd.f32 0.0, %v2393
  %2395 = vdwg.mxu0
  %v2396 = vadd.f32 %v2310, %v2392
  %v2397 = vadd.f32 %v2311, %v2394
  %s2398 = scalar_lea.vmem %s2, 16
  %v2399 = vld [vmem:[%s2398] sm:$0xff]
  %2401 = vset.pattern.permute.xlu0 0
  %2402 = vperm.xlu0 %2401, %v2399
  %v2403 = vpop.permute.xlu0 %2402
  %v2405 = vadd.f32 %v2396, %v2403
  %v2406 = vadd.f32 %v2397, %v2403
  %v2407 = vmax.f32 %v2405, 0.0
  %v2408 = vmax.f32 %v2406, 0.0
  %2409 = vrot.lane.b32.xlu0 %v2407, 17
  %v2410 = vpop.permute.xlu0 %2409
  %2411 = vrot.lane.b32.xlu0 %v2408, 17
  %v2412 = vpop.permute.xlu0 %2411
  %v2413 = vsel %vm87, %v2410, %v2412
  %v2414 = vsel %vm87, %v2412, %v2410
  %v2415 = vsel %vm31, %v2414, 0.0
  %v2416 = vsel %vm32, %v2413, 0.0
  %s2417 = scalar_lea.vmem %s1, 216
  %v2418 = vld [vmem:[%s2417] sm:$0xff]
  %2419 = vrot.lane.b32.xlu0 %v2407, 16
  %v2420 = vpop.permute.xlu0 %2419
  %2421 = vrot.lane.b32.xlu0 %v2408, 16
  %v2422 = vpop.permute.xlu0 %2421
  %v2423 = vsel %vm97, %v2420, %v2422
  %v2424 = vsel %vm97, %v2422, %v2420
  %v2425 = vsel %vm39, %v2424, 0.0
  %v2426 = vsel %vm40, %v2423, 0.0
  %s2427 = scalar_lea.vmem %s1, 224
  %v2428 = vld [vmem:[%s2427] sm:$0xff]
  %v2430 = vsel %vm104, %v2428, 0
  %2432 = vmatprep.subr.mxu0 0.0
  %2433 = vmatpush1.msra.mxu0 0.0
  %2434 = vmatprep.subr.mxu0 0.0
  %2435 = vmatpush1.msra.mxu0 0.0
  %2436 = vmatprep.subr.mxu0 0.0
  %2437 = vmatpush1.msra.mxu0 0.0
  %2438 = vmatprep.subr.mxu0 0.0
  %2439 = vmatpush1.msra.mxu0 0.0
  %2440 = vmatprep.subr.mxu0 0.0
  %2441 = vmatpush1.msra.mxu0 0.0
  %2442 = vmatprep.subr.mxu0 0.0
  %2443 = vmatpush1.msra.mxu0 0.0
  %2444 = vmatprep.subr.mxu0 0.0
  %2445 = vmatpush1.msra.mxu0 0.0
  %2446 = vmatprep.subr.mxu0 0.0
  %2447 = vmatpush1.msra.mxu0 0.0
  %2448 = vmatprep.subr.mxu0 0.0
  %2449 = vmatpush1.msra.mxu0 0.0
  %2450 = vmatprep.subr.mxu0 0.0
  %2451 = vmatpush1.msra.mxu0 0.0
  %2452 = vmatprep.subr.mxu0 0.0
  %2453 = vmatpush1.msra.mxu0 0.0
  %2454 = vmatprep.subr.mxu0 0.0
  %2455 = vmatpush1.msra.mxu0 0.0
  %2456 = vmatprep.subr.mxu0 0.0
  %2457 = vmatpush1.msra.mxu0 0.0
  %2458 = vmatprep.subr.mxu0 0.0
  %2459 = vmatpush1.msra.mxu0 0.0
  %2460 = vmatprep.subr.mxu0 0.0
  %2461 = vmatpush1.msra.mxu0 0.0
  %2462 = vmatprep.subr.mxu0 %v2426
  %2463 = vmatpush1.msra.mxu0 %v2425
  %2464 = vmatprep.subr.mxu0 0.0
  %2465 = vmatpush2.msra.mxu0 0.0
  %2466 = vmatprep.subr.mxu0 0.0
  %2467 = vmatpush2.msra.mxu0 0.0
  %2468 = vmatprep.subr.mxu0 0.0
  %2469 = vmatpush2.msra.mxu0 0.0
  %2470 = vmatprep.subr.mxu0 0.0
  %2471 = vmatpush2.msra.mxu0 0.0
  %2472 = vmatprep.subr.mxu0 0.0
  %2473 = vmatpush2.msra.mxu0 0.0
  %2474 = vmatprep.subr.mxu0 0.0
  %2475 = vmatpush2.msra.mxu0 0.0
  %2476 = vmatprep.subr.mxu0 0.0
  %2477 = vmatpush2.msra.mxu0 0.0
  %2478 = vmatprep.subr.mxu0 0.0
  %2479 = vmatpush2.msra.mxu0 0.0
  %2480 = vmatprep.subr.mxu0 0.0
  %2481 = vmatpush2.msra.mxu0 0.0
  %2482 = vmatprep.subr.mxu0 0.0
  %2483 = vmatpush2.msra.mxu0 0.0
  %2484 = vmatprep.subr.mxu0 0.0
  %2485 = vmatpush2.msra.mxu0 0.0
  %2486 = vmatprep.subr.mxu0 0.0
  %2487 = vmatpush2.msra.mxu0 0.0
  %2488 = vmatprep.subr.mxu0 0.0
  %2489 = vmatpush2.msra.mxu0 0.0
  %2490 = vmatprep.subr.mxu0 0.0
  %2491 = vmatpush2.msra.mxu0 0.0
  %2492 = vmatprep.subr.mxu0 0.0
  %2493 = vmatpush2.msra.mxu0 0.0
  %2494 = vmatprep.subr.mxu0 0.0
  %2495 = vmatpush2.msra.mxu0 0.0
  %2496 = vmatprep.mubr.f32.mxu0 0.0
  %2497 = vmatmul.mubr.f32.gmra.mxu0 %v2430
  %v2498 = vpop.f32.mrf.mxu0
  %v2499 = vadd.f32 0.0, %v2498
  %v2500 = vpop.f32.mrf.mxu0
  %v2501 = vadd.f32 0.0, %v2500
  %2502 = vdwg.mxu0
  %v2504 = vsel %vm104, %v2418, 0
  %2506 = vmatprep.subr.mxu0 0.0
  %2507 = vmatpush1.msra.mxu0 0.0
  %2508 = vmatprep.subr.mxu0 0.0
  %2509 = vmatpush1.msra.mxu0 0.0
  %2510 = vmatprep.subr.mxu0 0.0
  %2511 = vmatpush1.msra.mxu0 0.0
  %2512 = vmatprep.subr.mxu0 0.0
  %2513 = vmatpush1.msra.mxu0 0.0
  %2514 = vmatprep.subr.mxu0 0.0
  %2515 = vmatpush1.msra.mxu0 0.0
  %2516 = vmatprep.subr.mxu0 0.0
  %2517 = vmatpush1.msra.mxu0 0.0
  %2518 = vmatprep.subr.mxu0 0.0
  %2519 = vmatpush1.msra.mxu0 0.0
  %2520 = vmatprep.subr.mxu0 0.0
  %2521 = vmatpush1.msra.mxu0 0.0
  %2522 = vmatprep.subr.mxu0 0.0
  %2523 = vmatpush1.msra.mxu0 0.0
  %2524 = vmatprep.subr.mxu0 0.0
  %2525 = vmatpush1.msra.mxu0 0.0
  %2526 = vmatprep.subr.mxu0 0.0
  %2527 = vmatpush1.msra.mxu0 0.0
  %2528 = vmatprep.subr.mxu0 0.0
  %2529 = vmatpush1.msra.mxu0 0.0
  %2530 = vmatprep.subr.mxu0 0.0
  %2531 = vmatpush1.msra.mxu0 0.0
  %2532 = vmatprep.subr.mxu0 0.0
  %2533 = vmatpush1.msra.mxu0 0.0
  %2534 = vmatprep.subr.mxu0 0.0
  %2535 = vmatpush1.msra.mxu0 0.0
  %2536 = vmatprep.subr.mxu0 %v2416
  %2537 = vmatpush1.msra.mxu0 %v2415
  %2538 = vmatprep.subr.mxu0 0.0
  %2539 = vmatpush2.msra.mxu0 0.0
  %2540 = vmatprep.subr.mxu0 0.0
  %2541 = vmatpush2.msra.mxu0 0.0
  %2542 = vmatprep.subr.mxu0 0.0
  %2543 = vmatpush2.msra.mxu0 0.0
  %2544 = vmatprep.subr.mxu0 0.0
  %2545 = vmatpush2.msra.mxu0 0.0
  %2546 = vmatprep.subr.mxu0 0.0
  %2547 = vmatpush2.msra.mxu0 0.0
  %2548 = vmatprep.subr.mxu0 0.0
  %2549 = vmatpush2.msra.mxu0 0.0
  %2550 = vmatprep.subr.mxu0 0.0
  %2551 = vmatpush2.msra.mxu0 0.0
  %2552 = vmatprep.subr.mxu0 0.0
  %2553 = vmatpush2.msra.mxu0 0.0
  %2554 = vmatprep.subr.mxu0 0.0
  %2555 = vmatpush2.msra.mxu0 0.0
  %2556 = vmatprep.subr.mxu0 0.0
  %2557 = vmatpush2.msra.mxu0 0.0
  %2558 = vmatprep.subr.mxu0 0.0
  %2559 = vmatpush2.msra.mxu0 0.0
  %2560 = vmatprep.subr.mxu0 0.0
  %2561 = vmatpush2.msra.mxu0 0.0
  %2562 = vmatprep.subr.mxu0 0.0
  %2563 = vmatpush2.msra.mxu0 0.0
  %2564 = vmatprep.subr.mxu0 0.0
  %2565 = vmatpush2.msra.mxu0 0.0
  %2566 = vmatprep.subr.mxu0 0.0
  %2567 = vmatpush2.msra.mxu0 0.0
  %2568 = vmatprep.subr.mxu0 0.0
  %2569 = vmatpush2.msra.mxu0 0.0
  %2570 = vmatprep.mubr.f32.mxu0 0.0
  %2571 = vmatmul.mubr.f32.gmra.mxu0 %v2504
  %v2572 = vpop.f32.mrf.mxu0
  %v2573 = vadd.f32 %v2499, %v2572
  %v2574 = vpop.f32.mrf.mxu0
  %v2575 = vadd.f32 %v2501, %v2574
  %2576 = vdwg.mxu0
  %2577 = vrot.lane.b32.xlu0 %v2407, 15
  %v2578 = vpop.permute.xlu0 %2577
  %2579 = vrot.lane.b32.xlu0 %v2408, 15
  %v2580 = vpop.permute.xlu0 %2579
  %v2581 = vsel %vm257, %v2578, %v2580
  %v2582 = vsel %vm257, %v2580, %v2578
  %v2583 = vsel %vm47, %v2582, 0.0
  %v2584 = vsel %vm48, %v2581, 0.0
  %s2585 = scalar_lea.vmem %s1, 232
  %v2586 = vld [vmem:[%s2585] sm:$0xff]
  %v2588 = vsel %vm104, %v2586, 0
  %2590 = vmatprep.subr.mxu0 0.0
  %2591 = vmatpush1.msra.mxu0 0.0
  %2592 = vmatprep.subr.mxu0 0.0
  %2593 = vmatpush1.msra.mxu0 0.0
  %2594 = vmatprep.subr.mxu0 0.0
  %2595 = vmatpush1.msra.mxu0 0.0
  %2596 = vmatprep.subr.mxu0 0.0
  %2597 = vmatpush1.msra.mxu0 0.0
  %2598 = vmatprep.subr.mxu0 0.0
  %2599 = vmatpush1.msra.mxu0 0.0
  %2600 = vmatprep.subr.mxu0 0.0
  %2601 = vmatpush1.msra.mxu0 0.0
  %2602 = vmatprep.subr.mxu0 0.0
  %2603 = vmatpush1.msra.mxu0 0.0
  %2604 = vmatprep.subr.mxu0 0.0
  %2605 = vmatpush1.msra.mxu0 0.0
  %2606 = vmatprep.subr.mxu0 0.0
  %2607 = vmatpush1.msra.mxu0 0.0
  %2608 = vmatprep.subr.mxu0 0.0
  %2609 = vmatpush1.msra.mxu0 0.0
  %2610 = vmatprep.subr.mxu0 0.0
  %2611 = vmatpush1.msra.mxu0 0.0
  %2612 = vmatprep.subr.mxu0 0.0
  %2613 = vmatpush1.msra.mxu0 0.0
  %2614 = vmatprep.subr.mxu0 0.0
  %2615 = vmatpush1.msra.mxu0 0.0
  %2616 = vmatprep.subr.mxu0 0.0
  %2617 = vmatpush1.msra.mxu0 0.0
  %2618 = vmatprep.subr.mxu0 0.0
  %2619 = vmatpush1.msra.mxu0 0.0
  %2620 = vmatprep.subr.mxu0 %v2584
  %2621 = vmatpush1.msra.mxu0 %v2583
  %2622 = vmatprep.subr.mxu0 0.0
  %2623 = vmatpush2.msra.mxu0 0.0
  %2624 = vmatprep.subr.mxu0 0.0
  %2625 = vmatpush2.msra.mxu0 0.0
  %2626 = vmatprep.subr.mxu0 0.0
  %2627 = vmatpush2.msra.mxu0 0.0
  %2628 = vmatprep.subr.mxu0 0.0
  %2629 = vmatpush2.msra.mxu0 0.0
  %2630 = vmatprep.subr.mxu0 0.0
  %2631 = vmatpush2.msra.mxu0 0.0
  %2632 = vmatprep.subr.mxu0 0.0
  %2633 = vmatpush2.msra.mxu0 0.0
  %2634 = vmatprep.subr.mxu0 0.0
  %2635 = vmatpush2.msra.mxu0 0.0
  %2636 = vmatprep.subr.mxu0 0.0
  %2637 = vmatpush2.msra.mxu0 0.0
  %2638 = vmatprep.subr.mxu0 0.0
  %2639 = vmatpush2.msra.mxu0 0.0
  %2640 = vmatprep.subr.mxu0 0.0
  %2641 = vmatpush2.msra.mxu0 0.0
  %2642 = vmatprep.subr.mxu0 0.0
  %2643 = vmatpush2.msra.mxu0 0.0
  %2644 = vmatprep.subr.mxu0 0.0
  %2645 = vmatpush2.msra.mxu0 0.0
  %2646 = vmatprep.subr.mxu0 0.0
  %2647 = vmatpush2.msra.mxu0 0.0
  %2648 = vmatprep.subr.mxu0 0.0
  %2649 = vmatpush2.msra.mxu0 0.0
  %2650 = vmatprep.subr.mxu0 0.0
  %2651 = vmatpush2.msra.mxu0 0.0
  %2652 = vmatprep.subr.mxu0 0.0
  %2653 = vmatpush2.msra.mxu0 0.0
  %2654 = vmatprep.mubr.f32.mxu0 0.0
  %2655 = vmatmul.mubr.f32.gmra.mxu0 %v2588
  %v2656 = vpop.f32.mrf.mxu0
  %v2657 = vadd.f32 0.0, %v2656
  %v2658 = vpop.f32.mrf.mxu0
  %v2659 = vadd.f32 0.0, %v2658
  %2660 = vdwg.mxu0
  %v2661 = vadd.f32 %v2573, %v2657
  %v2662 = vadd.f32 %v2575, %v2659
  %2663 = vrot.lane.b32.xlu0 %v2407, 1
  %v2664 = vpop.permute.xlu0 %2663
  %2665 = vrot.lane.b32.xlu0 %v2408, 1
  %v2666 = vpop.permute.xlu0 %2665
  %v2667 = vsel %vm344, %v2664, %v2666
  %v2668 = vsel %vm344, %v2666, %v2664
  %v2669 = vsel %vm57, %v2668, 0.0
  %v2670 = vsel %vm58, %v2667, 0.0
  %s2671 = scalar_lea.vmem %s1, 240
  %v2672 = vld [vmem:[%s2671] sm:$0xff]
  %v2674 = vsel %vm104, %v2672, 0
  %2676 = vmatprep.subr.mxu0 0.0
  %2677 = vmatpush1.msra.mxu0 0.0
  %2678 = vmatprep.subr.mxu0 0.0
  %2679 = vmatpush1.msra.mxu0 0.0
  %2680 = vmatprep.subr.mxu0 0.0
  %2681 = vmatpush1.msra.mxu0 0.0
  %2682 = vmatprep.subr.mxu0 0.0
  %2683 = vmatpush1.msra.mxu0 0.0
  %2684 = vmatprep.subr.mxu0 0.0
  %2685 = vmatpush1.msra.mxu0 0.0
  %2686 = vmatprep.subr.mxu0 0.0
  %2687 = vmatpush1.msra.mxu0 0.0
  %2688 = vmatprep.subr.mxu0 0.0
  %2689 = vmatpush1.msra.mxu0 0.0
  %2690 = vmatprep.subr.mxu0 0.0
  %2691 = vmatpush1.msra.mxu0 0.0
  %2692 = vmatprep.subr.mxu0 0.0
  %2693 = vmatpush1.msra.mxu0 0.0
  %2694 = vmatprep.subr.mxu0 0.0
  %2695 = vmatpush1.msra.mxu0 0.0
  %2696 = vmatprep.subr.mxu0 0.0
  %2697 = vmatpush1.msra.mxu0 0.0
  %2698 = vmatprep.subr.mxu0 0.0
  %2699 = vmatpush1.msra.mxu0 0.0
  %2700 = vmatprep.subr.mxu0 0.0
  %2701 = vmatpush1.msra.mxu0 0.0
  %2702 = vmatprep.subr.mxu0 0.0
  %2703 = vmatpush1.msra.mxu0 0.0
  %2704 = vmatprep.subr.mxu0 0.0
  %2705 = vmatpush1.msra.mxu0 0.0
  %2706 = vmatprep.subr.mxu0 %v2670
  %2707 = vmatpush1.msra.mxu0 %v2669
  %2708 = vmatprep.subr.mxu0 0.0
  %2709 = vmatpush2.msra.mxu0 0.0
  %2710 = vmatprep.subr.mxu0 0.0
  %2711 = vmatpush2.msra.mxu0 0.0
  %2712 = vmatprep.subr.mxu0 0.0
  %2713 = vmatpush2.msra.mxu0 0.0
  %2714 = vmatprep.subr.mxu0 0.0
  %2715 = vmatpush2.msra.mxu0 0.0
  %2716 = vmatprep.subr.mxu0 0.0
  %2717 = vmatpush2.msra.mxu0 0.0
  %2718 = vmatprep.subr.mxu0 0.0
  %2719 = vmatpush2.msra.mxu0 0.0
  %2720 = vmatprep.subr.mxu0 0.0
  %2721 = vmatpush2.msra.mxu0 0.0
  %2722 = vmatprep.subr.mxu0 0.0
  %2723 = vmatpush2.msra.mxu0 0.0
  %2724 = vmatprep.subr.mxu0 0.0
  %2725 = vmatpush2.msra.mxu0 0.0
  %2726 = vmatprep.subr.mxu0 0.0
  %2727 = vmatpush2.msra.mxu0 0.0
  %2728 = vmatprep.subr.mxu0 0.0
  %2729 = vmatpush2.msra.mxu0 0.0
  %2730 = vmatprep.subr.mxu0 0.0
  %2731 = vmatpush2.msra.mxu0 0.0
  %2732 = vmatprep.subr.mxu0 0.0
  %2733 = vmatpush2.msra.mxu0 0.0
  %2734 = vmatprep.subr.mxu0 0.0
  %2735 = vmatpush2.msra.mxu0 0.0
  %2736 = vmatprep.subr.mxu0 0.0
  %2737 = vmatpush2.msra.mxu0 0.0
  %2738 = vmatprep.subr.mxu0 0.0
  %2739 = vmatpush2.msra.mxu0 0.0
  %2740 = vmatprep.mubr.f32.mxu0 0.0
  %2741 = vmatmul.mubr.f32.gmra.mxu0 %v2674
  %v2742 = vpop.f32.mrf.mxu0
  %v2743 = vadd.f32 0.0, %v2742
  %v2744 = vpop.f32.mrf.mxu0
  %v2745 = vadd.f32 0.0, %v2744
  %2746 = vdwg.mxu0
  %v2747 = vadd.f32 %v2661, %v2743
  %v2748 = vadd.f32 %v2662, %v2745
  %s2749 = scalar_lea.vmem %s1, 248
  %v2750 = vld [vmem:[%s2749] sm:$0xff]
  %v2752 = vsel %vm104, %v2750, 0
  %2754 = vmatprep.subr.mxu0 0.0
  %2755 = vmatpush1.msra.mxu0 0.0
  %2756 = vmatprep.subr.mxu0 0.0
  %2757 = vmatpush1.msra.mxu0 0.0
  %2758 = vmatprep.subr.mxu0 0.0
  %2759 = vmatpush1.msra.mxu0 0.0
  %2760 = vmatprep.subr.mxu0 0.0
  %2761 = vmatpush1.msra.mxu0 0.0
  %2762 = vmatprep.subr.mxu0 0.0
  %2763 = vmatpush1.msra.mxu0 0.0
  %2764 = vmatprep.subr.mxu0 0.0
  %2765 = vmatpush1.msra.mxu0 0.0
  %2766 = vmatprep.subr.mxu0 0.0
  %2767 = vmatpush1.msra.mxu0 0.0
  %2768 = vmatprep.subr.mxu0 0.0
  %2769 = vmatpush1.msra.mxu0 0.0
  %2770 = vmatprep.subr.mxu0 0.0
  %2771 = vmatpush1.msra.mxu0 0.0
  %2772 = vmatprep.subr.mxu0 0.0
  %2773 = vmatpush1.msra.mxu0 0.0
  %2774 = vmatprep.subr.mxu0 0.0
  %2775 = vmatpush1.msra.mxu0 0.0
  %2776 = vmatprep.subr.mxu0 0.0
  %2777 = vmatpush1.msra.mxu0 0.0
  %2778 = vmatprep.subr.mxu0 0.0
  %2779 = vmatpush1.msra.mxu0 0.0
  %2780 = vmatprep.subr.mxu0 0.0
  %2781 = vmatpush1.msra.mxu0 0.0
  %2782 = vmatprep.subr.mxu0 0.0
  %2783 = vmatpush1.msra.mxu0 0.0
  %2784 = vmatprep.subr.mxu0 %v2408
  %2785 = vmatpush1.msra.mxu0 %v2407
  %2786 = vmatprep.subr.mxu0 0.0
  %2787 = vmatpush2.msra.mxu0 0.0
  %2788 = vmatprep.subr.mxu0 0.0
  %2789 = vmatpush2.msra.mxu0 0.0
  %2790 = vmatprep.subr.mxu0 0.0
  %2791 = vmatpush2.msra.mxu0 0.0
  %2792 = vmatprep.subr.mxu0 0.0
  %2793 = vmatpush2.msra.mxu0 0.0
  %2794 = vmatprep.subr.mxu0 0.0
  %2795 = vmatpush2.msra.mxu0 0.0
  %2796 = vmatprep.subr.mxu0 0.0
  %2797 = vmatpush2.msra.mxu0 0.0
  %2798 = vmatprep.subr.mxu0 0.0
  %2799 = vmatpush2.msra.mxu0 0.0
  %2800 = vmatprep.subr.mxu0 0.0
  %2801 = vmatpush2.msra.mxu0 0.0
  %2802 = vmatprep.subr.mxu0 0.0
  %2803 = vmatpush2.msra.mxu0 0.0
  %2804 = vmatprep.subr.mxu0 0.0
  %2805 = vmatpush2.msra.mxu0 0.0
  %2806 = vmatprep.subr.mxu0 0.0
  %2807 = vmatpush2.msra.mxu0 0.0
  %2808 = vmatprep.subr.mxu0 0.0
  %2809 = vmatpush2.msra.mxu0 0.0
  %2810 = vmatprep.subr.mxu0 0.0
  %2811 = vmatpush2.msra.mxu0 0.0
  %2812 = vmatprep.subr.mxu0 0.0
  %2813 = vmatpush2.msra.mxu0 0.0
  %2814 = vmatprep.subr.mxu0 0.0
  %2815 = vmatpush2.msra.mxu0 0.0
  %2816 = vmatprep.subr.mxu0 0.0
  %2817 = vmatpush2.msra.mxu0 0.0
  %2818 = vmatprep.mubr.f32.mxu0 0.0
  %2819 = vmatmul.mubr.f32.gmra.mxu0 %v2752
  %v2820 = vpop.f32.mrf.mxu0
  %v2821 = vadd.f32 0.0, %v2820
  %v2822 = vpop.f32.mrf.mxu0
  %v2823 = vadd.f32 0.0, %v2822
  %2824 = vdwg.mxu0
  %v2825 = vadd.f32 %v2747, %v2821
  %v2826 = vadd.f32 %v2748, %v2823
  %2827 = vrot.lane.b32.xlu0 %v2407, 127
  %v2828 = vpop.permute.xlu0 %2827
  %2829 = vrot.lane.b32.xlu0 %v2408, 127
  %v2830 = vpop.permute.xlu0 %2829
  %v2831 = vsel %vm509, %v2828, %v2830
  %v2832 = vsel %vm509, %v2830, %v2828
  %v2833 = vsel %vm61, %v2831, 0.0
  %v2834 = vsel %vm62, %v2832, 0.0
  %s2835 = scalar_lea.vmem %s1, 256
  %v2836 = vld [vmem:[%s2835] sm:$0xff]
  %v2838 = vsel %vm104, %v2836, 0
  %2840 = vmatprep.subr.mxu0 0.0
  %2841 = vmatpush1.msra.mxu0 0.0
  %2842 = vmatprep.subr.mxu0 0.0
  %2843 = vmatpush1.msra.mxu0 0.0
  %2844 = vmatprep.subr.mxu0 0.0
  %2845 = vmatpush1.msra.mxu0 0.0
  %2846 = vmatprep.subr.mxu0 0.0
  %2847 = vmatpush1.msra.mxu0 0.0
  %2848 = vmatprep.subr.mxu0 0.0
  %2849 = vmatpush1.msra.mxu0 0.0
  %2850 = vmatprep.subr.mxu0 0.0
  %2851 = vmatpush1.msra.mxu0 0.0
  %2852 = vmatprep.subr.mxu0 0.0
  %2853 = vmatpush1.msra.mxu0 0.0
  %2854 = vmatprep.subr.mxu0 0.0
  %2855 = vmatpush1.msra.mxu0 0.0
  %2856 = vmatprep.subr.mxu0 0.0
  %2857 = vmatpush1.msra.mxu0 0.0
  %2858 = vmatprep.subr.mxu0 0.0
  %2859 = vmatpush1.msra.mxu0 0.0
  %2860 = vmatprep.subr.mxu0 0.0
  %2861 = vmatpush1.msra.mxu0 0.0
  %2862 = vmatprep.subr.mxu0 0.0
  %2863 = vmatpush1.msra.mxu0 0.0
  %2864 = vmatprep.subr.mxu0 0.0
  %2865 = vmatpush1.msra.mxu0 0.0
  %2866 = vmatprep.subr.mxu0 0.0
  %2867 = vmatpush1.msra.mxu0 0.0
  %2868 = vmatprep.subr.mxu0 0.0
  %2869 = vmatpush1.msra.mxu0 0.0
  %2870 = vmatprep.subr.mxu0 %v2834
  %2871 = vmatpush1.msra.mxu0 %v2833
  %2872 = vmatprep.subr.mxu0 0.0
  %2873 = vmatpush2.msra.mxu0 0.0
  %2874 = vmatprep.subr.mxu0 0.0
  %2875 = vmatpush2.msra.mxu0 0.0
  %2876 = vmatprep.subr.mxu0 0.0
  %2877 = vmatpush2.msra.mxu0 0.0
  %2878 = vmatprep.subr.mxu0 0.0
  %2879 = vmatpush2.msra.mxu0 0.0
  %2880 = vmatprep.subr.mxu0 0.0
  %2881 = vmatpush2.msra.mxu0 0.0
  %2882 = vmatprep.subr.mxu0 0.0
  %2883 = vmatpush2.msra.mxu0 0.0
  %2884 = vmatprep.subr.mxu0 0.0
  %2885 = vmatpush2.msra.mxu0 0.0
  %2886 = vmatprep.subr.mxu0 0.0
  %2887 = vmatpush2.msra.mxu0 0.0
  %2888 = vmatprep.subr.mxu0 0.0
  %2889 = vmatpush2.msra.mxu0 0.0
  %2890 = vmatprep.subr.mxu0 0.0
  %2891 = vmatpush2.msra.mxu0 0.0
  %2892 = vmatprep.subr.mxu0 0.0
  %2893 = vmatpush2.msra.mxu0 0.0
  %2894 = vmatprep.subr.mxu0 0.0
  %2895 = vmatpush2.msra.mxu0 0.0
  %2896 = vmatprep.subr.mxu0 0.0
  %2897 = vmatpush2.msra.mxu0 0.0
  %2898 = vmatprep.subr.mxu0 0.0
  %2899 = vmatpush2.msra.mxu0 0.0
  %2900 = vmatprep.subr.mxu0 0.0
  %2901 = vmatpush2.msra.mxu0 0.0
  %2902 = vmatprep.subr.mxu0 0.0
  %2903 = vmatpush2.msra.mxu0 0.0
  %2904 = vmatprep.mubr.f32.mxu0 0.0
  %2905 = vmatmul.mubr.f32.gmra.mxu0 %v2838
  %v2906 = vpop.f32.mrf.mxu0
  %v2907 = vadd.f32 0.0, %v2906
  %v2908 = vpop.f32.mrf.mxu0
  %v2909 = vadd.f32 0.0, %v2908
  %2910 = vdwg.mxu0
  %v2911 = vadd.f32 %v2825, %v2907
  %v2912 = vadd.f32 %v2826, %v2909
  %2913 = vrot.lane.b32.xlu0 %v2407, 113
  %v2914 = vpop.permute.xlu0 %2913
  %2915 = vrot.lane.b32.xlu0 %v2408, 113
  %v2916 = vpop.permute.xlu0 %2915
  %v2917 = vsel %vm596, %v2914, %v2916
  %v2918 = vsel %vm596, %v2916, %v2914
  %v2919 = vsel %vm71, %v2917, 0.0
  %v2920 = vsel %vm72, %v2918, 0.0
  %s2921 = scalar_lea.vmem %s1, 264
  %v2922 = vld [vmem:[%s2921] sm:$0xff]
  %v2924 = vsel %vm104, %v2922, 0
  %2926 = vmatprep.subr.mxu0 0.0
  %2927 = vmatpush1.msra.mxu0 0.0
  %2928 = vmatprep.subr.mxu0 0.0
  %2929 = vmatpush1.msra.mxu0 0.0
  %2930 = vmatprep.subr.mxu0 0.0
  %2931 = vmatpush1.msra.mxu0 0.0
  %2932 = vmatprep.subr.mxu0 0.0
  %2933 = vmatpush1.msra.mxu0 0.0
  %2934 = vmatprep.subr.mxu0 0.0
  %2935 = vmatpush1.msra.mxu0 0.0
  %2936 = vmatprep.subr.mxu0 0.0
  %2937 = vmatpush1.msra.mxu0 0.0
  %2938 = vmatprep.subr.mxu0 0.0
  %2939 = vmatpush1.msra.mxu0 0.0
  %2940 = vmatprep.subr.mxu0 0.0
  %2941 = vmatpush1.msra.mxu0 0.0
  %2942 = vmatprep.subr.mxu0 0.0
  %2943 = vmatpush1.msra.mxu0 0.0
  %2944 = vmatprep.subr.mxu0 0.0
  %2945 = vmatpush1.msra.mxu0 0.0
  %2946 = vmatprep.subr.mxu0 0.0
  %2947 = vmatpush1.msra.mxu0 0.0
  %2948 = vmatprep.subr.mxu0 0.0
  %2949 = vmatpush1.msra.mxu0 0.0
  %2950 = vmatprep.subr.mxu0 0.0
  %2951 = vmatpush1.msra.mxu0 0.0
  %2952 = vmatprep.subr.mxu0 0.0
  %2953 = vmatpush1.msra.mxu0 0.0
  %2954 = vmatprep.subr.mxu0 0.0
  %2955 = vmatpush1.msra.mxu0 0.0
  %2956 = vmatprep.subr.mxu0 %v2920
  %2957 = vmatpush1.msra.mxu0 %v2919
  %2958 = vmatprep.subr.mxu0 0.0
  %2959 = vmatpush2.msra.mxu0 0.0
  %2960 = vmatprep.subr.mxu0 0.0
  %2961 = vmatpush2.msra.mxu0 0.0
  %2962 = vmatprep.subr.mxu0 0.0
  %2963 = vmatpush2.msra.mxu0 0.0
  %2964 = vmatprep.subr.mxu0 0.0
  %2965 = vmatpush2.msra.mxu0 0.0
  %2966 = vmatprep.subr.mxu0 0.0
  %2967 = vmatpush2.msra.mxu0 0.0
  %2968 = vmatprep.subr.mxu0 0.0
  %2969 = vmatpush2.msra.mxu0 0.0
  %2970 = vmatprep.subr.mxu0 0.0
  %2971 = vmatpush2.msra.mxu0 0.0
  %2972 = vmatprep.subr.mxu0 0.0
  %2973 = vmatpush2.msra.mxu0 0.0
  %2974 = vmatprep.subr.mxu0 0.0
  %2975 = vmatpush2.msra.mxu0 0.0
  %2976 = vmatprep.subr.mxu0 0.0
  %2977 = vmatpush2.msra.mxu0 0.0
  %2978 = vmatprep.subr.mxu0 0.0
  %2979 = vmatpush2.msra.mxu0 0.0
  %2980 = vmatprep.subr.mxu0 0.0
  %2981 = vmatpush2.msra.mxu0 0.0
  %2982 = vmatprep.subr.mxu0 0.0
  %2983 = vmatpush2.msra.mxu0 0.0
  %2984 = vmatprep.subr.mxu0 0.0
  %2985 = vmatpush2.msra.mxu0 0.0
  %2986 = vmatprep.subr.mxu0 0.0
  %2987 = vmatpush2.msra.mxu0 0.0
  %2988 = vmatprep.subr.mxu0 0.0
  %2989 = vmatpush2.msra.mxu0 0.0
  %2990 = vmatprep.mubr.f32.mxu0 0.0
  %2991 = vmatmul.mubr.f32.gmra.mxu0 %v2924
  %v2992 = vpop.f32.mrf.mxu0
  %v2993 = vadd.f32 0.0, %v2992
  %v2994 = vpop.f32.mrf.mxu0
  %v2995 = vadd.f32 0.0, %v2994
  %2996 = vdwg.mxu0
  %v2997 = vadd.f32 %v2911, %v2993
  %v2998 = vadd.f32 %v2912, %v2995
  %2999 = vrot.lane.b32.xlu0 %v2407, 112
  %v3000 = vpop.permute.xlu0 %2999
  %3001 = vrot.lane.b32.xlu0 %v2408, 112
  %v3002 = vpop.permute.xlu0 %3001
  %v3003 = vsel %vm683, %v3000, %v3002
  %v3004 = vsel %vm683, %v3002, %v3000
  %v3005 = vsel %vm75, %v3003, 0.0
  %v3006 = vsel %vm76, %v3004, 0.0
  %s3007 = scalar_lea.vmem %s1, 272
  %v3008 = vld [vmem:[%s3007] sm:$0xff]
  %v3010 = vsel %vm104, %v3008, 0
  %3012 = vmatprep.subr.mxu0 0.0
  %3013 = vmatpush1.msra.mxu0 0.0
  %3014 = vmatprep.subr.mxu0 0.0
  %3015 = vmatpush1.msra.mxu0 0.0
  %3016 = vmatprep.subr.mxu0 0.0
  %3017 = vmatpush1.msra.mxu0 0.0
  %3018 = vmatprep.subr.mxu0 0.0
  %3019 = vmatpush1.msra.mxu0 0.0
  %3020 = vmatprep.subr.mxu0 0.0
  %3021 = vmatpush1.msra.mxu0 0.0
  %3022 = vmatprep.subr.mxu0 0.0
  %3023 = vmatpush1.msra.mxu0 0.0
  %3024 = vmatprep.subr.mxu0 0.0
  %3025 = vmatpush1.msra.mxu0 0.0
  %3026 = vmatprep.subr.mxu0 0.0
  %3027 = vmatpush1.msra.mxu0 0.0
  %3028 = vmatprep.subr.mxu0 0.0
  %3029 = vmatpush1.msra.mxu0 0.0
  %3030 = vmatprep.subr.mxu0 0.0
  %3031 = vmatpush1.msra.mxu0 0.0
  %3032 = vmatprep.subr.mxu0 0.0
  %3033 = vmatpush1.msra.mxu0 0.0
  %3034 = vmatprep.subr.mxu0 0.0
  %3035 = vmatpush1.msra.mxu0 0.0
  %3036 = vmatprep.subr.mxu0 0.0
  %3037 = vmatpush1.msra.mxu0 0.0
  %3038 = vmatprep.subr.mxu0 0.0
  %3039 = vmatpush1.msra.mxu0 0.0
  %3040 = vmatprep.subr.mxu0 0.0
  %3041 = vmatpush1.msra.mxu0 0.0
  %3042 = vmatprep.subr.mxu0 %v3006
  %3043 = vmatpush1.msra.mxu0 %v3005
  %3044 = vmatprep.subr.mxu0 0.0
  %3045 = vmatpush2.msra.mxu0 0.0
  %3046 = vmatprep.subr.mxu0 0.0
  %3047 = vmatpush2.msra.mxu0 0.0
  %3048 = vmatprep.subr.mxu0 0.0
  %3049 = vmatpush2.msra.mxu0 0.0
  %3050 = vmatprep.subr.mxu0 0.0
  %3051 = vmatpush2.msra.mxu0 0.0
  %3052 = vmatprep.subr.mxu0 0.0
  %3053 = vmatpush2.msra.mxu0 0.0
  %3054 = vmatprep.subr.mxu0 0.0
  %3055 = vmatpush2.msra.mxu0 0.0
  %3056 = vmatprep.subr.mxu0 0.0
  %3057 = vmatpush2.msra.mxu0 0.0
  %3058 = vmatprep.subr.mxu0 0.0
  %3059 = vmatpush2.msra.mxu0 0.0
  %3060 = vmatprep.subr.mxu0 0.0
  %3061 = vmatpush2.msra.mxu0 0.0
  %3062 = vmatprep.subr.mxu0 0.0
  %3063 = vmatpush2.msra.mxu0 0.0
  %3064 = vmatprep.subr.mxu0 0.0
  %3065 = vmatpush2.msra.mxu0 0.0
  %3066 = vmatprep.subr.mxu0 0.0
  %3067 = vmatpush2.msra.mxu0 0.0
  %3068 = vmatprep.subr.mxu0 0.0
  %3069 = vmatpush2.msra.mxu0 0.0
  %3070 = vmatprep.subr.mxu0 0.0
  %3071 = vmatpush2.msra.mxu0 0.0
  %3072 = vmatprep.subr.mxu0 0.0
  %3073 = vmatpush2.msra.mxu0 0.0
  %3074 = vmatprep.subr.mxu0 0.0
  %3075 = vmatpush2.msra.mxu0 0.0
  %3076 = vmatprep.mubr.f32.mxu0 0.0
  %3077 = vmatmul.mubr.f32.gmra.mxu0 %v3010
  %v3078 = vpop.f32.mrf.mxu0
  %v3079 = vadd.f32 0.0, %v3078
  %v3080 = vpop.f32.mrf.mxu0
  %v3081 = vadd.f32 0.0, %v3080
  %3082 = vdwg.mxu0
  %v3083 = vadd.f32 %v2997, %v3079
  %v3084 = vadd.f32 %v2998, %v3081
  %3085 = vrot.lane.b32.xlu0 %v2407, 111
  %v3086 = vpop.permute.xlu0 %3085
  %3087 = vrot.lane.b32.xlu0 %v2408, 111
  %v3088 = vpop.permute.xlu0 %3087
  %v3089 = vsel %vm770, %v3086, %v3088
  %v3090 = vsel %vm770, %v3088, %v3086
  %v3091 = vsel %vm79, %v3089, 0.0
  %v3092 = vsel %vm80, %v3090, 0.0
  %s3093 = scalar_lea.vmem %s1, 280
  %v3094 = vld [vmem:[%s3093] sm:$0xff]
  %v3096 = vsel %vm104, %v3094, 0
  %3098 = vmatprep.subr.mxu0 0.0
  %3099 = vmatpush1.msra.mxu0 0.0
  %3100 = vmatprep.subr.mxu0 0.0
  %3101 = vmatpush1.msra.mxu0 0.0
  %3102 = vmatprep.subr.mxu0 0.0
  %3103 = vmatpush1.msra.mxu0 0.0
  %3104 = vmatprep.subr.mxu0 0.0
  %3105 = vmatpush1.msra.mxu0 0.0
  %3106 = vmatprep.subr.mxu0 0.0
  %3107 = vmatpush1.msra.mxu0 0.0
  %3108 = vmatprep.subr.mxu0 0.0
  %3109 = vmatpush1.msra.mxu0 0.0
  %3110 = vmatprep.subr.mxu0 0.0
  %3111 = vmatpush1.msra.mxu0 0.0
  %3112 = vmatprep.subr.mxu0 0.0
  %3113 = vmatpush1.msra.mxu0 0.0
  %3114 = vmatprep.subr.mxu0 0.0
  %3115 = vmatpush1.msra.mxu0 0.0
  %3116 = vmatprep.subr.mxu0 0.0
  %3117 = vmatpush1.msra.mxu0 0.0
  %3118 = vmatprep.subr.mxu0 0.0
  %3119 = vmatpush1.msra.mxu0 0.0
  %3120 = vmatprep.subr.mxu0 0.0
  %3121 = vmatpush1.msra.mxu0 0.0
  %3122 = vmatprep.subr.mxu0 0.0
  %3123 = vmatpush1.msra.mxu0 0.0
  %3124 = vmatprep.subr.mxu0 0.0
  %3125 = vmatpush1.msra.mxu0 0.0
  %3126 = vmatprep.subr.mxu0 0.0
  %3127 = vmatpush1.msra.mxu0 0.0
  %3128 = vmatprep.subr.mxu0 %v3092
  %3129 = vmatpush1.msra.mxu0 %v3091
  %3130 = vmatprep.subr.mxu0 0.0
  %3131 = vmatpush2.msra.mxu0 0.0
  %3132 = vmatprep.subr.mxu0 0.0
  %3133 = vmatpush2.msra.mxu0 0.0
  %3134 = vmatprep.subr.mxu0 0.0
  %3135 = vmatpush2.msra.mxu0 0.0
  %3136 = vmatprep.subr.mxu0 0.0
  %3137 = vmatpush2.msra.mxu0 0.0
  %3138 = vmatprep.subr.mxu0 0.0
  %3139 = vmatpush2.msra.mxu0 0.0
  %3140 = vmatprep.subr.mxu0 0.0
  %3141 = vmatpush2.msra.mxu0 0.0
  %3142 = vmatprep.subr.mxu0 0.0
  %3143 = vmatpush2.msra.mxu0 0.0
  %3144 = vmatprep.subr.mxu0 0.0
  %3145 = vmatpush2.msra.mxu0 0.0
  %3146 = vmatprep.subr.mxu0 0.0
  %3147 = vmatpush2.msra.mxu0 0.0
  %3148 = vmatprep.subr.mxu0 0.0
  %3149 = vmatpush2.msra.mxu0 0.0
  %3150 = vmatprep.subr.mxu0 0.0
  %3151 = vmatpush2.msra.mxu0 0.0
  %3152 = vmatprep.subr.mxu0 0.0
  %3153 = vmatpush2.msra.mxu0 0.0
  %3154 = vmatprep.subr.mxu0 0.0
  %3155 = vmatpush2.msra.mxu0 0.0
  %3156 = vmatprep.subr.mxu0 0.0
  %3157 = vmatpush2.msra.mxu0 0.0
  %3158 = vmatprep.subr.mxu0 0.0
  %3159 = vmatpush2.msra.mxu0 0.0
  %3160 = vmatprep.subr.mxu0 0.0
  %3161 = vmatpush2.msra.mxu0 0.0
  %3162 = vmatprep.mubr.f32.mxu0 0.0
  %3163 = vmatmul.mubr.f32.gmra.mxu0 %v3096
  %v3164 = vpop.f32.mrf.mxu0
  %v3165 = vadd.f32 0.0, %v3164
  %v3166 = vpop.f32.mrf.mxu0
  %v3167 = vadd.f32 0.0, %v3166
  %3168 = vdwg.mxu0
  %v3169 = vadd.f32 %v3083, %v3165
  %v3170 = vadd.f32 %v3084, %v3167
  %s3171 = scalar_lea.vmem %s2, 24
  %v3172 = vld [vmem:[%s3171] sm:$0xff]
  %3174 = vset.pattern.permute.xlu0 0
  %3175 = vperm.xlu0 %3174, %v3172
  %v3176 = vpop.permute.xlu0 %3175
  %v3178 = vadd.f32 %v3169, %v3176
  %v3179 = vadd.f32 %v3170, %v3176
  %v3180 = vadd.f32 %v3178, %v1634
  %v3181 = vadd.f32 %v3179, %v1635
  %3182 = vrot.lane.b32.xlu0 %v3180, 17
  %v3183 = vpop.permute.xlu0 %3182
  %3184 = vrot.lane.b32.xlu0 %v3181, 17
  %v3185 = vpop.permute.xlu0 %3184
  %v3186 = vsel %vm87, %v3183, %v3185
  %v3187 = vsel %vm87, %v3185, %v3183
  %v3188 = vsel %vm31, %v3187, 0.0
  %v3189 = vsel %vm32, %v3186, 0.0
  %s3190 = scalar_lea.vmem %s1, 288
  %v3191 = vld [vmem:[%s3190] sm:$0xff]
  %3192 = vrot.lane.b32.xlu0 %v3180, 16
  %v3193 = vpop.permute.xlu0 %3192
  %3194 = vrot.lane.b32.xlu0 %v3181, 16
  %v3195 = vpop.permute.xlu0 %3194
  %v3196 = vsel %vm97, %v3193, %v3195
  %v3197 = vsel %vm97, %v3195, %v3193
  %v3198 = vsel %vm39, %v3197, 0.0
  %v3199 = vsel %vm40, %v3196, 0.0
  %s3200 = scalar_lea.vmem %s1, 296
  %v3201 = vld [vmem:[%s3200] sm:$0xff]
  %v3203 = vsel %vm104, %v3201, 0
  %3205 = vmatprep.subr.mxu0 0.0
  %3206 = vmatpush1.msra.mxu0 0.0
  %3207 = vmatprep.subr.mxu0 0.0
  %3208 = vmatpush1.msra.mxu0 0.0
  %3209 = vmatprep.subr.mxu0 0.0
  %3210 = vmatpush1.msra.mxu0 0.0
  %3211 = vmatprep.subr.mxu0 0.0
  %3212 = vmatpush1.msra.mxu0 0.0
  %3213 = vmatprep.subr.mxu0 0.0
  %3214 = vmatpush1.msra.mxu0 0.0
  %3215 = vmatprep.subr.mxu0 0.0
  %3216 = vmatpush1.msra.mxu0 0.0
  %3217 = vmatprep.subr.mxu0 0.0
  %3218 = vmatpush1.msra.mxu0 0.0
  %3219 = vmatprep.subr.mxu0 0.0
  %3220 = vmatpush1.msra.mxu0 0.0
  %3221 = vmatprep.subr.mxu0 0.0
  %3222 = vmatpush1.msra.mxu0 0.0
  %3223 = vmatprep.subr.mxu0 0.0
  %3224 = vmatpush1.msra.mxu0 0.0
  %3225 = vmatprep.subr.mxu0 0.0
  %3226 = vmatpush1.msra.mxu0 0.0
  %3227 = vmatprep.subr.mxu0 0.0
  %3228 = vmatpush1.msra.mxu0 0.0
  %3229 = vmatprep.subr.mxu0 0.0
  %3230 = vmatpush1.msra.mxu0 0.0
  %3231 = vmatprep.subr.mxu0 0.0
  %3232 = vmatpush1.msra.mxu0 0.0
  %3233 = vmatprep.subr.mxu0 0.0
  %3234 = vmatpush1.msra.mxu0 0.0
  %3235 = vmatprep.subr.mxu0 %v3199
  %3236 = vmatpush1.msra.mxu0 %v3198
  %3237 = vmatprep.subr.mxu0 0.0
  %3238 = vmatpush2.msra.mxu0 0.0
  %3239 = vmatprep.subr.mxu0 0.0
  %3240 = vmatpush2.msra.mxu0 0.0
  %3241 = vmatprep.subr.mxu0 0.0
  %3242 = vmatpush2.msra.mxu0 0.0
  %3243 = vmatprep.subr.mxu0 0.0
  %3244 = vmatpush2.msra.mxu0 0.0
  %3245 = vmatprep.subr.mxu0 0.0
  %3246 = vmatpush2.msra.mxu0 0.0
  %3247 = vmatprep.subr.mxu0 0.0
  %3248 = vmatpush2.msra.mxu0 0.0
  %3249 = vmatprep.subr.mxu0 0.0
  %3250 = vmatpush2.msra.mxu0 0.0
  %3251 = vmatprep.subr.mxu0 0.0
  %3252 = vmatpush2.msra.mxu0 0.0
  %3253 = vmatprep.subr.mxu0 0.0
  %3254 = vmatpush2.msra.mxu0 0.0
  %3255 = vmatprep.subr.mxu0 0.0
  %3256 = vmatpush2.msra.mxu0 0.0
  %3257 = vmatprep.subr.mxu0 0.0
  %3258 = vmatpush2.msra.mxu0 0.0
  %3259 = vmatprep.subr.mxu0 0.0
  %3260 = vmatpush2.msra.mxu0 0.0
  %3261 = vmatprep.subr.mxu0 0.0
  %3262 = vmatpush2.msra.mxu0 0.0
  %3263 = vmatprep.subr.mxu0 0.0
  %3264 = vmatpush2.msra.mxu0 0.0
  %3265 = vmatprep.subr.mxu0 0.0
  %3266 = vmatpush2.msra.mxu0 0.0
  %3267 = vmatprep.subr.mxu0 0.0
  %3268 = vmatpush2.msra.mxu0 0.0
  %3269 = vmatprep.mubr.f32.mxu0 0.0
  %3270 = vmatmul.mubr.f32.gmra.mxu0 %v3203
  %v3271 = vpop.f32.mrf.mxu0
  %v3272 = vadd.f32 0.0, %v3271
  %v3273 = vpop.f32.mrf.mxu0
  %v3274 = vadd.f32 0.0, %v3273
  %3275 = vdwg.mxu0
  %v3277 = vsel %vm104, %v3191, 0
  %3279 = vmatprep.subr.mxu0 0.0
  %3280 = vmatpush1.msra.mxu0 0.0
  %3281 = vmatprep.subr.mxu0 0.0
  %3282 = vmatpush1.msra.mxu0 0.0
  %3283 = vmatprep.subr.mxu0 0.0
  %3284 = vmatpush1.msra.mxu0 0.0
  %3285 = vmatprep.subr.mxu0 0.0
  %3286 = vmatpush1.msra.mxu0 0.0
  %3287 = vmatprep.subr.mxu0 0.0
  %3288 = vmatpush1.msra.mxu0 0.0
  %3289 = vmatprep.subr.mxu0 0.0
  %3290 = vmatpush1.msra.mxu0 0.0
  %3291 = vmatprep.subr.mxu0 0.0
  %3292 = vmatpush1.msra.mxu0 0.0
  %3293 = vmatprep.subr.mxu0 0.0
  %3294 = vmatpush1.msra.mxu0 0.0
  %3295 = vmatprep.subr.mxu0 0.0
  %3296 = vmatpush1.msra.mxu0 0.0
  %3297 = vmatprep.subr.mxu0 0.0
  %3298 = vmatpush1.msra.mxu0 0.0
  %3299 = vmatprep.subr.mxu0 0.0
  %3300 = vmatpush1.msra.mxu0 0.0
  %3301 = vmatprep.subr.mxu0 0.0
  %3302 = vmatpush1.msra.mxu0 0.0
  %3303 = vmatprep.subr.mxu0 0.0
  %3304 = vmatpush1.msra.mxu0 0.0
  %3305 = vmatprep.subr.mxu0 0.0
  %3306 = vmatpush1.msra.mxu0 0.0
  %3307 = vmatprep.subr.mxu0 0.0
  %3308 = vmatpush1.msra.mxu0 0.0
  %3309 = vmatprep.subr.mxu0 %v3189
  %3310 = vmatpush1.msra.mxu0 %v3188
  %3311 = vmatprep.subr.mxu0 0.0
  %3312 = vmatpush2.msra.mxu0 0.0
  %3313 = vmatprep.subr.mxu0 0.0
  %3314 = vmatpush2.msra.mxu0 0.0
  %3315 = vmatprep.subr.mxu0 0.0
  %3316 = vmatpush2.msra.mxu0 0.0
  %3317 = vmatprep.subr.mxu0 0.0
  %3318 = vmatpush2.msra.mxu0 0.0
  %3319 = vmatprep.subr.mxu0 0.0
  %3320 = vmatpush2.msra.mxu0 0.0
  %3321 = vmatprep.subr.mxu0 0.0
  %3322 = vmatpush2.msra.mxu0 0.0
  %3323 = vmatprep.subr.mxu0 0.0
  %3324 = vmatpush2.msra.mxu0 0.0
  %3325 = vmatprep.subr.mxu0 0.0
  %3326 = vmatpush2.msra.mxu0 0.0
  %3327 = vmatprep.subr.mxu0 0.0
  %3328 = vmatpush2.msra.mxu0 0.0
  %3329 = vmatprep.subr.mxu0 0.0
  %3330 = vmatpush2.msra.mxu0 0.0
  %3331 = vmatprep.subr.mxu0 0.0
  %3332 = vmatpush2.msra.mxu0 0.0
  %3333 = vmatprep.subr.mxu0 0.0
  %3334 = vmatpush2.msra.mxu0 0.0
  %3335 = vmatprep.subr.mxu0 0.0
  %3336 = vmatpush2.msra.mxu0 0.0
  %3337 = vmatprep.subr.mxu0 0.0
  %3338 = vmatpush2.msra.mxu0 0.0
  %3339 = vmatprep.subr.mxu0 0.0
  %3340 = vmatpush2.msra.mxu0 0.0
  %3341 = vmatprep.subr.mxu0 0.0
  %3342 = vmatpush2.msra.mxu0 0.0
  %3343 = vmatprep.mubr.f32.mxu0 0.0
  %3344 = vmatmul.mubr.f32.gmra.mxu0 %v3277
  %v3345 = vpop.f32.mrf.mxu0
  %v3346 = vadd.f32 %v3272, %v3345
  %v3347 = vpop.f32.mrf.mxu0
  %v3348 = vadd.f32 %v3274, %v3347
  %3349 = vdwg.mxu0
  %3350 = vrot.lane.b32.xlu0 %v3180, 15
  %v3351 = vpop.permute.xlu0 %3350
  %3352 = vrot.lane.b32.xlu0 %v3181, 15
  %v3353 = vpop.permute.xlu0 %3352
  %v3354 = vsel %vm257, %v3351, %v3353
  %v3355 = vsel %vm257, %v3353, %v3351
  %v3356 = vsel %vm47, %v3355, 0.0
  %v3357 = vsel %vm48, %v3354, 0.0
  %s3358 = scalar_lea.vmem %s1, 304
  %v3359 = vld [vmem:[%s3358] sm:$0xff]
  %v3361 = vsel %vm104, %v3359, 0
  %3363 = vmatprep.subr.mxu0 0.0
  %3364 = vmatpush1.msra.mxu0 0.0
  %3365 = vmatprep.subr.mxu0 0.0
  %3366 = vmatpush1.msra.mxu0 0.0
  %3367 = vmatprep.subr.mxu0 0.0
  %3368 = vmatpush1.msra.mxu0 0.0
  %3369 = vmatprep.subr.mxu0 0.0
  %3370 = vmatpush1.msra.mxu0 0.0
  %3371 = vmatprep.subr.mxu0 0.0
  %3372 = vmatpush1.msra.mxu0 0.0
  %3373 = vmatprep.subr.mxu0 0.0
  %3374 = vmatpush1.msra.mxu0 0.0
  %3375 = vmatprep.subr.mxu0 0.0
  %3376 = vmatpush1.msra.mxu0 0.0
  %3377 = vmatprep.subr.mxu0 0.0
  %3378 = vmatpush1.msra.mxu0 0.0
  %3379 = vmatprep.subr.mxu0 0.0
  %3380 = vmatpush1.msra.mxu0 0.0
  %3381 = vmatprep.subr.mxu0 0.0
  %3382 = vmatpush1.msra.mxu0 0.0
  %3383 = vmatprep.subr.mxu0 0.0
  %3384 = vmatpush1.msra.mxu0 0.0
  %3385 = vmatprep.subr.mxu0 0.0
  %3386 = vmatpush1.msra.mxu0 0.0
  %3387 = vmatprep.subr.mxu0 0.0
  %3388 = vmatpush1.msra.mxu0 0.0
  %3389 = vmatprep.subr.mxu0 0.0
  %3390 = vmatpush1.msra.mxu0 0.0
  %3391 = vmatprep.subr.mxu0 0.0
  %3392 = vmatpush1.msra.mxu0 0.0
  %3393 = vmatprep.subr.mxu0 %v3357
  %3394 = vmatpush1.msra.mxu0 %v3356
  %3395 = vmatprep.subr.mxu0 0.0
  %3396 = vmatpush2.msra.mxu0 0.0
  %3397 = vmatprep.subr.mxu0 0.0
  %3398 = vmatpush2.msra.mxu0 0.0
  %3399 = vmatprep.subr.mxu0 0.0
  %3400 = vmatpush2.msra.mxu0 0.0
  %3401 = vmatprep.subr.mxu0 0.0
  %3402 = vmatpush2.msra.mxu0 0.0
  %3403 = vmatprep.subr.mxu0 0.0
  %3404 = vmatpush2.msra.mxu0 0.0
  %3405 = vmatprep.subr.mxu0 0.0
  %3406 = vmatpush2.msra.mxu0 0.0
  %3407 = vmatprep.subr.mxu0 0.0
  %3408 = vmatpush2.msra.mxu0 0.0
  %3409 = vmatprep.subr.mxu0 0.0
  %3410 = vmatpush2.msra.mxu0 0.0
  %3411 = vmatprep.subr.mxu0 0.0
  %3412 = vmatpush2.msra.mxu0 0.0
  %3413 = vmatprep.subr.mxu0 0.0
  %3414 = vmatpush2.msra.mxu0 0.0
  %3415 = vmatprep.subr.mxu0 0.0
  %3416 = vmatpush2.msra.mxu0 0.0
  %3417 = vmatprep.subr.mxu0 0.0
  %3418 = vmatpush2.msra.mxu0 0.0
  %3419 = vmatprep.subr.mxu0 0.0
  %3420 = vmatpush2.msra.mxu0 0.0
  %3421 = vmatprep.subr.mxu0 0.0
  %3422 = vmatpush2.msra.mxu0 0.0
  %3423 = vmatprep.subr.mxu0 0.0
  %3424 = vmatpush2.msra.mxu0 0.0
  %3425 = vmatprep.subr.mxu0 0.0
  %3426 = vmatpush2.msra.mxu0 0.0
  %3427 = vmatprep.mubr.f32.mxu0 0.0
  %3428 = vmatmul.mubr.f32.gmra.mxu0 %v3361
  %v3429 = vpop.f32.mrf.mxu0
  %v3430 = vadd.f32 0.0, %v3429
  %v3431 = vpop.f32.mrf.mxu0
  %v3432 = vadd.f32 0.0, %v3431
  %3433 = vdwg.mxu0
  %v3434 = vadd.f32 %v3346, %v3430
  %v3435 = vadd.f32 %v3348, %v3432
  %3436 = vrot.lane.b32.xlu0 %v3180, 1
  %v3437 = vpop.permute.xlu0 %3436
  %3438 = vrot.lane.b32.xlu0 %v3181, 1
  %v3439 = vpop.permute.xlu0 %3438
  %v3440 = vsel %vm344, %v3437, %v3439
  %v3441 = vsel %vm344, %v3439, %v3437
  %v3442 = vsel %vm57, %v3441, 0.0
  %v3443 = vsel %vm58, %v3440, 0.0
  %s3444 = scalar_lea.vmem %s1, 312
  %v3445 = vld [vmem:[%s3444] sm:$0xff]
  %v3447 = vsel %vm104, %v3445, 0
  %3449 = vmatprep.subr.mxu0 0.0
  %3450 = vmatpush1.msra.mxu0 0.0
  %3451 = vmatprep.subr.mxu0 0.0
  %3452 = vmatpush1.msra.mxu0 0.0
  %3453 = vmatprep.subr.mxu0 0.0
  %3454 = vmatpush1.msra.mxu0 0.0
  %3455 = vmatprep.subr.mxu0 0.0
  %3456 = vmatpush1.msra.mxu0 0.0
  %3457 = vmatprep.subr.mxu0 0.0
  %3458 = vmatpush1.msra.mxu0 0.0
  %3459 = vmatprep.subr.mxu0 0.0
  %3460 = vmatpush1.msra.mxu0 0.0
  %3461 = vmatprep.subr.mxu0 0.0
  %3462 = vmatpush1.msra.mxu0 0.0
  %3463 = vmatprep.subr.mxu0 0.0
  %3464 = vmatpush1.msra.mxu0 0.0
  %3465 = vmatprep.subr.mxu0 0.0
  %3466 = vmatpush1.msra.mxu0 0.0
  %3467 = vmatprep.subr.mxu0 0.0
  %3468 = vmatpush1.msra.mxu0 0.0
  %3469 = vmatprep.subr.mxu0 0.0
  %3470 = vmatpush1.msra.mxu0 0.0
  %3471 = vmatprep.subr.mxu0 0.0
  %3472 = vmatpush1.msra.mxu0 0.0
  %3473 = vmatprep.subr.mxu0 0.0
  %3474 = vmatpush1.msra.mxu0 0.0
  %3475 = vmatprep.subr.mxu0 0.0
  %3476 = vmatpush1.msra.mxu0 0.0
  %3477 = vmatprep.subr.mxu0 0.0
  %3478 = vmatpush1.msra.mxu0 0.0
  %3479 = vmatprep.subr.mxu0 %v3443
  %3480 = vmatpush1.msra.mxu0 %v3442
  %3481 = vmatprep.subr.mxu0 0.0
  %3482 = vmatpush2.msra.mxu0 0.0
  %3483 = vmatprep.subr.mxu0 0.0
  %3484 = vmatpush2.msra.mxu0 0.0
  %3485 = vmatprep.subr.mxu0 0.0
  %3486 = vmatpush2.msra.mxu0 0.0
  %3487 = vmatprep.subr.mxu0 0.0
  %3488 = vmatpush2.msra.mxu0 0.0
  %3489 = vmatprep.subr.mxu0 0.0
  %3490 = vmatpush2.msra.mxu0 0.0
  %3491 = vmatprep.subr.mxu0 0.0
  %3492 = vmatpush2.msra.mxu0 0.0
  %3493 = vmatprep.subr.mxu0 0.0
  %3494 = vmatpush2.msra.mxu0 0.0
  %3495 = vmatprep.subr.mxu0 0.0
  %3496 = vmatpush2.msra.mxu0 0.0
  %3497 = vmatprep.subr.mxu0 0.0
  %3498 = vmatpush2.msra.mxu0 0.0
  %3499 = vmatprep.subr.mxu0 0.0
  %3500 = vmatpush2.msra.mxu0 0.0
  %3501 = vmatprep.subr.mxu0 0.0
  %3502 = vmatpush2.msra.mxu0 0.0
  %3503 = vmatprep.subr.mxu0 0.0
  %3504 = vmatpush2.msra.mxu0 0.0
  %3505 = vmatprep.subr.mxu0 0.0
  %3506 = vmatpush2.msra.mxu0 0.0
  %3507 = vmatprep.subr.mxu0 0.0
  %3508 = vmatpush2.msra.mxu0 0.0
  %3509 = vmatprep.subr.mxu0 0.0
  %3510 = vmatpush2.msra.mxu0 0.0
  %3511 = vmatprep.subr.mxu0 0.0
  %3512 = vmatpush2.msra.mxu0 0.0
  %3513 = vmatprep.mubr.f32.mxu0 0.0
  %3514 = vmatmul.mubr.f32.gmra.mxu0 %v3447
  %v3515 = vpop.f32.mrf.mxu0
  %v3516 = vadd.f32 0.0, %v3515
  %v3517 = vpop.f32.mrf.mxu0
  %v3518 = vadd.f32 0.0, %v3517
  %3519 = vdwg.mxu0
  %v3520 = vadd.f32 %v3434, %v3516
  %v3521 = vadd.f32 %v3435, %v3518
  %s3522 = scalar_lea.vmem %s1, 320
  %v3523 = vld [vmem:[%s3522] sm:$0xff]
  %v3525 = vsel %vm104, %v3523, 0
  %3527 = vmatprep.subr.mxu0 0.0
  %3528 = vmatpush1.msra.mxu0 0.0
  %3529 = vmatprep.subr.mxu0 0.0
  %3530 = vmatpush1.msra.mxu0 0.0
  %3531 = vmatprep.subr.mxu0 0.0
  %3532 = vmatpush1.msra.mxu0 0.0
  %3533 = vmatprep.subr.mxu0 0.0
  %3534 = vmatpush1.msra.mxu0 0.0
  %3535 = vmatprep.subr.mxu0 0.0
  %3536 = vmatpush1.msra.mxu0 0.0
  %3537 = vmatprep.subr.mxu0 0.0
  %3538 = vmatpush1.msra.mxu0 0.0
  %3539 = vmatprep.subr.mxu0 0.0
  %3540 = vmatpush1.msra.mxu0 0.0
  %3541 = vmatprep.subr.mxu0 0.0
  %3542 = vmatpush1.msra.mxu0 0.0
  %3543 = vmatprep.subr.mxu0 0.0
  %3544 = vmatpush1.msra.mxu0 0.0
  %3545 = vmatprep.subr.mxu0 0.0
  %3546 = vmatpush1.msra.mxu0 0.0
  %3547 = vmatprep.subr.mxu0 0.0
  %3548 = vmatpush1.msra.mxu0 0.0
  %3549 = vmatprep.subr.mxu0 0.0
  %3550 = vmatpush1.msra.mxu0 0.0
  %3551 = vmatprep.subr.mxu0 0.0
  %3552 = vmatpush1.msra.mxu0 0.0
  %3553 = vmatprep.subr.mxu0 0.0
  %3554 = vmatpush1.msra.mxu0 0.0
  %3555 = vmatprep.subr.mxu0 0.0
  %3556 = vmatpush1.msra.mxu0 0.0
  %3557 = vmatprep.subr.mxu0 %v3181
  %3558 = vmatpush1.msra.mxu0 %v3180
  %3559 = vmatprep.subr.mxu0 0.0
  %3560 = vmatpush2.msra.mxu0 0.0
  %3561 = vmatprep.subr.mxu0 0.0
  %3562 = vmatpush2.msra.mxu0 0.0
  %3563 = vmatprep.subr.mxu0 0.0
  %3564 = vmatpush2.msra.mxu0 0.0
  %3565 = vmatprep.subr.mxu0 0.0
  %3566 = vmatpush2.msra.mxu0 0.0
  %3567 = vmatprep.subr.mxu0 0.0
  %3568 = vmatpush2.msra.mxu0 0.0
  %3569 = vmatprep.subr.mxu0 0.0
  %3570 = vmatpush2.msra.mxu0 0.0
  %3571 = vmatprep.subr.mxu0 0.0
  %3572 = vmatpush2.msra.mxu0 0.0
  %3573 = vmatprep.subr.mxu0 0.0
  %3574 = vmatpush2.msra.mxu0 0.0
  %3575 = vmatprep.subr.mxu0 0.0
  %3576 = vmatpush2.msra.mxu0 0.0
  %3577 = vmatprep.subr.mxu0 0.0
  %3578 = vmatpush2.msra.mxu0 0.0
  %3579 = vmatprep.subr.mxu0 0.0
  %3580 = vmatpush2.msra.mxu0 0.0
  %3581 = vmatprep.subr.mxu0 0.0
  %3582 = vmatpush2.msra.mxu0 0.0
  %3583 = vmatprep.subr.mxu0 0.0
  %3584 = vmatpush2.msra.mxu0 0.0
  %3585 = vmatprep.subr.mxu0 0.0
  %3586 = vmatpush2.msra.mxu0 0.0
  %3587 = vmatprep.subr.mxu0 0.0
  %3588 = vmatpush2.msra.mxu0 0.0
  %3589 = vmatprep.subr.mxu0 0.0
  %3590 = vmatpush2.msra.mxu0 0.0
  %3591 = vmatprep.mubr.f32.mxu0 0.0
  %3592 = vmatmul.mubr.f32.gmra.mxu0 %v3525
  %v3593 = vpop.f32.mrf.mxu0
  %v3594 = vadd.f32 0.0, %v3593
  %v3595 = vpop.f32.mrf.mxu0
  %v3596 = vadd.f32 0.0, %v3595
  %3597 = vdwg.mxu0
  %v3598 = vadd.f32 %v3520, %v3594
  %v3599 = vadd.f32 %v3521, %v3596
  %3600 = vrot.lane.b32.xlu0 %v3180, 127
  %v3601 = vpop.permute.xlu0 %3600
  %3602 = vrot.lane.b32.xlu0 %v3181, 127
  %v3603 = vpop.permute.xlu0 %3602
  %v3604 = vsel %vm509, %v3601, %v3603
  %v3605 = vsel %vm509, %v3603, %v3601
  %v3606 = vsel %vm61, %v3604, 0.0
  %v3607 = vsel %vm62, %v3605, 0.0
  %s3608 = scalar_lea.vmem %s1, 328
  %v3609 = vld [vmem:[%s3608] sm:$0xff]
  %v3611 = vsel %vm104, %v3609, 0
  %3613 = vmatprep.subr.mxu0 0.0
  %3614 = vmatpush1.msra.mxu0 0.0
  %3615 = vmatprep.subr.mxu0 0.0
  %3616 = vmatpush1.msra.mxu0 0.0
  %3617 = vmatprep.subr.mxu0 0.0
  %3618 = vmatpush1.msra.mxu0 0.0
  %3619 = vmatprep.subr.mxu0 0.0
  %3620 = vmatpush1.msra.mxu0 0.0
  %3621 = vmatprep.subr.mxu0 0.0
  %3622 = vmatpush1.msra.mxu0 0.0
  %3623 = vmatprep.subr.mxu0 0.0
  %3624 = vmatpush1.msra.mxu0 0.0
  %3625 = vmatprep.subr.mxu0 0.0
  %3626 = vmatpush1.msra.mxu0 0.0
  %3627 = vmatprep.subr.mxu0 0.0
  %3628 = vmatpush1.msra.mxu0 0.0
  %3629 = vmatprep.subr.mxu0 0.0
  %3630 = vmatpush1.msra.mxu0 0.0
  %3631 = vmatprep.subr.mxu0 0.0
  %3632 = vmatpush1.msra.mxu0 0.0
  %3633 = vmatprep.subr.mxu0 0.0
  %3634 = vmatpush1.msra.mxu0 0.0
  %3635 = vmatprep.subr.mxu0 0.0
  %3636 = vmatpush1.msra.mxu0 0.0
  %3637 = vmatprep.subr.mxu0 0.0
  %3638 = vmatpush1.msra.mxu0 0.0
  %3639 = vmatprep.subr.mxu0 0.0
  %3640 = vmatpush1.msra.mxu0 0.0
  %3641 = vmatprep.subr.mxu0 0.0
  %3642 = vmatpush1.msra.mxu0 0.0
  %3643 = vmatprep.subr.mxu0 %v3607
  %3644 = vmatpush1.msra.mxu0 %v3606
  %3645 = vmatprep.subr.mxu0 0.0
  %3646 = vmatpush2.msra.mxu0 0.0
  %3647 = vmatprep.subr.mxu0 0.0
  %3648 = vmatpush2.msra.mxu0 0.0
  %3649 = vmatprep.subr.mxu0 0.0
  %3650 = vmatpush2.msra.mxu0 0.0
  %3651 = vmatprep.subr.mxu0 0.0
  %3652 = vmatpush2.msra.mxu0 0.0
  %3653 = vmatprep.subr.mxu0 0.0
  %3654 = vmatpush2.msra.mxu0 0.0
  %3655 = vmatprep.subr.mxu0 0.0
  %3656 = vmatpush2.msra.mxu0 0.0
  %3657 = vmatprep.subr.mxu0 0.0
  %3658 = vmatpush2.msra.mxu0 0.0
  %3659 = vmatprep.subr.mxu0 0.0
  %3660 = vmatpush2.msra.mxu0 0.0
  %3661 = vmatprep.subr.mxu0 0.0
  %3662 = vmatpush2.msra.mxu0 0.0
  %3663 = vmatprep.subr.mxu0 0.0
  %3664 = vmatpush2.msra.mxu0 0.0
  %3665 = vmatprep.subr.mxu0 0.0
  %3666 = vmatpush2.msra.mxu0 0.0
  %3667 = vmatprep.subr.mxu0 0.0
  %3668 = vmatpush2.msra.mxu0 0.0
  %3669 = vmatprep.subr.mxu0 0.0
  %3670 = vmatpush2.msra.mxu0 0.0
  %3671 = vmatprep.subr.mxu0 0.0
  %3672 = vmatpush2.msra.mxu0 0.0
  %3673 = vmatprep.subr.mxu0 0.0
  %3674 = vmatpush2.msra.mxu0 0.0
  %3675 = vmatprep.subr.mxu0 0.0
  %3676 = vmatpush2.msra.mxu0 0.0
  %3677 = vmatprep.mubr.f32.mxu0 0.0
  %3678 = vmatmul.mubr.f32.gmra.mxu0 %v3611
  %v3679 = vpop.f32.mrf.mxu0
  %v3680 = vadd.f32 0.0, %v3679
  %v3681 = vpop.f32.mrf.mxu0
  %v3682 = vadd.f32 0.0, %v3681
  %3683 = vdwg.mxu0
  %v3684 = vadd.f32 %v3598, %v3680
  %v3685 = vadd.f32 %v3599, %v3682
  %3686 = vrot.lane.b32.xlu0 %v3180, 113
  %v3687 = vpop.permute.xlu0 %3686
  %3688 = vrot.lane.b32.xlu0 %v3181, 113
  %v3689 = vpop.permute.xlu0 %3688
  %v3690 = vsel %vm596, %v3687, %v3689
  %v3691 = vsel %vm596, %v3689, %v3687
  %v3692 = vsel %vm71, %v3690, 0.0
  %v3693 = vsel %vm72, %v3691, 0.0
  %s3694 = scalar_lea.vmem %s1, 336
  %v3695 = vld [vmem:[%s3694] sm:$0xff]
  %v3697 = vsel %vm104, %v3695, 0
  %3699 = vmatprep.subr.mxu0 0.0
  %3700 = vmatpush1.msra.mxu0 0.0
  %3701 = vmatprep.subr.mxu0 0.0
  %3702 = vmatpush1.msra.mxu0 0.0
  %3703 = vmatprep.subr.mxu0 0.0
  %3704 = vmatpush1.msra.mxu0 0.0
  %3705 = vmatprep.subr.mxu0 0.0
  %3706 = vmatpush1.msra.mxu0 0.0
  %3707 = vmatprep.subr.mxu0 0.0
  %3708 = vmatpush1.msra.mxu0 0.0
  %3709 = vmatprep.subr.mxu0 0.0
  %3710 = vmatpush1.msra.mxu0 0.0
  %3711 = vmatprep.subr.mxu0 0.0
  %3712 = vmatpush1.msra.mxu0 0.0
  %3713 = vmatprep.subr.mxu0 0.0
  %3714 = vmatpush1.msra.mxu0 0.0
  %3715 = vmatprep.subr.mxu0 0.0
  %3716 = vmatpush1.msra.mxu0 0.0
  %3717 = vmatprep.subr.mxu0 0.0
  %3718 = vmatpush1.msra.mxu0 0.0
  %3719 = vmatprep.subr.mxu0 0.0
  %3720 = vmatpush1.msra.mxu0 0.0
  %3721 = vmatprep.subr.mxu0 0.0
  %3722 = vmatpush1.msra.mxu0 0.0
  %3723 = vmatprep.subr.mxu0 0.0
  %3724 = vmatpush1.msra.mxu0 0.0
  %3725 = vmatprep.subr.mxu0 0.0
  %3726 = vmatpush1.msra.mxu0 0.0
  %3727 = vmatprep.subr.mxu0 0.0
  %3728 = vmatpush1.msra.mxu0 0.0
  %3729 = vmatprep.subr.mxu0 %v3693
  %3730 = vmatpush1.msra.mxu0 %v3692
  %3731 = vmatprep.subr.mxu0 0.0
  %3732 = vmatpush2.msra.mxu0 0.0
  %3733 = vmatprep.subr.mxu0 0.0
  %3734 = vmatpush2.msra.mxu0 0.0
  %3735 = vmatprep.subr.mxu0 0.0
  %3736 = vmatpush2.msra.mxu0 0.0
  %3737 = vmatprep.subr.mxu0 0.0
  %3738 = vmatpush2.msra.mxu0 0.0
  %3739 = vmatprep.subr.mxu0 0.0
  %3740 = vmatpush2.msra.mxu0 0.0
  %3741 = vmatprep.subr.mxu0 0.0
  %3742 = vmatpush2.msra.mxu0 0.0
  %3743 = vmatprep.subr.mxu0 0.0
  %3744 = vmatpush2.msra.mxu0 0.0
  %3745 = vmatprep.subr.mxu0 0.0
  %3746 = vmatpush2.msra.mxu0 0.0
  %3747 = vmatprep.subr.mxu0 0.0
  %3748 = vmatpush2.msra.mxu0 0.0
  %3749 = vmatprep.subr.mxu0 0.0
  %3750 = vmatpush2.msra.mxu0 0.0
  %3751 = vmatprep.subr.mxu0 0.0
  %3752 = vmatpush2.msra.mxu0 0.0
  %3753 = vmatprep.subr.mxu0 0.0
  %3754 = vmatpush2.msra.mxu0 0.0
  %3755 = vmatprep.subr.mxu0 0.0
  %3756 = vmatpush2.msra.mxu0 0.0
  %3757 = vmatprep.subr.mxu0 0.0
  %3758 = vmatpush2.msra.mxu0 0.0
  %3759 = vmatprep.subr.mxu0 0.0
  %3760 = vmatpush2.msra.mxu0 0.0
  %3761 = vmatprep.subr.mxu0 0.0
  %3762 = vmatpush2.msra.mxu0 0.0
  %3763 = vmatprep.mubr.f32.mxu0 0.0
  %3764 = vmatmul.mubr.f32.gmra.mxu0 %v3697
  %v3765 = vpop.f32.mrf.mxu0
  %v3766 = vadd.f32 0.0, %v3765
  %v3767 = vpop.f32.mrf.mxu0
  %v3768 = vadd.f32 0.0, %v3767
  %3769 = vdwg.mxu0
  %v3770 = vadd.f32 %v3684, %v3766
  %v3771 = vadd.f32 %v3685, %v3768
  %3772 = vrot.lane.b32.xlu0 %v3180, 112
  %v3773 = vpop.permute.xlu0 %3772
  %3774 = vrot.lane.b32.xlu0 %v3181, 112
  %v3775 = vpop.permute.xlu0 %3774
  %v3776 = vsel %vm683, %v3773, %v3775
  %v3777 = vsel %vm683, %v3775, %v3773
  %v3778 = vsel %vm75, %v3776, 0.0
  %v3779 = vsel %vm76, %v3777, 0.0
  %s3780 = scalar_lea.vmem %s1, 344
  %v3781 = vld [vmem:[%s3780] sm:$0xff]
  %v3783 = vsel %vm104, %v3781, 0
  %3785 = vmatprep.subr.mxu0 0.0
  %3786 = vmatpush1.msra.mxu0 0.0
  %3787 = vmatprep.subr.mxu0 0.0
  %3788 = vmatpush1.msra.mxu0 0.0
  %3789 = vmatprep.subr.mxu0 0.0
  %3790 = vmatpush1.msra.mxu0 0.0
  %3791 = vmatprep.subr.mxu0 0.0
  %3792 = vmatpush1.msra.mxu0 0.0
  %3793 = vmatprep.subr.mxu0 0.0
  %3794 = vmatpush1.msra.mxu0 0.0
  %3795 = vmatprep.subr.mxu0 0.0
  %3796 = vmatpush1.msra.mxu0 0.0
  %3797 = vmatprep.subr.mxu0 0.0
  %3798 = vmatpush1.msra.mxu0 0.0
  %3799 = vmatprep.subr.mxu0 0.0
  %3800 = vmatpush1.msra.mxu0 0.0
  %3801 = vmatprep.subr.mxu0 0.0
  %3802 = vmatpush1.msra.mxu0 0.0
  %3803 = vmatprep.subr.mxu0 0.0
  %3804 = vmatpush1.msra.mxu0 0.0
  %3805 = vmatprep.subr.mxu0 0.0
  %3806 = vmatpush1.msra.mxu0 0.0
  %3807 = vmatprep.subr.mxu0 0.0
  %3808 = vmatpush1.msra.mxu0 0.0
  %3809 = vmatprep.subr.mxu0 0.0
  %3810 = vmatpush1.msra.mxu0 0.0
  %3811 = vmatprep.subr.mxu0 0.0
  %3812 = vmatpush1.msra.mxu0 0.0
  %3813 = vmatprep.subr.mxu0 0.0
  %3814 = vmatpush1.msra.mxu0 0.0
  %3815 = vmatprep.subr.mxu0 %v3779
  %3816 = vmatpush1.msra.mxu0 %v3778
  %3817 = vmatprep.subr.mxu0 0.0
  %3818 = vmatpush2.msra.mxu0 0.0
  %3819 = vmatprep.subr.mxu0 0.0
  %3820 = vmatpush2.msra.mxu0 0.0
  %3821 = vmatprep.subr.mxu0 0.0
  %3822 = vmatpush2.msra.mxu0 0.0
  %3823 = vmatprep.subr.mxu0 0.0
  %3824 = vmatpush2.msra.mxu0 0.0
  %3825 = vmatprep.subr.mxu0 0.0
  %3826 = vmatpush2.msra.mxu0 0.0
  %3827 = vmatprep.subr.mxu0 0.0
  %3828 = vmatpush2.msra.mxu0 0.0
  %3829 = vmatprep.subr.mxu0 0.0
  %3830 = vmatpush2.msra.mxu0 0.0
  %3831 = vmatprep.subr.mxu0 0.0
  %3832 = vmatpush2.msra.mxu0 0.0
  %3833 = vmatprep.subr.mxu0 0.0
  %3834 = vmatpush2.msra.mxu0 0.0
  %3835 = vmatprep.subr.mxu0 0.0
  %3836 = vmatpush2.msra.mxu0 0.0
  %3837 = vmatprep.subr.mxu0 0.0
  %3838 = vmatpush2.msra.mxu0 0.0
  %3839 = vmatprep.subr.mxu0 0.0
  %3840 = vmatpush2.msra.mxu0 0.0
  %3841 = vmatprep.subr.mxu0 0.0
  %3842 = vmatpush2.msra.mxu0 0.0
  %3843 = vmatprep.subr.mxu0 0.0
  %3844 = vmatpush2.msra.mxu0 0.0
  %3845 = vmatprep.subr.mxu0 0.0
  %3846 = vmatpush2.msra.mxu0 0.0
  %3847 = vmatprep.subr.mxu0 0.0
  %3848 = vmatpush2.msra.mxu0 0.0
  %3849 = vmatprep.mubr.f32.mxu0 0.0
  %3850 = vmatmul.mubr.f32.gmra.mxu0 %v3783
  %v3851 = vpop.f32.mrf.mxu0
  %v3852 = vadd.f32 0.0, %v3851
  %v3853 = vpop.f32.mrf.mxu0
  %v3854 = vadd.f32 0.0, %v3853
  %3855 = vdwg.mxu0
  %v3856 = vadd.f32 %v3770, %v3852
  %v3857 = vadd.f32 %v3771, %v3854
  %3858 = vrot.lane.b32.xlu0 %v3180, 111
  %v3859 = vpop.permute.xlu0 %3858
  %3860 = vrot.lane.b32.xlu0 %v3181, 111
  %v3861 = vpop.permute.xlu0 %3860
  %v3862 = vsel %vm770, %v3859, %v3861
  %v3863 = vsel %vm770, %v3861, %v3859
  %v3864 = vsel %vm79, %v3862, 0.0
  %v3865 = vsel %vm80, %v3863, 0.0
  %s3866 = scalar_lea.vmem %s1, 352
  %v3867 = vld [vmem:[%s3866] sm:$0xff]
  %v3869 = vsel %vm104, %v3867, 0
  %3871 = vmatprep.subr.mxu0 0.0
  %3872 = vmatpush1.msra.mxu0 0.0
  %3873 = vmatprep.subr.mxu0 0.0
  %3874 = vmatpush1.msra.mxu0 0.0
  %3875 = vmatprep.subr.mxu0 0.0
  %3876 = vmatpush1.msra.mxu0 0.0
  %3877 = vmatprep.subr.mxu0 0.0
  %3878 = vmatpush1.msra.mxu0 0.0
  %3879 = vmatprep.subr.mxu0 0.0
  %3880 = vmatpush1.msra.mxu0 0.0
  %3881 = vmatprep.subr.mxu0 0.0
  %3882 = vmatpush1.msra.mxu0 0.0
  %3883 = vmatprep.subr.mxu0 0.0
  %3884 = vmatpush1.msra.mxu0 0.0
  %3885 = vmatprep.subr.mxu0 0.0
  %3886 = vmatpush1.msra.mxu0 0.0
  %3887 = vmatprep.subr.mxu0 0.0
  %3888 = vmatpush1.msra.mxu0 0.0
  %3889 = vmatprep.subr.mxu0 0.0
  %3890 = vmatpush1.msra.mxu0 0.0
  %3891 = vmatprep.subr.mxu0 0.0
  %3892 = vmatpush1.msra.mxu0 0.0
  %3893 = vmatprep.subr.mxu0 0.0
  %3894 = vmatpush1.msra.mxu0 0.0
  %3895 = vmatprep.subr.mxu0 0.0
  %3896 = vmatpush1.msra.mxu0 0.0
  %3897 = vmatprep.subr.mxu0 0.0
  %3898 = vmatpush1.msra.mxu0 0.0
  %3899 = vmatprep.subr.mxu0 0.0
  %3900 = vmatpush1.msra.mxu0 0.0
  %3901 = vmatprep.subr.mxu0 %v3865
  %3902 = vmatpush1.msra.mxu0 %v3864
  %3903 = vmatprep.subr.mxu0 0.0
  %3904 = vmatpush2.msra.mxu0 0.0
  %3905 = vmatprep.subr.mxu0 0.0
  %3906 = vmatpush2.msra.mxu0 0.0
  %3907 = vmatprep.subr.mxu0 0.0
  %3908 = vmatpush2.msra.mxu0 0.0
  %3909 = vmatprep.subr.mxu0 0.0
  %3910 = vmatpush2.msra.mxu0 0.0
  %3911 = vmatprep.subr.mxu0 0.0
  %3912 = vmatpush2.msra.mxu0 0.0
  %3913 = vmatprep.subr.mxu0 0.0
  %3914 = vmatpush2.msra.mxu0 0.0
  %3915 = vmatprep.subr.mxu0 0.0
  %3916 = vmatpush2.msra.mxu0 0.0
  %3917 = vmatprep.subr.mxu0 0.0
  %3918 = vmatpush2.msra.mxu0 0.0
  %3919 = vmatprep.subr.mxu0 0.0
  %3920 = vmatpush2.msra.mxu0 0.0
  %3921 = vmatprep.subr.mxu0 0.0
  %3922 = vmatpush2.msra.mxu0 0.0
  %3923 = vmatprep.subr.mxu0 0.0
  %3924 = vmatpush2.msra.mxu0 0.0
  %3925 = vmatprep.subr.mxu0 0.0
  %3926 = vmatpush2.msra.mxu0 0.0
  %3927 = vmatprep.subr.mxu0 0.0
  %3928 = vmatpush2.msra.mxu0 0.0
  %3929 = vmatprep.subr.mxu0 0.0
  %3930 = vmatpush2.msra.mxu0 0.0
  %3931 = vmatprep.subr.mxu0 0.0
  %3932 = vmatpush2.msra.mxu0 0.0
  %3933 = vmatprep.subr.mxu0 0.0
  %3934 = vmatpush2.msra.mxu0 0.0
  %3935 = vmatprep.mubr.f32.mxu0 0.0
  %3936 = vmatmul.mubr.f32.gmra.mxu0 %v3869
  %v3937 = vpop.f32.mrf.mxu0
  %v3938 = vadd.f32 0.0, %v3937
  %v3939 = vpop.f32.mrf.mxu0
  %v3940 = vadd.f32 0.0, %v3939
  %3941 = vdwg.mxu0
  %v3942 = vadd.f32 %v3856, %v3938
  %v3943 = vadd.f32 %v3857, %v3940
  %s3944 = scalar_lea.vmem %s2, 32
  %v3945 = vld [vmem:[%s3944] sm:$0xff]
  %3947 = vset.pattern.permute.xlu0 0
  %3948 = vperm.xlu0 %3947, %v3945
  %v3949 = vpop.permute.xlu0 %3948
  %v3951 = vadd.f32 %v3942, %v3949
  %v3952 = vadd.f32 %v3943, %v3949
  %v3953 = vmax.f32 %v3951, 0.0
  %v3954 = vmax.f32 %v3952, 0.0
  %3955 = vrot.lane.b32.xlu0 %v3953, 17
  %v3956 = vpop.permute.xlu0 %3955
  %3957 = vrot.lane.b32.xlu0 %v3954, 17
  %v3958 = vpop.permute.xlu0 %3957
  %v3959 = vsel %vm87, %v3956, %v3958
  %v3960 = vsel %vm87, %v3958, %v3956
  %v3961 = vsel %vm31, %v3960, 0.0
  %v3962 = vsel %vm32, %v3959, 0.0
  %s3963 = scalar_lea.vmem %s1, 360
  %v3964 = vld [vmem:[%s3963] sm:$0xff]
  %3965 = vrot.lane.b32.xlu0 %v3953, 16
  %v3966 = vpop.permute.xlu0 %3965
  %3967 = vrot.lane.b32.xlu0 %v3954, 16
  %v3968 = vpop.permute.xlu0 %3967
  %v3969 = vsel %vm97, %v3966, %v3968
  %v3970 = vsel %vm97, %v3968, %v3966
  %v3971 = vsel %vm39, %v3970, 0.0
  %v3972 = vsel %vm40, %v3969, 0.0
  %s3973 = scalar_lea.vmem %s1, 368
  %v3974 = vld [vmem:[%s3973] sm:$0xff]
  %v3976 = vsel %vm104, %v3974, 0
  %3978 = vmatprep.subr.mxu0 0.0
  %3979 = vmatpush1.msra.mxu0 0.0
  %3980 = vmatprep.subr.mxu0 0.0
  %3981 = vmatpush1.msra.mxu0 0.0
  %3982 = vmatprep.subr.mxu0 0.0
  %3983 = vmatpush1.msra.mxu0 0.0
  %3984 = vmatprep.subr.mxu0 0.0
  %3985 = vmatpush1.msra.mxu0 0.0
  %3986 = vmatprep.subr.mxu0 0.0
  %3987 = vmatpush1.msra.mxu0 0.0
  %3988 = vmatprep.subr.mxu0 0.0
  %3989 = vmatpush1.msra.mxu0 0.0
  %3990 = vmatprep.subr.mxu0 0.0
  %3991 = vmatpush1.msra.mxu0 0.0
  %3992 = vmatprep.subr.mxu0 0.0
  %3993 = vmatpush1.msra.mxu0 0.0
  %3994 = vmatprep.subr.mxu0 0.0
  %3995 = vmatpush1.msra.mxu0 0.0
  %3996 = vmatprep.subr.mxu0 0.0
  %3997 = vmatpush1.msra.mxu0 0.0
  %3998 = vmatprep.subr.mxu0 0.0
  %3999 = vmatpush1.msra.mxu0 0.0
  %4000 = vmatprep.subr.mxu0 0.0
  %4001 = vmatpush1.msra.mxu0 0.0
  %4002 = vmatprep.subr.mxu0 0.0
  %4003 = vmatpush1.msra.mxu0 0.0
  %4004 = vmatprep.subr.mxu0 0.0
  %4005 = vmatpush1.msra.mxu0 0.0
  %4006 = vmatprep.subr.mxu0 0.0
  %4007 = vmatpush1.msra.mxu0 0.0
  %4008 = vmatprep.subr.mxu0 %v3972
  %4009 = vmatpush1.msra.mxu0 %v3971
  %4010 = vmatprep.subr.mxu0 0.0
  %4011 = vmatpush2.msra.mxu0 0.0
  %4012 = vmatprep.subr.mxu0 0.0
  %4013 = vmatpush2.msra.mxu0 0.0
  %4014 = vmatprep.subr.mxu0 0.0
  %4015 = vmatpush2.msra.mxu0 0.0
  %4016 = vmatprep.subr.mxu0 0.0
  %4017 = vmatpush2.msra.mxu0 0.0
  %4018 = vmatprep.subr.mxu0 0.0
  %4019 = vmatpush2.msra.mxu0 0.0
  %4020 = vmatprep.subr.mxu0 0.0
  %4021 = vmatpush2.msra.mxu0 0.0
  %4022 = vmatprep.subr.mxu0 0.0
  %4023 = vmatpush2.msra.mxu0 0.0
  %4024 = vmatprep.subr.mxu0 0.0
  %4025 = vmatpush2.msra.mxu0 0.0
  %4026 = vmatprep.subr.mxu0 0.0
  %4027 = vmatpush2.msra.mxu0 0.0
  %4028 = vmatprep.subr.mxu0 0.0
  %4029 = vmatpush2.msra.mxu0 0.0
  %4030 = vmatprep.subr.mxu0 0.0
  %4031 = vmatpush2.msra.mxu0 0.0
  %4032 = vmatprep.subr.mxu0 0.0
  %4033 = vmatpush2.msra.mxu0 0.0
  %4034 = vmatprep.subr.mxu0 0.0
  %4035 = vmatpush2.msra.mxu0 0.0
  %4036 = vmatprep.subr.mxu0 0.0
  %4037 = vmatpush2.msra.mxu0 0.0
  %4038 = vmatprep.subr.mxu0 0.0
  %4039 = vmatpush2.msra.mxu0 0.0
  %4040 = vmatprep.subr.mxu0 0.0
  %4041 = vmatpush2.msra.mxu0 0.0
  %4042 = vmatprep.mubr.f32.mxu0 0.0
  %4043 = vmatmul.mubr.f32.gmra.mxu0 %v3976
  %v4044 = vpop.f32.mrf.mxu0
  %v4045 = vadd.f32 0.0, %v4044
  %v4046 = vpop.f32.mrf.mxu0
  %v4047 = vadd.f32 0.0, %v4046
  %4048 = vdwg.mxu0
  %v4050 = vsel %vm104, %v3964, 0
  %4052 = vmatprep.subr.mxu0 0.0
  %4053 = vmatpush1.msra.mxu0 0.0
  %4054 = vmatprep.subr.mxu0 0.0
  %4055 = vmatpush1.msra.mxu0 0.0
  %4056 = vmatprep.subr.mxu0 0.0
  %4057 = vmatpush1.msra.mxu0 0.0
  %4058 = vmatprep.subr.mxu0 0.0
  %4059 = vmatpush1.msra.mxu0 0.0
  %4060 = vmatprep.subr.mxu0 0.0
  %4061 = vmatpush1.msra.mxu0 0.0
  %4062 = vmatprep.subr.mxu0 0.0
  %4063 = vmatpush1.msra.mxu0 0.0
  %4064 = vmatprep.subr.mxu0 0.0
  %4065 = vmatpush1.msra.mxu0 0.0
  %4066 = vmatprep.subr.mxu0 0.0
  %4067 = vmatpush1.msra.mxu0 0.0
  %4068 = vmatprep.subr.mxu0 0.0
  %4069 = vmatpush1.msra.mxu0 0.0
  %4070 = vmatprep.subr.mxu0 0.0
  %4071 = vmatpush1.msra.mxu0 0.0
  %4072 = vmatprep.subr.mxu0 0.0
  %4073 = vmatpush1.msra.mxu0 0.0
  %4074 = vmatprep.subr.mxu0 0.0
  %4075 = vmatpush1.msra.mxu0 0.0
  %4076 = vmatprep.subr.mxu0 0.0
  %4077 = vmatpush1.msra.mxu0 0.0
  %4078 = vmatprep.subr.mxu0 0.0
  %4079 = vmatpush1.msra.mxu0 0.0
  %4080 = vmatprep.subr.mxu0 0.0
  %4081 = vmatpush1.msra.mxu0 0.0
  %4082 = vmatprep.subr.mxu0 %v3962
  %4083 = vmatpush1.msra.mxu0 %v3961
  %4084 = vmatprep.subr.mxu0 0.0
  %4085 = vmatpush2.msra.mxu0 0.0
  %4086 = vmatprep.subr.mxu0 0.0
  %4087 = vmatpush2.msra.mxu0 0.0
  %4088 = vmatprep.subr.mxu0 0.0
  %4089 = vmatpush2.msra.mxu0 0.0
  %4090 = vmatprep.subr.mxu0 0.0
  %4091 = vmatpush2.msra.mxu0 0.0
  %4092 = vmatprep.subr.mxu0 0.0
  %4093 = vmatpush2.msra.mxu0 0.0
  %4094 = vmatprep.subr.mxu0 0.0
  %4095 = vmatpush2.msra.mxu0 0.0
  %4096 = vmatprep.subr.mxu0 0.0
  %4097 = vmatpush2.msra.mxu0 0.0
  %4098 = vmatprep.subr.mxu0 0.0
  %4099 = vmatpush2.msra.mxu0 0.0
  %4100 = vmatprep.subr.mxu0 0.0
  %4101 = vmatpush2.msra.mxu0 0.0
  %4102 = vmatprep.subr.mxu0 0.0
  %4103 = vmatpush2.msra.mxu0 0.0
  %4104 = vmatprep.subr.mxu0 0.0
  %4105 = vmatpush2.msra.mxu0 0.0
  %4106 = vmatprep.subr.mxu0 0.0
  %4107 = vmatpush2.msra.mxu0 0.0
  %4108 = vmatprep.subr.mxu0 0.0
  %4109 = vmatpush2.msra.mxu0 0.0
  %4110 = vmatprep.subr.mxu0 0.0
  %4111 = vmatpush2.msra.mxu0 0.0
  %4112 = vmatprep.subr.mxu0 0.0
  %4113 = vmatpush2.msra.mxu0 0.0
  %4114 = vmatprep.subr.mxu0 0.0
  %4115 = vmatpush2.msra.mxu0 0.0
  %4116 = vmatprep.mubr.f32.mxu0 0.0
  %4117 = vmatmul.mubr.f32.gmra.mxu0 %v4050
  %v4118 = vpop.f32.mrf.mxu0
  %v4119 = vadd.f32 %v4045, %v4118
  %v4120 = vpop.f32.mrf.mxu0
  %v4121 = vadd.f32 %v4047, %v4120
  %4122 = vdwg.mxu0
  %4123 = vrot.lane.b32.xlu0 %v3953, 15
  %v4124 = vpop.permute.xlu0 %4123
  %4125 = vrot.lane.b32.xlu0 %v3954, 15
  %v4126 = vpop.permute.xlu0 %4125
  %v4127 = vsel %vm257, %v4124, %v4126
  %v4128 = vsel %vm257, %v4126, %v4124
  %v4129 = vsel %vm47, %v4128, 0.0
  %v4130 = vsel %vm48, %v4127, 0.0
  %s4131 = scalar_lea.vmem %s1, 376
  %v4132 = vld [vmem:[%s4131] sm:$0xff]
  %v4134 = vsel %vm104, %v4132, 0
  %4136 = vmatprep.subr.mxu0 0.0
  %4137 = vmatpush1.msra.mxu0 0.0
  %4138 = vmatprep.subr.mxu0 0.0
  %4139 = vmatpush1.msra.mxu0 0.0
  %4140 = vmatprep.subr.mxu0 0.0
  %4141 = vmatpush1.msra.mxu0 0.0
  %4142 = vmatprep.subr.mxu0 0.0
  %4143 = vmatpush1.msra.mxu0 0.0
  %4144 = vmatprep.subr.mxu0 0.0
  %4145 = vmatpush1.msra.mxu0 0.0
  %4146 = vmatprep.subr.mxu0 0.0
  %4147 = vmatpush1.msra.mxu0 0.0
  %4148 = vmatprep.subr.mxu0 0.0
  %4149 = vmatpush1.msra.mxu0 0.0
  %4150 = vmatprep.subr.mxu0 0.0
  %4151 = vmatpush1.msra.mxu0 0.0
  %4152 = vmatprep.subr.mxu0 0.0
  %4153 = vmatpush1.msra.mxu0 0.0
  %4154 = vmatprep.subr.mxu0 0.0
  %4155 = vmatpush1.msra.mxu0 0.0
  %4156 = vmatprep.subr.mxu0 0.0
  %4157 = vmatpush1.msra.mxu0 0.0
  %4158 = vmatprep.subr.mxu0 0.0
  %4159 = vmatpush1.msra.mxu0 0.0
  %4160 = vmatprep.subr.mxu0 0.0
  %4161 = vmatpush1.msra.mxu0 0.0
  %4162 = vmatprep.subr.mxu0 0.0
  %4163 = vmatpush1.msra.mxu0 0.0
  %4164 = vmatprep.subr.mxu0 0.0
  %4165 = vmatpush1.msra.mxu0 0.0
  %4166 = vmatprep.subr.mxu0 %v4130
  %4167 = vmatpush1.msra.mxu0 %v4129
  %4168 = vmatprep.subr.mxu0 0.0
  %4169 = vmatpush2.msra.mxu0 0.0
  %4170 = vmatprep.subr.mxu0 0.0
  %4171 = vmatpush2.msra.mxu0 0.0
  %4172 = vmatprep.subr.mxu0 0.0
  %4173 = vmatpush2.msra.mxu0 0.0
  %4174 = vmatprep.subr.mxu0 0.0
  %4175 = vmatpush2.msra.mxu0 0.0
  %4176 = vmatprep.subr.mxu0 0.0
  %4177 = vmatpush2.msra.mxu0 0.0
  %4178 = vmatprep.subr.mxu0 0.0
  %4179 = vmatpush2.msra.mxu0 0.0
  %4180 = vmatprep.subr.mxu0 0.0
  %4181 = vmatpush2.msra.mxu0 0.0
  %4182 = vmatprep.subr.mxu0 0.0
  %4183 = vmatpush2.msra.mxu0 0.0
  %4184 = vmatprep.subr.mxu0 0.0
  %4185 = vmatpush2.msra.mxu0 0.0
  %4186 = vmatprep.subr.mxu0 0.0
  %4187 = vmatpush2.msra.mxu0 0.0
  %4188 = vmatprep.subr.mxu0 0.0
  %4189 = vmatpush2.msra.mxu0 0.0
  %4190 = vmatprep.subr.mxu0 0.0
  %4191 = vmatpush2.msra.mxu0 0.0
  %4192 = vmatprep.subr.mxu0 0.0
  %4193 = vmatpush2.msra.mxu0 0.0
  %4194 = vmatprep.subr.mxu0 0.0
  %4195 = vmatpush2.msra.mxu0 0.0
  %4196 = vmatprep.subr.mxu0 0.0
  %4197 = vmatpush2.msra.mxu0 0.0
  %4198 = vmatprep.subr.mxu0 0.0
  %4199 = vmatpush2.msra.mxu0 0.0
  %4200 = vmatprep.mubr.f32.mxu0 0.0
  %4201 = vmatmul.mubr.f32.gmra.mxu0 %v4134
  %v4202 = vpop.f32.mrf.mxu0
  %v4203 = vadd.f32 0.0, %v4202
  %v4204 = vpop.f32.mrf.mxu0
  %v4205 = vadd.f32 0.0, %v4204
  %4206 = vdwg.mxu0
  %v4207 = vadd.f32 %v4119, %v4203
  %v4208 = vadd.f32 %v4121, %v4205
  %4209 = vrot.lane.b32.xlu0 %v3953, 1
  %v4210 = vpop.permute.xlu0 %4209
  %4211 = vrot.lane.b32.xlu0 %v3954, 1
  %v4212 = vpop.permute.xlu0 %4211
  %v4213 = vsel %vm344, %v4210, %v4212
  %v4214 = vsel %vm344, %v4212, %v4210
  %v4215 = vsel %vm57, %v4214, 0.0
  %v4216 = vsel %vm58, %v4213, 0.0
  %s4217 = scalar_lea.vmem %s1, 384
  %v4218 = vld [vmem:[%s4217] sm:$0xff]
  %v4220 = vsel %vm104, %v4218, 0
  %4222 = vmatprep.subr.mxu0 0.0
  %4223 = vmatpush1.msra.mxu0 0.0
  %4224 = vmatprep.subr.mxu0 0.0
  %4225 = vmatpush1.msra.mxu0 0.0
  %4226 = vmatprep.subr.mxu0 0.0
  %4227 = vmatpush1.msra.mxu0 0.0
  %4228 = vmatprep.subr.mxu0 0.0
  %4229 = vmatpush1.msra.mxu0 0.0
  %4230 = vmatprep.subr.mxu0 0.0
  %4231 = vmatpush1.msra.mxu0 0.0
  %4232 = vmatprep.subr.mxu0 0.0
  %4233 = vmatpush1.msra.mxu0 0.0
  %4234 = vmatprep.subr.mxu0 0.0
  %4235 = vmatpush1.msra.mxu0 0.0
  %4236 = vmatprep.subr.mxu0 0.0
  %4237 = vmatpush1.msra.mxu0 0.0
  %4238 = vmatprep.subr.mxu0 0.0
  %4239 = vmatpush1.msra.mxu0 0.0
  %4240 = vmatprep.subr.mxu0 0.0
  %4241 = vmatpush1.msra.mxu0 0.0
  %4242 = vmatprep.subr.mxu0 0.0
  %4243 = vmatpush1.msra.mxu0 0.0
  %4244 = vmatprep.subr.mxu0 0.0
  %4245 = vmatpush1.msra.mxu0 0.0
  %4246 = vmatprep.subr.mxu0 0.0
  %4247 = vmatpush1.msra.mxu0 0.0
  %4248 = vmatprep.subr.mxu0 0.0
  %4249 = vmatpush1.msra.mxu0 0.0
  %4250 = vmatprep.subr.mxu0 0.0
  %4251 = vmatpush1.msra.mxu0 0.0
  %4252 = vmatprep.subr.mxu0 %v4216
  %4253 = vmatpush1.msra.mxu0 %v4215
  %4254 = vmatprep.subr.mxu0 0.0
  %4255 = vmatpush2.msra.mxu0 0.0
  %4256 = vmatprep.subr.mxu0 0.0
  %4257 = vmatpush2.msra.mxu0 0.0
  %4258 = vmatprep.subr.mxu0 0.0
  %4259 = vmatpush2.msra.mxu0 0.0
  %4260 = vmatprep.subr.mxu0 0.0
  %4261 = vmatpush2.msra.mxu0 0.0
  %4262 = vmatprep.subr.mxu0 0.0
  %4263 = vmatpush2.msra.mxu0 0.0
  %4264 = vmatprep.subr.mxu0 0.0
  %4265 = vmatpush2.msra.mxu0 0.0
  %4266 = vmatprep.subr.mxu0 0.0
  %4267 = vmatpush2.msra.mxu0 0.0
  %4268 = vmatprep.subr.mxu0 0.0
  %4269 = vmatpush2.msra.mxu0 0.0
  %4270 = vmatprep.subr.mxu0 0.0
  %4271 = vmatpush2.msra.mxu0 0.0
  %4272 = vmatprep.subr.mxu0 0.0
  %4273 = vmatpush2.msra.mxu0 0.0
  %4274 = vmatprep.subr.mxu0 0.0
  %4275 = vmatpush2.msra.mxu0 0.0
  %4276 = vmatprep.subr.mxu0 0.0
  %4277 = vmatpush2.msra.mxu0 0.0
  %4278 = vmatprep.subr.mxu0 0.0
  %4279 = vmatpush2.msra.mxu0 0.0
  %4280 = vmatprep.subr.mxu0 0.0
  %4281 = vmatpush2.msra.mxu0 0.0
  %4282 = vmatprep.subr.mxu0 0.0
  %4283 = vmatpush2.msra.mxu0 0.0
  %4284 = vmatprep.subr.mxu0 0.0
  %4285 = vmatpush2.msra.mxu0 0.0
  %4286 = vmatprep.mubr.f32.mxu0 0.0
  %4287 = vmatmul.mubr.f32.gmra.mxu0 %v4220
  %v4288 = vpop.f32.mrf.mxu0
  %v4289 = vadd.f32 0.0, %v4288
  %v4290 = vpop.f32.mrf.mxu0
  %v4291 = vadd.f32 0.0, %v4290
  %4292 = vdwg.mxu0
  %v4293 = vadd.f32 %v4207, %v4289
  %v4294 = vadd.f32 %v4208, %v4291
  %s4295 = scalar_lea.vmem %s1, 392
  %v4296 = vld [vmem:[%s4295] sm:$0xff]
  %v4298 = vsel %vm104, %v4296, 0
  %4300 = vmatprep.subr.mxu0 0.0
  %4301 = vmatpush1.msra.mxu0 0.0
  %4302 = vmatprep.subr.mxu0 0.0
  %4303 = vmatpush1.msra.mxu0 0.0
  %4304 = vmatprep.subr.mxu0 0.0
  %4305 = vmatpush1.msra.mxu0 0.0
  %4306 = vmatprep.subr.mxu0 0.0
  %4307 = vmatpush1.msra.mxu0 0.0
  %4308 = vmatprep.subr.mxu0 0.0
  %4309 = vmatpush1.msra.mxu0 0.0
  %4310 = vmatprep.subr.mxu0 0.0
  %4311 = vmatpush1.msra.mxu0 0.0
  %4312 = vmatprep.subr.mxu0 0.0
  %4313 = vmatpush1.msra.mxu0 0.0
  %4314 = vmatprep.subr.mxu0 0.0
  %4315 = vmatpush1.msra.mxu0 0.0
  %4316 = vmatprep.subr.mxu0 0.0
  %4317 = vmatpush1.msra.mxu0 0.0
  %4318 = vmatprep.subr.mxu0 0.0
  %4319 = vmatpush1.msra.mxu0 0.0
  %4320 = vmatprep.subr.mxu0 0.0
  %4321 = vmatpush1.msra.mxu0 0.0
  %4322 = vmatprep.subr.mxu0 0.0
  %4323 = vmatpush1.msra.mxu0 0.0
  %4324 = vmatprep.subr.mxu0 0.0
  %4325 = vmatpush1.msra.mxu0 0.0
  %4326 = vmatprep.subr.mxu0 0.0
  %4327 = vmatpush1.msra.mxu0 0.0
  %4328 = vmatprep.subr.mxu0 0.0
  %4329 = vmatpush1.msra.mxu0 0.0
  %4330 = vmatprep.subr.mxu0 %v3954
  %4331 = vmatpush1.msra.mxu0 %v3953
  %4332 = vmatprep.subr.mxu0 0.0
  %4333 = vmatpush2.msra.mxu0 0.0
  %4334 = vmatprep.subr.mxu0 0.0
  %4335 = vmatpush2.msra.mxu0 0.0
  %4336 = vmatprep.subr.mxu0 0.0
  %4337 = vmatpush2.msra.mxu0 0.0
  %4338 = vmatprep.subr.mxu0 0.0
  %4339 = vmatpush2.msra.mxu0 0.0
  %4340 = vmatprep.subr.mxu0 0.0
  %4341 = vmatpush2.msra.mxu0 0.0
  %4342 = vmatprep.subr.mxu0 0.0
  %4343 = vmatpush2.msra.mxu0 0.0
  %4344 = vmatprep.subr.mxu0 0.0
  %4345 = vmatpush2.msra.mxu0 0.0
  %4346 = vmatprep.subr.mxu0 0.0
  %4347 = vmatpush2.msra.mxu0 0.0
  %4348 = vmatprep.subr.mxu0 0.0
  %4349 = vmatpush2.msra.mxu0 0.0
  %4350 = vmatprep.subr.mxu0 0.0
  %4351 = vmatpush2.msra.mxu0 0.0
  %4352 = vmatprep.subr.mxu0 0.0
  %4353 = vmatpush2.msra.mxu0 0.0
  %4354 = vmatprep.subr.mxu0 0.0
  %4355 = vmatpush2.msra.mxu0 0.0
  %4356 = vmatprep.subr.mxu0 0.0
  %4357 = vmatpush2.msra.mxu0 0.0
  %4358 = vmatprep.subr.mxu0 0.0
  %4359 = vmatpush2.msra.mxu0 0.0
  %4360 = vmatprep.subr.mxu0 0.0
  %4361 = vmatpush2.msra.mxu0 0.0
  %4362 = vmatprep.subr.mxu0 0.0
  %4363 = vmatpush2.msra.mxu0 0.0
  %4364 = vmatprep.mubr.f32.mxu0 0.0
  %4365 = vmatmul.mubr.f32.gmra.mxu0 %v4298
  %v4366 = vpop.f32.mrf.mxu0
  %v4367 = vadd.f32 0.0, %v4366
  %v4368 = vpop.f32.mrf.mxu0
  %v4369 = vadd.f32 0.0, %v4368
  %4370 = vdwg.mxu0
  %v4371 = vadd.f32 %v4293, %v4367
  %v4372 = vadd.f32 %v4294, %v4369
  %4373 = vrot.lane.b32.xlu0 %v3953, 127
  %v4374 = vpop.permute.xlu0 %4373
  %4375 = vrot.lane.b32.xlu0 %v3954, 127
  %v4376 = vpop.permute.xlu0 %4375
  %v4377 = vsel %vm509, %v4374, %v4376
  %v4378 = vsel %vm509, %v4376, %v4374
  %v4379 = vsel %vm61, %v4377, 0.0
  %v4380 = vsel %vm62, %v4378, 0.0
  %s4381 = scalar_lea.vmem %s1, 400
  %v4382 = vld [vmem:[%s4381] sm:$0xff]
  %v4384 = vsel %vm104, %v4382, 0
  %4386 = vmatprep.subr.mxu0 0.0
  %4387 = vmatpush1.msra.mxu0 0.0
  %4388 = vmatprep.subr.mxu0 0.0
  %4389 = vmatpush1.msra.mxu0 0.0
  %4390 = vmatprep.subr.mxu0 0.0
  %4391 = vmatpush1.msra.mxu0 0.0
  %4392 = vmatprep.subr.mxu0 0.0
  %4393 = vmatpush1.msra.mxu0 0.0
  %4394 = vmatprep.subr.mxu0 0.0
  %4395 = vmatpush1.msra.mxu0 0.0
  %4396 = vmatprep.subr.mxu0 0.0
  %4397 = vmatpush1.msra.mxu0 0.0
  %4398 = vmatprep.subr.mxu0 0.0
  %4399 = vmatpush1.msra.mxu0 0.0
  %4400 = vmatprep.subr.mxu0 0.0
  %4401 = vmatpush1.msra.mxu0 0.0
  %4402 = vmatprep.subr.mxu0 0.0
  %4403 = vmatpush1.msra.mxu0 0.0
  %4404 = vmatprep.subr.mxu0 0.0
  %4405 = vmatpush1.msra.mxu0 0.0
  %4406 = vmatprep.subr.mxu0 0.0
  %4407 = vmatpush1.msra.mxu0 0.0
  %4408 = vmatprep.subr.mxu0 0.0
  %4409 = vmatpush1.msra.mxu0 0.0
  %4410 = vmatprep.subr.mxu0 0.0
  %4411 = vmatpush1.msra.mxu0 0.0
  %4412 = vmatprep.subr.mxu0 0.0
  %4413 = vmatpush1.msra.mxu0 0.0
  %4414 = vmatprep.subr.mxu0 0.0
  %4415 = vmatpush1.msra.mxu0 0.0
  %4416 = vmatprep.subr.mxu0 %v4380
  %4417 = vmatpush1.msra.mxu0 %v4379
  %4418 = vmatprep.subr.mxu0 0.0
  %4419 = vmatpush2.msra.mxu0 0.0
  %4420 = vmatprep.subr.mxu0 0.0
  %4421 = vmatpush2.msra.mxu0 0.0
  %4422 = vmatprep.subr.mxu0 0.0
  %4423 = vmatpush2.msra.mxu0 0.0
  %4424 = vmatprep.subr.mxu0 0.0
  %4425 = vmatpush2.msra.mxu0 0.0
  %4426 = vmatprep.subr.mxu0 0.0
  %4427 = vmatpush2.msra.mxu0 0.0
  %4428 = vmatprep.subr.mxu0 0.0
  %4429 = vmatpush2.msra.mxu0 0.0
  %4430 = vmatprep.subr.mxu0 0.0
  %4431 = vmatpush2.msra.mxu0 0.0
  %4432 = vmatprep.subr.mxu0 0.0
  %4433 = vmatpush2.msra.mxu0 0.0
  %4434 = vmatprep.subr.mxu0 0.0
  %4435 = vmatpush2.msra.mxu0 0.0
  %4436 = vmatprep.subr.mxu0 0.0
  %4437 = vmatpush2.msra.mxu0 0.0
  %4438 = vmatprep.subr.mxu0 0.0
  %4439 = vmatpush2.msra.mxu0 0.0
  %4440 = vmatprep.subr.mxu0 0.0
  %4441 = vmatpush2.msra.mxu0 0.0
  %4442 = vmatprep.subr.mxu0 0.0
  %4443 = vmatpush2.msra.mxu0 0.0
  %4444 = vmatprep.subr.mxu0 0.0
  %4445 = vmatpush2.msra.mxu0 0.0
  %4446 = vmatprep.subr.mxu0 0.0
  %4447 = vmatpush2.msra.mxu0 0.0
  %4448 = vmatprep.subr.mxu0 0.0
  %4449 = vmatpush2.msra.mxu0 0.0
  %4450 = vmatprep.mubr.f32.mxu0 0.0
  %4451 = vmatmul.mubr.f32.gmra.mxu0 %v4384
  %v4452 = vpop.f32.mrf.mxu0
  %v4453 = vadd.f32 0.0, %v4452
  %v4454 = vpop.f32.mrf.mxu0
  %v4455 = vadd.f32 0.0, %v4454
  %4456 = vdwg.mxu0
  %v4457 = vadd.f32 %v4371, %v4453
  %v4458 = vadd.f32 %v4372, %v4455
  %4459 = vrot.lane.b32.xlu0 %v3953, 113
  %v4460 = vpop.permute.xlu0 %4459
  %4461 = vrot.lane.b32.xlu0 %v3954, 113
  %v4462 = vpop.permute.xlu0 %4461
  %v4463 = vsel %vm596, %v4460, %v4462
  %v4464 = vsel %vm596, %v4462, %v4460
  %v4465 = vsel %vm71, %v4463, 0.0
  %v4466 = vsel %vm72, %v4464, 0.0
  %s4467 = scalar_lea.vmem %s1, 408
  %v4468 = vld [vmem:[%s4467] sm:$0xff]
  %v4470 = vsel %vm104, %v4468, 0
  %4472 = vmatprep.subr.mxu0 0.0
  %4473 = vmatpush1.msra.mxu0 0.0
  %4474 = vmatprep.subr.mxu0 0.0
  %4475 = vmatpush1.msra.mxu0 0.0
  %4476 = vmatprep.subr.mxu0 0.0
  %4477 = vmatpush1.msra.mxu0 0.0
  %4478 = vmatprep.subr.mxu0 0.0
  %4479 = vmatpush1.msra.mxu0 0.0
  %4480 = vmatprep.subr.mxu0 0.0
  %4481 = vmatpush1.msra.mxu0 0.0
  %4482 = vmatprep.subr.mxu0 0.0
  %4483 = vmatpush1.msra.mxu0 0.0
  %4484 = vmatprep.subr.mxu0 0.0
  %4485 = vmatpush1.msra.mxu0 0.0
  %4486 = vmatprep.subr.mxu0 0.0
  %4487 = vmatpush1.msra.mxu0 0.0
  %4488 = vmatprep.subr.mxu0 0.0
  %4489 = vmatpush1.msra.mxu0 0.0
  %4490 = vmatprep.subr.mxu0 0.0
  %4491 = vmatpush1.msra.mxu0 0.0
  %4492 = vmatprep.subr.mxu0 0.0
  %4493 = vmatpush1.msra.mxu0 0.0
  %4494 = vmatprep.subr.mxu0 0.0
  %4495 = vmatpush1.msra.mxu0 0.0
  %4496 = vmatprep.subr.mxu0 0.0
  %4497 = vmatpush1.msra.mxu0 0.0
  %4498 = vmatprep.subr.mxu0 0.0
  %4499 = vmatpush1.msra.mxu0 0.0
  %4500 = vmatprep.subr.mxu0 0.0
  %4501 = vmatpush1.msra.mxu0 0.0
  %4502 = vmatprep.subr.mxu0 %v4466
  %4503 = vmatpush1.msra.mxu0 %v4465
  %4504 = vmatprep.subr.mxu0 0.0
  %4505 = vmatpush2.msra.mxu0 0.0
  %4506 = vmatprep.subr.mxu0 0.0
  %4507 = vmatpush2.msra.mxu0 0.0
  %4508 = vmatprep.subr.mxu0 0.0
  %4509 = vmatpush2.msra.mxu0 0.0
  %4510 = vmatprep.subr.mxu0 0.0
  %4511 = vmatpush2.msra.mxu0 0.0
  %4512 = vmatprep.subr.mxu0 0.0
  %4513 = vmatpush2.msra.mxu0 0.0
  %4514 = vmatprep.subr.mxu0 0.0
  %4515 = vmatpush2.msra.mxu0 0.0
  %4516 = vmatprep.subr.mxu0 0.0
  %4517 = vmatpush2.msra.mxu0 0.0
  %4518 = vmatprep.subr.mxu0 0.0
  %4519 = vmatpush2.msra.mxu0 0.0
  %4520 = vmatprep.subr.mxu0 0.0
  %4521 = vmatpush2.msra.mxu0 0.0
  %4522 = vmatprep.subr.mxu0 0.0
  %4523 = vmatpush2.msra.mxu0 0.0
  %4524 = vmatprep.subr.mxu0 0.0
  %4525 = vmatpush2.msra.mxu0 0.0
  %4526 = vmatprep.subr.mxu0 0.0
  %4527 = vmatpush2.msra.mxu0 0.0
  %4528 = vmatprep.subr.mxu0 0.0
  %4529 = vmatpush2.msra.mxu0 0.0
  %4530 = vmatprep.subr.mxu0 0.0
  %4531 = vmatpush2.msra.mxu0 0.0
  %4532 = vmatprep.subr.mxu0 0.0
  %4533 = vmatpush2.msra.mxu0 0.0
  %4534 = vmatprep.subr.mxu0 0.0
  %4535 = vmatpush2.msra.mxu0 0.0
  %4536 = vmatprep.mubr.f32.mxu0 0.0
  %4537 = vmatmul.mubr.f32.gmra.mxu0 %v4470
  %v4538 = vpop.f32.mrf.mxu0
  %v4539 = vadd.f32 0.0, %v4538
  %v4540 = vpop.f32.mrf.mxu0
  %v4541 = vadd.f32 0.0, %v4540
  %4542 = vdwg.mxu0
  %v4543 = vadd.f32 %v4457, %v4539
  %v4544 = vadd.f32 %v4458, %v4541
  %4545 = vrot.lane.b32.xlu0 %v3953, 112
  %v4546 = vpop.permute.xlu0 %4545
  %4547 = vrot.lane.b32.xlu0 %v3954, 112
  %v4548 = vpop.permute.xlu0 %4547
  %v4549 = vsel %vm683, %v4546, %v4548
  %v4550 = vsel %vm683, %v4548, %v4546
  %v4551 = vsel %vm75, %v4549, 0.0
  %v4552 = vsel %vm76, %v4550, 0.0
  %s4553 = scalar_lea.vmem %s1, 416
  %v4554 = vld [vmem:[%s4553] sm:$0xff]
  %v4556 = vsel %vm104, %v4554, 0
  %4558 = vmatprep.subr.mxu0 0.0
  %4559 = vmatpush1.msra.mxu0 0.0
  %4560 = vmatprep.subr.mxu0 0.0
  %4561 = vmatpush1.msra.mxu0 0.0
  %4562 = vmatprep.subr.mxu0 0.0
  %4563 = vmatpush1.msra.mxu0 0.0
  %4564 = vmatprep.subr.mxu0 0.0
  %4565 = vmatpush1.msra.mxu0 0.0
  %4566 = vmatprep.subr.mxu0 0.0
  %4567 = vmatpush1.msra.mxu0 0.0
  %4568 = vmatprep.subr.mxu0 0.0
  %4569 = vmatpush1.msra.mxu0 0.0
  %4570 = vmatprep.subr.mxu0 0.0
  %4571 = vmatpush1.msra.mxu0 0.0
  %4572 = vmatprep.subr.mxu0 0.0
  %4573 = vmatpush1.msra.mxu0 0.0
  %4574 = vmatprep.subr.mxu0 0.0
  %4575 = vmatpush1.msra.mxu0 0.0
  %4576 = vmatprep.subr.mxu0 0.0
  %4577 = vmatpush1.msra.mxu0 0.0
  %4578 = vmatprep.subr.mxu0 0.0
  %4579 = vmatpush1.msra.mxu0 0.0
  %4580 = vmatprep.subr.mxu0 0.0
  %4581 = vmatpush1.msra.mxu0 0.0
  %4582 = vmatprep.subr.mxu0 0.0
  %4583 = vmatpush1.msra.mxu0 0.0
  %4584 = vmatprep.subr.mxu0 0.0
  %4585 = vmatpush1.msra.mxu0 0.0
  %4586 = vmatprep.subr.mxu0 0.0
  %4587 = vmatpush1.msra.mxu0 0.0
  %4588 = vmatprep.subr.mxu0 %v4552
  %4589 = vmatpush1.msra.mxu0 %v4551
  %4590 = vmatprep.subr.mxu0 0.0
  %4591 = vmatpush2.msra.mxu0 0.0
  %4592 = vmatprep.subr.mxu0 0.0
  %4593 = vmatpush2.msra.mxu0 0.0
  %4594 = vmatprep.subr.mxu0 0.0
  %4595 = vmatpush2.msra.mxu0 0.0
  %4596 = vmatprep.subr.mxu0 0.0
  %4597 = vmatpush2.msra.mxu0 0.0
  %4598 = vmatprep.subr.mxu0 0.0
  %4599 = vmatpush2.msra.mxu0 0.0
  %4600 = vmatprep.subr.mxu0 0.0
  %4601 = vmatpush2.msra.mxu0 0.0
  %4602 = vmatprep.subr.mxu0 0.0
  %4603 = vmatpush2.msra.mxu0 0.0
  %4604 = vmatprep.subr.mxu0 0.0
  %4605 = vmatpush2.msra.mxu0 0.0
  %4606 = vmatprep.subr.mxu0 0.0
  %4607 = vmatpush2.msra.mxu0 0.0
  %4608 = vmatprep.subr.mxu0 0.0
  %4609 = vmatpush2.msra.mxu0 0.0
  %4610 = vmatprep.subr.mxu0 0.0
  %4611 = vmatpush2.msra.mxu0 0.0
  %4612 = vmatprep.subr.mxu0 0.0
  %4613 = vmatpush2.msra.mxu0 0.0
  %4614 = vmatprep.subr.mxu0 0.0
  %4615 = vmatpush2.msra.mxu0 0.0
  %4616 = vmatprep.subr.mxu0 0.0
  %4617 = vmatpush2.msra.mxu0 0.0
  %4618 = vmatprep.subr.mxu0 0.0
  %4619 = vmatpush2.msra.mxu0 0.0
  %4620 = vmatprep.subr.mxu0 0.0
  %4621 = vmatpush2.msra.mxu0 0.0
  %4622 = vmatprep.mubr.f32.mxu0 0.0
  %4623 = vmatmul.mubr.f32.gmra.mxu0 %v4556
  %v4624 = vpop.f32.mrf.mxu0
  %v4625 = vadd.f32 0.0, %v4624
  %v4626 = vpop.f32.mrf.mxu0
  %v4627 = vadd.f32 0.0, %v4626
  %4628 = vdwg.mxu0
  %v4629 = vadd.f32 %v4543, %v4625
  %v4630 = vadd.f32 %v4544, %v4627
  %4631 = vrot.lane.b32.xlu0 %v3953, 111
  %v4632 = vpop.permute.xlu0 %4631
  %4633 = vrot.lane.b32.xlu0 %v3954, 111
  %v4634 = vpop.permute.xlu0 %4633
  %v4635 = vsel %vm770, %v4632, %v4634
  %v4636 = vsel %vm770, %v4634, %v4632
  %v4637 = vsel %vm79, %v4635, 0.0
  %v4638 = vsel %vm80, %v4636, 0.0
  %s4639 = scalar_lea.vmem %s1, 424
  %v4640 = vld [vmem:[%s4639] sm:$0xff]
  %v4642 = vsel %vm104, %v4640, 0
  %4644 = vmatprep.subr.mxu0 0.0
  %4645 = vmatpush1.msra.mxu0 0.0
  %4646 = vmatprep.subr.mxu0 0.0
  %4647 = vmatpush1.msra.mxu0 0.0
  %4648 = vmatprep.subr.mxu0 0.0
  %4649 = vmatpush1.msra.mxu0 0.0
  %4650 = vmatprep.subr.mxu0 0.0
  %4651 = vmatpush1.msra.mxu0 0.0
  %4652 = vmatprep.subr.mxu0 0.0
  %4653 = vmatpush1.msra.mxu0 0.0
  %4654 = vmatprep.subr.mxu0 0.0
  %4655 = vmatpush1.msra.mxu0 0.0
  %4656 = vmatprep.subr.mxu0 0.0
  %4657 = vmatpush1.msra.mxu0 0.0
  %4658 = vmatprep.subr.mxu0 0.0
  %4659 = vmatpush1.msra.mxu0 0.0
  %4660 = vmatprep.subr.mxu0 0.0
  %4661 = vmatpush1.msra.mxu0 0.0
  %4662 = vmatprep.subr.mxu0 0.0
  %4663 = vmatpush1.msra.mxu0 0.0
  %4664 = vmatprep.subr.mxu0 0.0
  %4665 = vmatpush1.msra.mxu0 0.0
  %4666 = vmatprep.subr.mxu0 0.0
  %4667 = vmatpush1.msra.mxu0 0.0
  %4668 = vmatprep.subr.mxu0 0.0
  %4669 = vmatpush1.msra.mxu0 0.0
  %4670 = vmatprep.subr.mxu0 0.0
  %4671 = vmatpush1.msra.mxu0 0.0
  %4672 = vmatprep.subr.mxu0 0.0
  %4673 = vmatpush1.msra.mxu0 0.0
  %4674 = vmatprep.subr.mxu0 %v4638
  %4675 = vmatpush1.msra.mxu0 %v4637
  %4676 = vmatprep.subr.mxu0 0.0
  %4677 = vmatpush2.msra.mxu0 0.0
  %4678 = vmatprep.subr.mxu0 0.0
  %4679 = vmatpush2.msra.mxu0 0.0
  %4680 = vmatprep.subr.mxu0 0.0
  %4681 = vmatpush2.msra.mxu0 0.0
  %4682 = vmatprep.subr.mxu0 0.0
  %4683 = vmatpush2.msra.mxu0 0.0
  %4684 = vmatprep.subr.mxu0 0.0
  %4685 = vmatpush2.msra.mxu0 0.0
  %4686 = vmatprep.subr.mxu0 0.0
  %4687 = vmatpush2.msra.mxu0 0.0
  %4688 = vmatprep.subr.mxu0 0.0
  %4689 = vmatpush2.msra.mxu0 0.0
  %4690 = vmatprep.subr.mxu0 0.0
  %4691 = vmatpush2.msra.mxu0 0.0
  %4692 = vmatprep.subr.mxu0 0.0
  %4693 = vmatpush2.msra.mxu0 0.0
  %4694 = vmatprep.subr.mxu0 0.0
  %4695 = vmatpush2.msra.mxu0 0.0
  %4696 = vmatprep.subr.mxu0 0.0
  %4697 = vmatpush2.msra.mxu0 0.0
  %4698 = vmatprep.subr.mxu0 0.0
  %4699 = vmatpush2.msra.mxu0 0.0
  %4700 = vmatprep.subr.mxu0 0.0
  %4701 = vmatpush2.msra.mxu0 0.0
  %4702 = vmatprep.subr.mxu0 0.0
  %4703 = vmatpush2.msra.mxu0 0.0
  %4704 = vmatprep.subr.mxu0 0.0
  %4705 = vmatpush2.msra.mxu0 0.0
  %4706 = vmatprep.subr.mxu0 0.0
  %4707 = vmatpush2.msra.mxu0 0.0
  %4708 = vmatprep.mubr.f32.mxu0 0.0
  %4709 = vmatmul.mubr.f32.gmra.mxu0 %v4642
  %v4710 = vpop.f32.mrf.mxu0
  %v4711 = vadd.f32 0.0, %v4710
  %v4712 = vpop.f32.mrf.mxu0
  %v4713 = vadd.f32 0.0, %v4712
  %4714 = vdwg.mxu0
  %v4715 = vadd.f32 %v4629, %v4711
  %v4716 = vadd.f32 %v4630, %v4713
  %s4717 = scalar_lea.vmem %s2, 40
  %v4718 = vld [vmem:[%s4717] sm:$0xff]
  %4720 = vset.pattern.permute.xlu0 0
  %4721 = vperm.xlu0 %4720, %v4718
  %v4722 = vpop.permute.xlu0 %4721
  %v4724 = vadd.f32 %v4715, %v4722
  %v4725 = vadd.f32 %v4716, %v4722
  %v4726 = vadd.f32 %v4724, %v3180
  %v4727 = vadd.f32 %v4725, %v3181
  %4728 = vst [vmem:[%s3] sm:$0xff] %v4726
  %4729 = vst [vmem:[%s3 + $0x8] sm:$0xff] %v4727
  // Predicated region
  $region14: #{basic_block_chain_pallas.1} parent=0 // pred_check
    _
  $region15: #{basic_block_chain_pallas.1} parent=0 // pred_check_branch
    %4731 = sbr.rel (0) target = $region17
  $region16: #{basic_block_chain_pallas.1} parent=0 // pred_region
    _
  $region17: #{basic_block_chain_pallas.1} parent=0 // pred_fallthru
    _
  // Predicated region
  $region18: #{basic_block_chain_pallas.1} parent=0 // pred_check
    _
  $region19: #{basic_block_chain_pallas.1} parent=0 // pred_check_branch
    %4733 = sbr.rel (0) target = $region21
  $region20: #{basic_block_chain_pallas.1} parent=0 // pred_region
    _
  $region21: #{basic_block_chain_pallas.1} parent=0 // pred_fallthru
    _

</llo_original>
